<compile_context>
chip_gen: v6e
topology: v6e:2x2x1
jax: 0.10.0
libtpu: 0.0.40
codegen_flags: <defaults>
</compile_context>

<pallas_src>
import functools
import math

import jax
import jax.numpy as jnp
from jax.experimental import pallas as pl
from jax.experimental.pallas import tpu as pltpu


def _vmem_limit_bytes():
    """Per-generation scoped-VMEM budget with headroom below physical VMEM."""
    try:
        cap = int(pltpu.get_tpu_info().vmem_capacity_bytes)
    except Exception:
        cap = 64 * 1024 * 1024            # conservative (v7x-sized) fallback
    return min(cap - 16 * 1024 * 1024, 100 * 1024 * 1024)


# ----------------------------------------------------------------------------
# In-kernel math helpers
# ----------------------------------------------------------------------------

def _ln(x, g, b, eps=1e-5):
    """Row-wise layernorm in f32. g, b broadcast from (1, D)."""
    mean = jnp.mean(x, axis=-1, keepdims=True)
    var = jnp.mean(jnp.square(x - mean), axis=-1, keepdims=True)
    return (x - mean) * jax.lax.rsqrt(var + eps) * g + b


# ----------------------------------------------------------------------------
# Single fused ViT-encoder kernel, grid = (batch, layer)
# ----------------------------------------------------------------------------

def _vit_kernel(p_ref, cw_ref, tb_ref, preg_ref, preb_ref,
                l1g_ref, l1b_ref, wqkv_ref, bqkv_ref, wo_ref, bo_ref,
                l2g_ref, l2b_ref, wfc_ref, bfc_ref, wpr_ref, bpr_ref,
                postg_ref, postb_ref, proj_ref,
                o_ref,
                res_ref, attn_ref, *, heads):
    layer = pl.program_id(1)
    n_layers = pl.num_programs(1)

    # ---- layer 0: patch-embed conv-matmul + class token/pos-emb + ln_pre ----
    @pl.when(layer == 0)
    def _():
        emb = jnp.dot(p_ref[0], cw_ref[...],
                      preferred_element_type=jnp.float32)            # (T, D)
        x0 = emb + tb_ref[...]          # token_bias = pos_emb (+cls_emb row 0)
        res_ref[...] = _ln(x0, preg_ref[...], preb_ref[...])

    x = res_ref[...]                                                 # (T, D) f32
    t, d = x.shape
    dh = d // heads
    scale = 1.0 / math.sqrt(dh)

    # ---- attention half: ln_1 -> QKV -> MHSA -> out-proj -> residual ----
    h = _ln(x, l1g_ref[0], l1b_ref[0]).astype(jnp.bfloat16)
    qkv = (jnp.dot(h, wqkv_ref[0], preferred_element_type=jnp.float32)
           + bqkv_ref[0]).astype(jnp.bfloat16)                       # (T, 3D) bf16

    # Each head writes its (T, Dh) output into the head-concat scratch at its
    # lane offset; the concat never touches HBM and the out-projection is a
    # single K=D matmul.
    for i in range(heads):
        q = qkv[:, i * dh:(i + 1) * dh]
        k = qkv[:, d + i * dh:d + (i + 1) * dh]
        v = qkv[:, 2 * d + i * dh:2 * d + (i + 1) * dh]
        s = jax.lax.dot_general(
            q, k, (((1,), (1,)), ((), ())),
            preferred_element_type=jnp.float32) * scale              # (T, T) f32
        s = s - jnp.max(s, axis=-1, keepdims=True)
        p = jnp.exp(s)
        p = p * pl.reciprocal(jnp.sum(p, axis=-1, keepdims=True), approx=True)
        attn_ref[:, i * dh:(i + 1) * dh] = jnp.dot(
            p.astype(jnp.bfloat16), v,
            preferred_element_type=jnp.float32).astype(jnp.bfloat16)

    proj = (jnp.dot(attn_ref[...], wo_ref[0],
                    preferred_element_type=jnp.float32) + bo_ref[0]) # (T, D) f32
    x = x + proj

    # ---- MLP half: ln_2 -> fc -> QuickGELU -> c_proj -> residual ----
    h2 = _ln(x, l2g_ref[0], l2b_ref[0]).astype(jnp.bfloat16)
    h2 = (jnp.dot(h2, wfc_ref[0], preferred_element_type=jnp.float32)
          + bfc_ref[0])                                              # (T, 4D) f32
    h2 = h2 * jax.nn.sigmoid(1.702 * h2)                             # QuickGELU
    h2 = (jnp.dot(h2.astype(jnp.bfloat16), wpr_ref[0],
                  preferred_element_type=jnp.float32) + bpr_ref[0])
    x = x + h2
    res_ref[...] = x

    # ---- last layer: class token -> ln_post -> output projection ----
    @pl.when(layer == n_layers - 1)
    def _():
        cls = x[0:1, :]                                              # (1, D)
        hh = _ln(cls, postg_ref[...], postb_ref[...]).astype(jnp.bfloat16)
        o_ref[0] = jnp.dot(hh, proj_ref[...],
                           preferred_element_type=jnp.float32)       # (1, out)


# ----------------------------------------------------------------------------
# Parameters (synthetic, CLIP-shaped, per-layer weights stacked on axis 0)
# ----------------------------------------------------------------------------

def init_params(key, *, channels, patch, width, heads, layers, grid_tokens,
                out_dim):
    del heads  # head count only affects in-kernel slicing
    cpp = channels * patch * patch
    tokens = grid_tokens + 1
    keys = iter(jax.random.split(key, 16))

    def nrm(shape, scale=0.02, dtype=jnp.bfloat16):
        return (scale * jax.random.normal(next(keys), shape)).astype(dtype)

    class_emb = nrm((width,), dtype=jnp.float32)
    pos_emb = nrm((tokens, width), dtype=jnp.float32)
    # Fold the class embedding into an additive per-token bias: the class-token
    # "patch" row is all zeros, so conv(patch_0) = 0 and row 0 gets class_emb.
    # (Valid because CLIP's conv1 has no bias.)
    token_bias = pos_emb.at[0].add(class_emb)

    f32 = jnp.float32
    return {
        "conv_w": nrm((cpp, width)),                    # bf16; conv1 has no bias
        "token_bias": token_bias,                       # f32 (T, D)
        "ln_pre_g": jnp.ones((1, width), f32),
        "ln_pre_b": jnp.zeros((1, width), f32),
        # --- per-layer weights stacked along a leading layer axis ---
        "ln1_g": jnp.ones((layers, 1, width), f32),
        "ln1_b": jnp.zeros((layers, 1, width), f32),
        "qkv_w": nrm((layers, width, 3 * width)),       # [q|k|v] packed, bf16
        "qkv_b": jnp.zeros((layers, 1, 3 * width), f32),
        "out_w": nrm((layers, width, width)),
        "out_b": jnp.zeros((layers, 1, width), f32),
        "ln2_g": jnp.ones((layers, 1, width), f32),
        "ln2_b": jnp.zeros((layers, 1, width), f32),
        "fc_w": nrm((layers, width, 4 * width)),
        "fc_b": jnp.zeros((layers, 1, 4 * width), f32),
        "cproj_w": nrm((layers, 4 * width, width)),
        "cproj_b": jnp.zeros((layers, 1, width), f32),
        # --- head ---
        "ln_post_g": jnp.ones((1, width), f32),
        "ln_post_b": jnp.zeros((1, width), f32),
        "proj": nrm((width, out_dim)),                  # bf16; no bias
    }


# ----------------------------------------------------------------------------
# Forward pass
# ----------------------------------------------------------------------------

def encode_image(image, p, *, patch, heads):
    """image: (B, C, H, W) NCHW f32 -> (B, out_dim) f32 embeddings."""
    B, C, H, W = image.shape
    gh, gw = H // patch, W // patch
    CPP, D = p["conv_w"].shape
    L = p["qkv_w"].shape[0]
    out_dim = p["proj"].shape[1]
    T = gh * gw + 1

    # Patch extraction (kernel == stride conv becomes a matmul over flattened
    # patches); one cheap XLA pass, pre-cast to bf16 to halve the patch DMA.
    x = image.reshape(B, C, gh, patch, gw, patch)
    x = x.transpose(0, 2, 4, 1, 3, 5).reshape(B, gh * gw, CPP)
    # Prepend an all-zero "patch" row for the class token so a single matmul
    # covers the full token stream (class_emb arrives via token_bias row 0).
    patches = jnp.pad(x, ((0, 0), (1, 0), (0, 0))).astype(jnp.bfloat16)

    def const(shape):
        return pl.BlockSpec(shape, lambda b, l: (0,) * len(shape))

    def per_layer(shape):
        return pl.BlockSpec((1,) + shape, lambda b, l: (l,) + (0,) * len(shape))

    # TODO(synk): for very large batches, block >1 image per grid step and
    # flatten to (Bt*T, D) for the QKV/FC matmuls (per-image softmax inner
    # loop) to better fill the MXU; T=17 is not sublane-aligned so the reshape
    # costs XLU re-layout and is skipped at these shapes.
    out = pl.pallas_call(
        functools.partial(_vit_kernel, heads=heads),
        out_shape=jax.ShapeDtypeStruct((B, 1, out_dim), jnp.float32),
        grid=(B, L),
        in_specs=[
            pl.BlockSpec((1, T, CPP), lambda b, l: (b, 0, 0)),   # patches
            const((CPP, D)),                                     # conv_w
            const((T, D)),                                       # token_bias
            const((1, D)), const((1, D)),                        # ln_pre g, b
            per_layer((1, D)), per_layer((1, D)),                # ln1 g, b
            per_layer((D, 3 * D)), per_layer((1, 3 * D)),        # qkv w, b
            per_layer((D, D)), per_layer((1, D)),                # out-proj w, b
            per_layer((1, D)), per_layer((1, D)),                # ln2 g, b
            per_layer((D, 4 * D)), per_layer((1, 4 * D)),        # fc w, b
            per_layer((4 * D, D)), per_layer((1, D)),            # c_proj w, b
            const((1, D)), const((1, D)),                        # ln_post g, b
            const((D, out_dim)),                                 # proj
        ],
        out_specs=pl.BlockSpec((1, 1, out_dim), lambda b, l: (b, 0, 0)),
        scratch_shapes=[
            pltpu.VMEM((T, D), jnp.float32),    # residual stream (lives here)
            pltpu.VMEM((T, D), jnp.bfloat16),   # per-head attention concat
        ],
        compiler_params=pltpu.CompilerParams(
            dimension_semantics=("parallel", "arbitrary"),
            vmem_limit_bytes=_vmem_limit_bytes(),
        ),
    )(patches, p["conv_w"], p["token_bias"], p["ln_pre_g"], p["ln_pre_b"],
      p["ln1_g"], p["ln1_b"], p["qkv_w"], p["qkv_b"], p["out_w"], p["out_b"],
      p["ln2_g"], p["ln2_b"], p["fc_w"], p["fc_b"], p["cproj_w"], p["cproj_b"],
      p["ln_post_g"], p["ln_post_b"], p["proj"])

    return out[:, 0, :]                                          # (B, out_dim)


# ----------------------------------------------------------------------------
# Driver
# ----------------------------------------------------------------------------

if __name__ == "__main__":
    # Small but lane-dense shapes (D, 3D, 4D, Dh, out_dim all multiples of 128).
    B, C, HW = 2, 3, 32          # batch, channels, spatial
    PATCH = 8                    # -> 4x4 = 16 patches, T = 17 tokens
    WIDTH = 256                  # hidden size
    HEADS = 2                    # head dim = 128 (lane-aligned)
    LAYERS = 2
    OUT_DIM = 128

    key = jax.random.PRNGKey(0)
    k_img, k_par = jax.random.split(key)
    image = jax.random.normal(k_img, (B, C, HW, HW), dtype=jnp.float32)

    grid_tokens = (HW // PATCH) * (HW // PATCH)
    params = init_params(k_par, channels=C, patch=PATCH, width=WIDTH,
                         heads=HEADS, layers=LAYERS, grid_tokens=grid_tokens,
                         out_dim=OUT_DIM)

    # TODO(synk): pretrained CLIP weights cannot be loaded here; parameters are
    # deterministic synthetic tensors of the correct shapes.
    fwd = jax.jit(functools.partial(encode_image, patch=PATCH, heads=HEADS))
    out = jax.block_until_ready(fwd(image, params))

    assert out.shape == (B, OUT_DIM), out.shape
    assert out.dtype == jnp.float32
    assert bool(jnp.all(jnp.isfinite(out)))
    print("KERNEL_OK")
</pallas_src>

<mosaic_0001>
module attributes {stable_mosaic.version = 11 : i64} {
  func.func @_vit_kernel(%arg0: i32, %arg1: i32, %arg2: memref<1x17x192xbf16, #tpu.memory_space<vmem>>, %arg3: memref<192x256xbf16, #tpu.memory_space<vmem>>, %arg4: memref<17x256xf32, #tpu.memory_space<vmem>>, %arg5: memref<1x256xf32, #tpu.memory_space<vmem>>, %arg6: memref<1x256xf32, #tpu.memory_space<vmem>>, %arg7: memref<1x1x256xf32, #tpu.memory_space<vmem>>, %arg8: memref<1x1x256xf32, #tpu.memory_space<vmem>>, %arg9: memref<1x256x768xbf16, #tpu.memory_space<vmem>>, %arg10: memref<1x1x768xf32, #tpu.memory_space<vmem>>, %arg11: memref<1x256x256xbf16, #tpu.memory_space<vmem>>, %arg12: memref<1x1x256xf32, #tpu.memory_space<vmem>>, %arg13: memref<1x1x256xf32, #tpu.memory_space<vmem>>, %arg14: memref<1x1x256xf32, #tpu.memory_space<vmem>>, %arg15: memref<1x256x1024xbf16, #tpu.memory_space<vmem>>, %arg16: memref<1x1x1024xf32, #tpu.memory_space<vmem>>, %arg17: memref<1x1024x256xbf16, #tpu.memory_space<vmem>>, %arg18: memref<1x1x256xf32, #tpu.memory_space<vmem>>, %arg19: memref<1x256xf32, #tpu.memory_space<vmem>>, %arg20: memref<1x256xf32, #tpu.memory_space<vmem>>, %arg21: memref<256x128xbf16, #tpu.memory_space<vmem>>, %arg22: memref<1x1x128xf32, #tpu.memory_space<vmem>>, %arg23: memref<17x256xf32, #tpu.memory_space<vmem>>, %arg24: memref<17x256xbf16, #tpu.memory_space<vmem>>) attributes {dimension_semantics = [#tpu.dimension_semantics<parallel>, #tpu.dimension_semantics<arbitrary>], iteration_bounds = array<i64: 2, 2>, scalar_prefetch = 0 : i64, scratch_operands = 2 : i64, tpu.core_type = #tpu.core_type<tc>, window_params = [{transform_indices = @transform_0, window_bounds = array<i64: 1, 17, 192>}, {pipeline_mode = #tpu.pipeline_mode<synchronous>, transform_indices = @transform_1, window_bounds = array<i64: 192, 256>}, {pipeline_mode = #tpu.pipeline_mode<synchronous>, transform_indices = @transform_2, window_bounds = array<i64: 17, 256>}, {pipeline_mode = #tpu.pipeline_mode<synchronous>, transform_indices = @transform_3, window_bounds = array<i64: 1, 256>}, {pipeline_mode = #tpu.pipeline_mode<synchronous>, transform_indices = @transform_4, window_bounds = array<i64: 1, 256>}, {transform_indices = @transform_5, window_bounds = array<i64: 1, 1, 256>}, {transform_indices = @transform_6, window_bounds = array<i64: 1, 1, 256>}, {transform_indices = @transform_7, window_bounds = array<i64: 1, 256, 768>}, {transform_indices = @transform_8, window_bounds = array<i64: 1, 1, 768>}, {transform_indices = @transform_9, window_bounds = array<i64: 1, 256, 256>}, {transform_indices = @transform_10, window_bounds = array<i64: 1, 1, 256>}, {transform_indices = @transform_11, window_bounds = array<i64: 1, 1, 256>}, {transform_indices = @transform_12, window_bounds = array<i64: 1, 1, 256>}, {transform_indices = @transform_13, window_bounds = array<i64: 1, 256, 1024>}, {transform_indices = @transform_14, window_bounds = array<i64: 1, 1, 1024>}, {transform_indices = @transform_15, window_bounds = array<i64: 1, 1024, 256>}, {transform_indices = @transform_16, window_bounds = array<i64: 1, 1, 256>}, {pipeline_mode = #tpu.pipeline_mode<synchronous>, transform_indices = @transform_17, window_bounds = array<i64: 1, 256>}, {pipeline_mode = #tpu.pipeline_mode<synchronous>, transform_indices = @transform_18, window_bounds = array<i64: 1, 256>}, {pipeline_mode = #tpu.pipeline_mode<synchronous>, transform_indices = @transform_19, window_bounds = array<i64: 256, 128>}, {transform_indices = @transform_20, window_bounds = array<i64: 1, 1, 128>}]} {
    %c0_i32 = arith.constant 0 : i32
    %0 = arith.cmpi eq, %arg1, %c0_i32 : i32
    %1 = arith.extui %0 : i1 to i32
    %c0_i32_0 = arith.constant 0 : i32
    %2 = arith.cmpi ne, %1, %c0_i32_0 : i32
    scf.if %2 {
      %c0_71 = arith.constant 0 : index
      %c0_72 = arith.constant 0 : index
      %c0_73 = arith.constant 0 : index
      %143 = vector.load %arg2[%c0_71, %c0_72, %c0_73] : memref<1x17x192xbf16, #tpu.memory_space<vmem>>, vector<1x17x192xbf16>
      %144 = vector.shape_cast %143 : vector<1x17x192xbf16> to vector<17x192xbf16>
      %c0_74 = arith.constant 0 : index
      %c0_75 = arith.constant 0 : index
      %145 = vector.load %arg3[%c0_74, %c0_75] : memref<192x256xbf16, #tpu.memory_space<vmem>>, vector<192x256xbf16>
      %cst_76 = arith.constant dense<0.000000e+00> : vector<17x256xf32>
      %146 = tpu.matmul %144, %145, %cst_76 {dimension_numbers = #tpu.dot_dimension_numbers<[1], [0], [0], [1], [0, 0, 1, 1], [], []>} : vector<17x192xbf16>, vector<192x256xbf16>, vector<17x256xf32> -> vector<17x256xf32>
      %c0_77 = arith.constant 0 : index
      %c0_78 = arith.constant 0 : index
      %147 = vector.load %arg4[%c0_77, %c0_78] : memref<17x256xf32, #tpu.memory_space<vmem>>, vector<17x256xf32>
      %148 = arith.addf %146, %147 : vector<17x256xf32>
      %c0_79 = arith.constant 0 : index
      %c0_80 = arith.constant 0 : index
      %149 = vector.load %arg5[%c0_79, %c0_80] : memref<1x256xf32, #tpu.memory_space<vmem>>, vector<1x256xf32>
      %c0_81 = arith.constant 0 : index
      %c0_82 = arith.constant 0 : index
      %150 = vector.load %arg6[%c0_81, %c0_82] : memref<1x256xf32, #tpu.memory_space<vmem>>, vector<1x256xf32>
      %cst_83 = arith.constant dense<0.000000e+00> : vector<17xf32>
      %151 = vector.multi_reduction <add>, %148, %cst_83 [1] : vector<17x256xf32> to vector<17xf32>
      %152 = vector.shape_cast %151 : vector<17xf32> to vector<17x1xf32>
      %cst_84 = arith.constant 2.560000e+02 : f32
      %153 = vector.broadcast %cst_84 : f32 to vector<17x1xf32>
      %154 = arith.divf %152, %153 : vector<17x1xf32>
      %155 = vector.broadcast %154 : vector<17x1xf32> to vector<17x256xf32>
      %156 = arith.subf %148, %155 : vector<17x256xf32>
      %157 = arith.mulf %156, %156 : vector<17x256xf32>
      %cst_85 = arith.constant dense<0.000000e+00> : vector<17xf32>
      %158 = vector.multi_reduction <add>, %157, %cst_85 [1] : vector<17x256xf32> to vector<17xf32>
      %159 = vector.shape_cast %158 : vector<17xf32> to vector<17x1xf32>
      %cst_86 = arith.constant 2.560000e+02 : f32
      %160 = vector.broadcast %cst_86 : f32 to vector<17x1xf32>
      %161 = arith.divf %159, %160 : vector<17x1xf32>
      %162 = vector.broadcast %154 : vector<17x1xf32> to vector<17x256xf32>
      %163 = arith.subf %148, %162 : vector<17x256xf32>
      %cst_87 = arith.constant 9.99999974E-6 : f32
      %164 = vector.broadcast %cst_87 : f32 to vector<17x1xf32>
      %165 = arith.addf %161, %164 : vector<17x1xf32>
      %166 = math.rsqrt %165 : vector<17x1xf32>
      %167 = vector.broadcast %166 : vector<17x1xf32> to vector<17x256xf32>
      %168 = arith.mulf %163, %167 : vector<17x256xf32>
      %169 = vector.broadcast %149 : vector<1x256xf32> to vector<17x256xf32>
      %170 = arith.mulf %168, %169 : vector<17x256xf32>
      %171 = vector.broadcast %150 : vector<1x256xf32> to vector<17x256xf32>
      %172 = arith.addf %170, %171 : vector<17x256xf32>
      %c0_88 = arith.constant 0 : index
      %c0_89 = arith.constant 0 : index
      %173 = vector.load %arg23[%c0_88, %c0_89] : memref<17x256xf32, #tpu.memory_space<vmem>>, vector<17x256xf32>
      tpu.vector_store %arg23[%c0_88, %c0_89], %172 {strides = array<i32>} : memref<17x256xf32, #tpu.memory_space<vmem>>, vector<17x256xf32>,
    } else {
    }
    %c0 = arith.constant 0 : index
    %c0_1 = arith.constant 0 : index
    %3 = vector.load %arg23[%c0, %c0_1] : memref<17x256xf32, #tpu.memory_space<vmem>>, vector<17x256xf32>
    %c0_2 = arith.constant 0 : index
    %c0_3 = arith.constant 0 : index
    %c0_4 = arith.constant 0 : index
    %4 = vector.load %arg7[%c0_2, %c0_3, %c0_4] : memref<1x1x256xf32, #tpu.memory_space<vmem>>, vector<1x1x256xf32>
    %5 = vector.shape_cast %4 : vector<1x1x256xf32> to vector<1x256xf32>
    %c0_5 = arith.constant 0 : index
    %c0_6 = arith.constant 0 : index
    %c0_7 = arith.constant 0 : index
    %6 = vector.load %arg8[%c0_5, %c0_6, %c0_7] : memref<1x1x256xf32, #tpu.memory_space<vmem>>, vector<1x1x256xf32>
    %7 = vector.shape_cast %6 : vector<1x1x256xf32> to vector<1x256xf32>
    %cst = arith.constant dense<0.000000e+00> : vector<17xf32>
    %8 = vector.multi_reduction <add>, %3, %cst [1] : vector<17x256xf32> to vector<17xf32>
    %9 = vector.shape_cast %8 : vector<17xf32> to vector<17x1xf32>
    %cst_8 = arith.constant 2.560000e+02 : f32
    %10 = vector.broadcast %cst_8 : f32 to vector<17x1xf32>
    %11 = arith.divf %9, %10 : vector<17x1xf32>
    %12 = vector.broadcast %11 : vector<17x1xf32> to vector<17x256xf32>
    %13 = arith.subf %3, %12 : vector<17x256xf32>
    %14 = arith.mulf %13, %13 : vector<17x256xf32>
    %cst_9 = arith.constant dense<0.000000e+00> : vector<17xf32>
    %15 = vector.multi_reduction <add>, %14, %cst_9 [1] : vector<17x256xf32> to vector<17xf32>
    %16 = vector.shape_cast %15 : vector<17xf32> to vector<17x1xf32>
    %cst_10 = arith.constant 2.560000e+02 : f32
    %17 = vector.broadcast %cst_10 : f32 to vector<17x1xf32>
    %18 = arith.divf %16, %17 : vector<17x1xf32>
    %19 = vector.broadcast %11 : vector<17x1xf32> to vector<17x256xf32>
    %20 = arith.subf %3, %19 : vector<17x256xf32>
    %cst_11 = arith.constant 9.99999974E-6 : f32
    %21 = vector.broadcast %cst_11 : f32 to vector<17x1xf32>
    %22 = arith.addf %18, %21 : vector<17x1xf32>
    %23 = math.rsqrt %22 : vector<17x1xf32>
    %24 = vector.broadcast %23 : vector<17x1xf32> to vector<17x256xf32>
    %25 = arith.mulf %20, %24 : vector<17x256xf32>
    %26 = vector.broadcast %5 : vector<1x256xf32> to vector<17x256xf32>
    %27 = arith.mulf %25, %26 : vector<17x256xf32>
    %28 = vector.broadcast %7 : vector<1x256xf32> to vector<17x256xf32>
    %29 = arith.addf %27, %28 : vector<17x256xf32>
    %30 = arith.truncf %29 : vector<17x256xf32> to vector<17x256xbf16>
    %c0_12 = arith.constant 0 : index
    %c0_13 = arith.constant 0 : index
    %c0_14 = arith.constant 0 : index
    %31 = vector.load %arg9[%c0_12, %c0_13, %c0_14] : memref<1x256x768xbf16, #tpu.memory_space<vmem>>, vector<1x256x768xbf16>
    %32 = vector.shape_cast %31 : vector<1x256x768xbf16> to vector<256x768xbf16>
    %cst_15 = arith.constant dense<0.000000e+00> : vector<17x768xf32>
    %33 = tpu.matmul %30, %32, %cst_15 {dimension_numbers = #tpu.dot_dimension_numbers<[1], [0], [0], [1], [0, 0, 1, 1], [], []>} : vector<17x256xbf16>, vector<256x768xbf16>, vector<17x768xf32> -> vector<17x768xf32>
    %c0_16 = arith.constant 0 : index
    %c0_17 = arith.constant 0 : index
    %c0_18 = arith.constant 0 : index
    %34 = vector.load %arg10[%c0_16, %c0_17, %c0_18] : memref<1x1x768xf32, #tpu.memory_space<vmem>>, vector<1x1x768xf32>
    %35 = vector.shape_cast %34 : vector<1x1x768xf32> to vector<1x768xf32>
    %36 = vector.broadcast %35 : vector<1x768xf32> to vector<17x768xf32>
    %37 = arith.addf %33, %36 : vector<17x768xf32>
    %38 = arith.truncf %37 : vector<17x768xf32> to vector<17x768xbf16>
    %39 = vector.extract_strided_slice %38 {offsets = [0, 0], sizes = [17, 128], strides = [1, 1]} : vector<17x768xbf16> to vector<17x128xbf16>
    %40 = vector.extract_strided_slice %38 {offsets = [0, 256], sizes = [17, 128], strides = [1, 1]} : vector<17x768xbf16> to vector<17x128xbf16>
    %41 = vector.extract_strided_slice %38 {offsets = [0, 512], sizes = [17, 128], strides = [1, 1]} : vector<17x768xbf16> to vector<17x128xbf16>
    %cst_19 = arith.constant dense<0.000000e+00> : vector<17x17xf32>
    %42 = tpu.matmul %39, %40, %cst_19 {dimension_numbers = #tpu.dot_dimension_numbers<[1], [1], [0], [0], [0, 0, 1, 0], [], []>} : vector<17x128xbf16>, vector<17x128xbf16>, vector<17x17xf32> -> vector<17x17xf32>
    %cst_20 = arith.constant 0.0883883461 : f32
    %43 = vector.broadcast %cst_20 : f32 to vector<17x17xf32>
    %44 = arith.mulf %42, %43 : vector<17x17xf32>
    %cst_21 = arith.constant dense<0xFF800000> : vector<17xf32>
    %45 = vector.multi_reduction <maximumf>, %44, %cst_21 [1] : vector<17x17xf32> to vector<17xf32>
    %46 = vector.shape_cast %45 : vector<17xf32> to vector<17x1xf32>
    %47 = vector.broadcast %46 : vector<17x1xf32> to vector<17x17xf32>
    %48 = arith.subf %44, %47 : vector<17x17xf32>
    %49 = math.exp %48 : vector<17x17xf32>
    %cst_22 = arith.constant dense<0.000000e+00> : vector<17xf32>
    %50 = vector.multi_reduction <add>, %49, %cst_22 [1] : vector<17x17xf32> to vector<17xf32>
    %51 = vector.shape_cast %50 : vector<17xf32> to vector<17x1xf32>
    %52 = tpu.reciprocal %51 {approx = true} : vector<17x1xf32> -> vector<17x1xf32>
    %53 = vector.broadcast %52 : vector<17x1xf32> to vector<17x17xf32>
    %54 = arith.mulf %49, %53 : vector<17x17xf32>
    %55 = arith.truncf %54 : vector<17x17xf32> to vector<17x17xbf16>
    %cst_23 = arith.constant dense<0.000000e+00> : vector<17x128xf32>
    %56 = tpu.matmul %55, %41, %cst_23 {dimension_numbers = #tpu.dot_dimension_numbers<[1], [0], [0], [1], [0, 0, 1, 1], [], []>} : vector<17x17xbf16>, vector<17x128xbf16>, vector<17x128xf32> -> vector<17x128xf32>
    %57 = arith.truncf %56 : vector<17x128xf32> to vector<17x128xbf16>
    %c0_24 = arith.constant 0 : index
    %c0_25 = arith.constant 0 : index
    %58 = vector.load %arg24[%c0_24, %c0_25] : memref<17x256xbf16, #tpu.memory_space<vmem>>, vector<17x128xbf16>
    tpu.vector_store %arg24[%c0_24, %c0_25], %57 {strides = array<i32>} : memref<17x256xbf16, #tpu.memory_space<vmem>>, vector<17x128xbf16>,
    %59 = vector.extract_strided_slice %38 {offsets = [0, 128], sizes = [17, 128], strides = [1, 1]} : vector<17x768xbf16> to vector<17x128xbf16>
    %60 = vector.extract_strided_slice %38 {offsets = [0, 384], sizes = [17, 128], strides = [1, 1]} : vector<17x768xbf16> to vector<17x128xbf16>
    %61 = vector.extract_strided_slice %38 {offsets = [0, 640], sizes = [17, 128], strides = [1, 1]} : vector<17x768xbf16> to vector<17x128xbf16>
    %cst_26 = arith.constant dense<0.000000e+00> : vector<17x17xf32>
    %62 = tpu.matmul %59, %60, %cst_26 {dimension_numbers = #tpu.dot_dimension_numbers<[1], [1], [0], [0], [0, 0, 1, 0], [], []>} : vector<17x128xbf16>, vector<17x128xbf16>, vector<17x17xf32> -> vector<17x17xf32>
    %cst_27 = arith.constant 0.0883883461 : f32
    %63 = vector.broadcast %cst_27 : f32 to vector<17x17xf32>
    %64 = arith.mulf %62, %63 : vector<17x17xf32>
    %cst_28 = arith.constant dense<0xFF800000> : vector<17xf32>
    %65 = vector.multi_reduction <maximumf>, %64, %cst_28 [1] : vector<17x17xf32> to vector<17xf32>
    %66 = vector.shape_cast %65 : vector<17xf32> to vector<17x1xf32>
    %67 = vector.broadcast %66 : vector<17x1xf32> to vector<17x17xf32>
    %68 = arith.subf %64, %67 : vector<17x17xf32>
    %69 = math.exp %68 : vector<17x17xf32>
    %cst_29 = arith.constant dense<0.000000e+00> : vector<17xf32>
    %70 = vector.multi_reduction <add>, %69, %cst_29 [1] : vector<17x17xf32> to vector<17xf32>
    %71 = vector.shape_cast %70 : vector<17xf32> to vector<17x1xf32>
    %72 = tpu.reciprocal %71 {approx = true} : vector<17x1xf32> -> vector<17x1xf32>
    %73 = vector.broadcast %72 : vector<17x1xf32> to vector<17x17xf32>
    %74 = arith.mulf %69, %73 : vector<17x17xf32>
    %75 = arith.truncf %74 : vector<17x17xf32> to vector<17x17xbf16>
    %cst_30 = arith.constant dense<0.000000e+00> : vector<17x128xf32>
    %76 = tpu.matmul %75, %61, %cst_30 {dimension_numbers = #tpu.dot_dimension_numbers<[1], [0], [0], [1], [0, 0, 1, 1], [], []>} : vector<17x17xbf16>, vector<17x128xbf16>, vector<17x128xf32> -> vector<17x128xf32>
    %77 = arith.truncf %76 : vector<17x128xf32> to vector<17x128xbf16>
    %c0_31 = arith.constant 0 : index
    %c128 = arith.constant 128 : index
    %78 = vector.load %arg24[%c0_31, %c128] : memref<17x256xbf16, #tpu.memory_space<vmem>>, vector<17x128xbf16>
    tpu.vector_store %arg24[%c0_31, %c128], %77 {strides = array<i32>} : memref<17x256xbf16, #tpu.memory_space<vmem>>, vector<17x128xbf16>,
    %c0_32 = arith.constant 0 : index
    %c0_33 = arith.constant 0 : index
    %79 = vector.load %arg24[%c0_32, %c0_33] : memref<17x256xbf16, #tpu.memory_space<vmem>>, vector<17x256xbf16>
    %c0_34 = arith.constant 0 : index
    %c0_35 = arith.constant 0 : index
    %c0_36 = arith.constant 0 : index
    %80 = vector.load %arg11[%c0_34, %c0_35, %c0_36] : memref<1x256x256xbf16, #tpu.memory_space<vmem>>, vector<1x256x256xbf16>
    %81 = vector.shape_cast %80 : vector<1x256x256xbf16> to vector<256x256xbf16>
    %cst_37 = arith.constant dense<0.000000e+00> : vector<17x256xf32>
    %82 = tpu.matmul %79, %81, %cst_37 {dimension_numbers = #tpu.dot_dimension_numbers<[1], [0], [0], [1], [0, 0, 1, 1], [], []>} : vector<17x256xbf16>, vector<256x256xbf16>, vector<17x256xf32> -> vector<17x256xf32>
    %c0_38 = arith.constant 0 : index
    %c0_39 = arith.constant 0 : index
    %c0_40 = arith.constant 0 : index
    %83 = vector.load %arg12[%c0_38, %c0_39, %c0_40] : memref<1x1x256xf32, #tpu.memory_space<vmem>>, vector<1x1x256xf32>
    %84 = vector.shape_cast %83 : vector<1x1x256xf32> to vector<1x256xf32>
    %85 = vector.broadcast %84 : vector<1x256xf32> to vector<17x256xf32>
    %86 = arith.addf %82, %85 : vector<17x256xf32>
    %87 = arith.addf %3, %86 : vector<17x256xf32>
    %c0_41 = arith.constant 0 : index
    %c0_42 = arith.constant 0 : index
    %c0_43 = arith.constant 0 : index
    %88 = vector.load %arg13[%c0_41, %c0_42, %c0_43] : memref<1x1x256xf32, #tpu.memory_space<vmem>>, vector<1x1x256xf32>
    %89 = vector.shape_cast %88 : vector<1x1x256xf32> to vector<1x256xf32>
    %c0_44 = arith.constant 0 : index
    %c0_45 = arith.constant 0 : index
    %c0_46 = arith.constant 0 : index
    %90 = vector.load %arg14[%c0_44, %c0_45, %c0_46] : memref<1x1x256xf32, #tpu.memory_space<vmem>>, vector<1x1x256xf32>
    %91 = vector.shape_cast %90 : vector<1x1x256xf32> to vector<1x256xf32>
    %cst_47 = arith.constant dense<0.000000e+00> : vector<17xf32>
    %92 = vector.multi_reduction <add>, %87, %cst_47 [1] : vector<17x256xf32> to vector<17xf32>
    %93 = vector.shape_cast %92 : vector<17xf32> to vector<17x1xf32>
    %cst_48 = arith.constant 2.560000e+02 : f32
    %94 = vector.broadcast %cst_48 : f32 to vector<17x1xf32>
    %95 = arith.divf %93, %94 : vector<17x1xf32>
    %96 = vector.broadcast %95 : vector<17x1xf32> to vector<17x256xf32>
    %97 = arith.subf %87, %96 : vector<17x256xf32>
    %98 = arith.mulf %97, %97 : vector<17x256xf32>
    %cst_49 = arith.constant dense<0.000000e+00> : vector<17xf32>
    %99 = vector.multi_reduction <add>, %98, %cst_49 [1] : vector<17x256xf32> to vector<17xf32>
    %100 = vector.shape_cast %99 : vector<17xf32> to vector<17x1xf32>
    %cst_50 = arith.constant 2.560000e+02 : f32
    %101 = vector.broadcast %cst_50 : f32 to vector<17x1xf32>
    %102 = arith.divf %100, %101 : vector<17x1xf32>
    %103 = vector.broadcast %95 : vector<17x1xf32> to vector<17x256xf32>
    %104 = arith.subf %87, %103 : vector<17x256xf32>
    %cst_51 = arith.constant 9.99999974E-6 : f32
    %105 = vector.broadcast %cst_51 : f32 to vector<17x1xf32>
    %106 = arith.addf %102, %105 : vector<17x1xf32>
    %107 = math.rsqrt %106 : vector<17x1xf32>
    %108 = vector.broadcast %107 : vector<17x1xf32> to vector<17x256xf32>
    %109 = arith.mulf %104, %108 : vector<17x256xf32>
    %110 = vector.broadcast %89 : vector<1x256xf32> to vector<17x256xf32>
    %111 = arith.mulf %109, %110 : vector<17x256xf32>
    %112 = vector.broadcast %91 : vector<1x256xf32> to vector<17x256xf32>
    %113 = arith.addf %111, %112 : vector<17x256xf32>
    %114 = arith.truncf %113 : vector<17x256xf32> to vector<17x256xbf16>
    %c0_52 = arith.constant 0 : index
    %c0_53 = arith.constant 0 : index
    %c0_54 = arith.constant 0 : index
    %115 = vector.load %arg15[%c0_52, %c0_53, %c0_54] : memref<1x256x1024xbf16, #tpu.memory_space<vmem>>, vector<1x256x1024xbf16>
    %116 = vector.shape_cast %115 : vector<1x256x1024xbf16> to vector<256x1024xbf16>
    %cst_55 = arith.constant dense<0.000000e+00> : vector<17x1024xf32>
    %117 = tpu.matmul %114, %116, %cst_55 {dimension_numbers = #tpu.dot_dimension_numbers<[1], [0], [0], [1], [0, 0, 1, 1], [], []>} : vector<17x256xbf16>, vector<256x1024xbf16>, vector<17x1024xf32> -> vector<17x1024xf32>
    %c0_56 = arith.constant 0 : index
    %c0_57 = arith.constant 0 : index
    %c0_58 = arith.constant 0 : index
    %118 = vector.load %arg16[%c0_56, %c0_57, %c0_58] : memref<1x1x1024xf32, #tpu.memory_space<vmem>>, vector<1x1x1024xf32>
    %119 = vector.shape_cast %118 : vector<1x1x1024xf32> to vector<1x1024xf32>
    %120 = vector.broadcast %119 : vector<1x1024xf32> to vector<17x1024xf32>
    %121 = arith.addf %117, %120 : vector<17x1024xf32>
    %cst_59 = arith.constant 1.702000e+00 : f32
    %122 = vector.broadcast %cst_59 : f32 to vector<17x1024xf32>
    %123 = arith.mulf %122, %121 : vector<17x1024xf32>
    %124 = arith.negf %123 : vector<17x1024xf32>
    %125 = math.exp %124 : vector<17x1024xf32>
    %cst_60 = arith.constant 1.000000e+00 : f32
    %126 = vector.broadcast %cst_60 : f32 to vector<17x1024xf32>
    %127 = arith.addf %126, %125 : vector<17x1024xf32>
    %128 = arith.divf %126, %127 : vector<17x1024xf32>
    %129 = arith.mulf %121, %128 : vector<17x1024xf32>
    %130 = arith.truncf %129 : vector<17x1024xf32> to vector<17x1024xbf16>
    %c0_61 = arith.constant 0 : index
    %c0_62 = arith.constant 0 : index
    %c0_63 = arith.constant 0 : index
    %131 = vector.load %arg17[%c0_61, %c0_62, %c0_63] : memref<1x1024x256xbf16, #tpu.memory_space<vmem>>, vector<1x1024x256xbf16>
    %132 = vector.shape_cast %131 : vector<1x1024x256xbf16> to vector<1024x256xbf16>
    %cst_64 = arith.constant dense<0.000000e+00> : vector<17x256xf32>
    %133 = tpu.matmul %130, %132, %cst_64 {dimension_numbers = #tpu.dot_dimension_numbers<[1], [0], [0], [1], [0, 0, 1, 1], [], []>} : vector<17x1024xbf16>, vector<1024x256xbf16>, vector<17x256xf32> -> vector<17x256xf32>
    %c0_65 = arith.constant 0 : index
    %c0_66 = arith.constant 0 : index
    %c0_67 = arith.constant 0 : index
    %134 = vector.load %arg18[%c0_65, %c0_66, %c0_67] : memref<1x1x256xf32, #tpu.memory_space<vmem>>, vector<1x1x256xf32>
    %135 = vector.shape_cast %134 : vector<1x1x256xf32> to vector<1x256xf32>
    %136 = vector.broadcast %135 : vector<1x256xf32> to vector<17x256xf32>
    %137 = arith.addf %133, %136 : vector<17x256xf32>
    %138 = arith.addf %87, %137 : vector<17x256xf32>
    %c0_68 = arith.constant 0 : index
    %c0_69 = arith.constant 0 : index
    %139 = vector.load %arg23[%c0_68, %c0_69] : memref<17x256xf32, #tpu.memory_space<vmem>>, vector<17x256xf32>
    tpu.vector_store %arg23[%c0_68, %c0_69], %138 {strides = array<i32>} : memref<17x256xf32, #tpu.memory_space<vmem>>, vector<17x256xf32>,
    %c1_i32 = arith.constant 1 : i32
    %140 = arith.cmpi eq, %arg1, %c1_i32 : i32
    %141 = arith.extui %140 : i1 to i32
    %c0_i32_70 = arith.constant 0 : i32
    %142 = arith.cmpi ne, %141, %c0_i32_70 : i32
    scf.if %142 {
      %143 = vector.extract_strided_slice %138 {offsets = [0, 0], sizes = [1, 256], strides = [1, 1]} : vector<17x256xf32> to vector<1x256xf32>
      %c0_71 = arith.constant 0 : index
      %c0_72 = arith.constant 0 : index
      %144 = vector.load %arg19[%c0_71, %c0_72] : memref<1x256xf32, #tpu.memory_space<vmem>>, vector<1x256xf32>
      %c0_73 = arith.constant 0 : index
      %c0_74 = arith.constant 0 : index
      %145 = vector.load %arg20[%c0_73, %c0_74] : memref<1x256xf32, #tpu.memory_space<vmem>>, vector<1x256xf32>
      %cst_75 = arith.constant dense<0.000000e+00> : vector<1xf32>
      %146 = vector.multi_reduction <add>, %143, %cst_75 [1] : vector<1x256xf32> to vector<1xf32>
      %147 = vector.shape_cast %146 : vector<1xf32> to vector<1x1xf32>
      %cst_76 = arith.constant 2.560000e+02 : f32
      %148 = vector.broadcast %cst_76 : f32 to vector<1x1xf32>
      %149 = arith.divf %147, %148 : vector<1x1xf32>
      %150 = vector.broadcast %149 : vector<1x1xf32> to vector<1x256xf32>
      %151 = arith.subf %143, %150 : vector<1x256xf32>
      %152 = arith.mulf %151, %151 : vector<1x256xf32>
      %cst_77 = arith.constant dense<0.000000e+00> : vector<1xf32>
      %153 = vector.multi_reduction <add>, %152, %cst_77 [1] : vector<1x256xf32> to vector<1xf32>
      %154 = vector.shape_cast %153 : vector<1xf32> to vector<1x1xf32>
      %cst_78 = arith.constant 2.560000e+02 : f32
      %155 = vector.broadcast %cst_78 : f32 to vector<1x1xf32>
      %156 = arith.divf %154, %155 : vector<1x1xf32>
      %157 = vector.broadcast %149 : vector<1x1xf32> to vector<1x256xf32>
      %158 = arith.subf %143, %157 : vector<1x256xf32>
      %cst_79 = arith.constant 9.99999974E-6 : f32
      %159 = vector.broadcast %cst_79 : f32 to vector<1x1xf32>
      %160 = arith.addf %156, %159 : vector<1x1xf32>
      %161 = math.rsqrt %160 : vector<1x1xf32>
      %162 = vector.broadcast %161 : vector<1x1xf32> to vector<1x256xf32>
      %163 = arith.mulf %158, %162 : vector<1x256xf32>
      %164 = arith.mulf %163, %144 : vector<1x256xf32>
      %165 = arith.addf %164, %145 : vector<1x256xf32>
      %166 = arith.truncf %165 : vector<1x256xf32> to vector<1x256xbf16>
      %c0_80 = arith.constant 0 : index
      %c0_81 = arith.constant 0 : index
      %167 = vector.load %arg21[%c0_80, %c0_81] : memref<256x128xbf16, #tpu.memory_space<vmem>>, vector<256x128xbf16>
      %cst_82 = arith.constant dense<0.000000e+00> : vector<1x128xf32>
      %168 = tpu.matmul %166, %167, %cst_82 {dimension_numbers = #tpu.dot_dimension_numbers<[1], [0], [0], [1], [0, 0, 1, 1], [], []>} : vector<1x256xbf16>, vector<256x128xbf16>, vector<1x128xf32> -> vector<1x128xf32>
      %c0_83 = arith.constant 0 : index
      %c0_84 = arith.constant 0 : index
      %c0_85 = arith.constant 0 : index
      %169 = vector.load %arg22[%c0_83, %c0_84, %c0_85] : memref<1x1x128xf32, #tpu.memory_space<vmem>>, vector<1x1x128xf32>
      %170 = vector.shape_cast %169 : vector<1x1x128xf32> to vector<1x128xf32>
      %171 = vector.shape_cast %168 : vector<1x128xf32> to vector<1x1x128xf32>
      tpu.vector_store %arg22[%c0_83, %c0_84, %c0_85], %171 {strides = array<i32>} : memref<1x1x128xf32, #tpu.memory_space<vmem>>, vector<1x1x128xf32>,
    } else {
    }
    return
  }
  func.func @transform_0(%arg0: i32, %arg1: i32) -> (i32, i32, i32) {
    %c0_i32 = arith.constant 0 : i32
    %c0_i32_0 = arith.constant 0 : i32
    %c0_i32_1 = arith.constant 0 : i32
    return %arg0, %c0_i32, %c0_i32_0 : i32, i32, i32
  }
  func.func @transform_1(%arg0: i32, %arg1: i32) -> (i32, i32) {
    %c0_i32 = arith.constant 0 : i32
    %c0_i32_0 = arith.constant 0 : i32
    %c0_i32_1 = arith.constant 0 : i32
    return %c0_i32, %c0_i32_0 : i32, i32
  }
  func.func @transform_2(%arg0: i32, %arg1: i32) -> (i32, i32) {
    %c0_i32 = arith.constant 0 : i32
    %c0_i32_0 = arith.constant 0 : i32
    %c0_i32_1 = arith.constant 0 : i32
    return %c0_i32, %c0_i32_0 : i32, i32
  }
  func.func @transform_3(%arg0: i32, %arg1: i32) -> (i32, i32) {
    %c0_i32 = arith.constant 0 : i32
    %c0_i32_0 = arith.constant 0 : i32
    %c0_i32_1 = arith.constant 0 : i32
    return %c0_i32, %c0_i32_0 : i32, i32
  }
  func.func @transform_4(%arg0: i32, %arg1: i32) -> (i32, i32) {
    %c0_i32 = arith.constant 0 : i32
    %c0_i32_0 = arith.constant 0 : i32
    %c0_i32_1 = arith.constant 0 : i32
    return %c0_i32, %c0_i32_0 : i32, i32
  }
  func.func @transform_5(%arg0: i32, %arg1: i32) -> (i32, i32, i32) {
    %c0_i32 = arith.constant 0 : i32
    %c0_i32_0 = arith.constant 0 : i32
    %c0_i32_1 = arith.constant 0 : i32
    return %arg1, %c0_i32, %c0_i32_0 : i32, i32, i32
  }
  func.func @transform_6(%arg0: i32, %arg1: i32) -> (i32, i32, i32) {
    %c0_i32 = arith.constant 0 : i32
    %c0_i32_0 = arith.constant 0 : i32
    %c0_i32_1 = arith.constant 0 : i32
    return %arg1, %c0_i32, %c0_i32_0 : i32, i32, i32
  }
  func.func @transform_7(%arg0: i32, %arg1: i32) -> (i32, i32, i32) {
    %c0_i32 = arith.constant 0 : i32
    %c0_i32_0 = arith.constant 0 : i32
    %c0_i32_1 = arith.constant 0 : i32
    return %arg1, %c0_i32, %c0_i32_0 : i32, i32, i32
  }
  func.func @transform_8(%arg0: i32, %arg1: i32) -> (i32, i32, i32) {
    %c0_i32 = arith.constant 0 : i32
    %c0_i32_0 = arith.constant 0 : i32
    %c0_i32_1 = arith.constant 0 : i32
    return %arg1, %c0_i32, %c0_i32_0 : i32, i32, i32
  }
  func.func @transform_9(%arg0: i32, %arg1: i32) -> (i32, i32, i32) {
    %c0_i32 = arith.constant 0 : i32
    %c0_i32_0 = arith.constant 0 : i32
    %c0_i32_1 = arith.constant 0 : i32
    return %arg1, %c0_i32, %c0_i32_0 : i32, i32, i32
  }
  func.func @transform_10(%arg0: i32, %arg1: i32) -> (i32, i32, i32) {
    %c0_i32 = arith.constant 0 : i32
    %c0_i32_0 = arith.constant 0 : i32
    %c0_i32_1 = arith.constant 0 : i32
    return %arg1, %c0_i32, %c0_i32_0 : i32, i32, i32
  }
  func.func @transform_11(%arg0: i32, %arg1: i32) -> (i32, i32, i32) {
    %c0_i32 = arith.constant 0 : i32
    %c0_i32_0 = arith.constant 0 : i32
    %c0_i32_1 = arith.constant 0 : i32
    return %arg1, %c0_i32, %c0_i32_0 : i32, i32, i32
  }
  func.func @transform_12(%arg0: i32, %arg1: i32) -> (i32, i32, i32) {
    %c0_i32 = arith.constant 0 : i32
    %c0_i32_0 = arith.constant 0 : i32
    %c0_i32_1 = arith.constant 0 : i32
    return %arg1, %c0_i32, %c0_i32_0 : i32, i32, i32
  }
  func.func @transform_13(%arg0: i32, %arg1: i32) -> (i32, i32, i32) {
    %c0_i32 = arith.constant 0 : i32
    %c0_i32_0 = arith.constant 0 : i32
    %c0_i32_1 = arith.constant 0 : i32
    return %arg1, %c0_i32, %c0_i32_0 : i32, i32, i32
  }
  func.func @transform_14(%arg0: i32, %arg1: i32) -> (i32, i32, i32) {
    %c0_i32 = arith.constant 0 : i32
    %c0_i32_0 = arith.constant 0 : i32
    %c0_i32_1 = arith.constant 0 : i32
    return %arg1, %c0_i32, %c0_i32_0 : i32, i32, i32
  }
  func.func @transform_15(%arg0: i32, %arg1: i32) -> (i32, i32, i32) {
    %c0_i32 = arith.constant 0 : i32
    %c0_i32_0 = arith.constant 0 : i32
    %c0_i32_1 = arith.constant 0 : i32
    return %arg1, %c0_i32, %c0_i32_0 : i32, i32, i32
  }
  func.func @transform_16(%arg0: i32, %arg1: i32) -> (i32, i32, i32) {
    %c0_i32 = arith.constant 0 : i32
    %c0_i32_0 = arith.constant 0 : i32
    %c0_i32_1 = arith.constant 0 : i32
    return %arg1, %c0_i32, %c0_i32_0 : i32, i32, i32
  }
  func.func @transform_17(%arg0: i32, %arg1: i32) -> (i32, i32) {
    %c0_i32 = arith.constant 0 : i32
    %c0_i32_0 = arith.constant 0 : i32
    %c0_i32_1 = arith.constant 0 : i32
    return %c0_i32, %c0_i32_0 : i32, i32
  }
  func.func @transform_18(%arg0: i32, %arg1: i32) -> (i32, i32) {
    %c0_i32 = arith.constant 0 : i32
    %c0_i32_0 = arith.constant 0 : i32
    %c0_i32_1 = arith.constant 0 : i32
    return %c0_i32, %c0_i32_0 : i32, i32
  }
  func.func @transform_19(%arg0: i32, %arg1: i32) -> (i32, i32) {
    %c0_i32 = arith.constant 0 : i32
    %c0_i32_0 = arith.constant 0 : i32
    %c0_i32_1 = arith.constant 0 : i32
    return %c0_i32, %c0_i32_0 : i32, i32
  }
  func.func @transform_20(%arg0: i32, %arg1: i32) -> (i32, i32, i32) {
    %c0_i32 = arith.constant 0 : i32
    %c0_i32_0 = arith.constant 0 : i32
    %c0_i32_1 = arith.constant 0 : i32
    return %arg0, %c0_i32, %c0_i32_0 : i32, i32, i32
  }
}

</mosaic_0001>

<llo_original>
// kernel: encode_image.1
$region0: #{encode_image.1}
  #allocation0 [shape = 'u32[]', space=smem, size = 0x4, offset = 0x4, fixed_abs, tag = 'smem constant byte address 0x4 - core index']
  #allocation1 [shape = 'u32[144,128]{1,0:T(1,128)}', space=vmem, size = 0x12000, scoped, tag = 'internal scratch']
  #allocation2 [shape = 'f32[17,256]{1,0:T(8,128)}', space=vmem, size = 0x6000, scoped, tag = 'scratch operand']
  #allocation3 [shape = 'bf16[17,256]{1,0:T(8,128)(2,1)}', space=vmem, size = 0x3000, scoped, tag = 'scratch operand']
  %s0 = inlined_call_operand.vmem [shape: bf16[2,17,192], index: 0, kind: input, shape index: {}]
  %s1 = inlined_call_operand.hbm [shape: bf16[192,256], index: 1, kind: input, shape index: {}]
  %s2 = inlined_call_operand.hbm [shape: f32[17,256], index: 2, kind: input, shape index: {}]
  %s3 = inlined_call_operand.hbm [shape: f32[1,256], index: 3, kind: input, shape index: {}]
  %s4 = inlined_call_operand.hbm [shape: f32[1,256], index: 4, kind: input, shape index: {}]
  %s5 = inlined_call_operand.hbm [shape: f32[2,1,256], index: 5, kind: input, shape index: {}]
  %s6 = inlined_call_operand.hbm [shape: f32[2,1,256], index: 6, kind: input, shape index: {}]
  %s7 = inlined_call_operand.vmem [shape: bf16[2,256,768], index: 7, kind: input, shape index: {}]
  %s8 = inlined_call_operand.hbm [shape: f32[2,1,768], index: 8, kind: input, shape index: {}]
  %s9 = inlined_call_operand.vmem [shape: bf16[2,256,256], index: 9, kind: input, shape index: {}]
  %s10 = inlined_call_operand.hbm [shape: f32[2,1,256], index: 10, kind: input, shape index: {}]
  %s11 = inlined_call_operand.hbm [shape: f32[2,1,256], index: 11, kind: input, shape index: {}]
  %s12 = inlined_call_operand.hbm [shape: f32[2,1,256], index: 12, kind: input, shape index: {}]
  %s13 = inlined_call_operand.hbm [shape: bf16[2,256,1024], index: 13, kind: input, shape index: {}]
  %s14 = inlined_call_operand.vmem [shape: f32[2,1,1024], index: 14, kind: input, shape index: {}]
  %s15 = inlined_call_operand.hbm [shape: bf16[2,1024,256], index: 15, kind: input, shape index: {}]
  %s16 = inlined_call_operand.hbm [shape: f32[2,1,256], index: 16, kind: input, shape index: {}]
  %s17 = inlined_call_operand.hbm [shape: f32[1,256], index: 17, kind: input, shape index: {}]
  %s18 = inlined_call_operand.hbm [shape: f32[1,256], index: 18, kind: input, shape index: {}]
  %s19 = inlined_call_operand.hbm [shape: bf16[256,128], index: 19, kind: input, shape index: {}]
  %s20 = inlined_call_operand.hbm [shape: f32[2,1,128], index: 20, kind: output, shape index: {}]
  %s21 = sld [smem:[#allocation0]]
  $region185: #{encode_image.1} parent=0
    _
  %s23 = ssub.s32 1, %s21
  %s24 = scalar_select 0, %s23, %s21
  $region1: #{encode_image.1} parent=0
    #allocation4 [shape = 'u8[98304]{0}', space=vmem, size = 0x18000, scoped, tag = 'input window, operand 1, single buffered']
    #allocation5 [shape = 's32[2]{0}', space=sflag, size = 0x8, scoped, tag = 'scoped memory for encode_image.1']
    #allocation6 [shape = 's32[2]{0}', space=sflag, size = 0x8, scoped, tag = 'scoped memory for encode_image.1']
    #allocation7 [shape = 'u8[24576]{0}', space=vmem, size = 0x6000, scoped, tag = 'input window, operand 2, single buffered']
    #allocation8 [shape = 's32[1]{0}', space=sflag, size = 0x4, scoped, tag = 'scoped memory for encode_image.1']
    #allocation9 [shape = 'u8[1024]{0}', space=vmem, size = 0x400, scoped, tag = 'input window, operand 3, single buffered']
    #allocation10 [shape = 'u8[1024]{0}', space=vmem, size = 0x400, scoped, tag = 'input window, operand 4, single buffered']
    #allocation11 [shape = 's32[1]{0}', space=sflag, size = 0x4, scoped, tag = 'scoped memory for encode_image.1']
    #allocation12 [shape = 'u8[2048]{0}', space=vmem, size = 0x800, scoped, tag = 'input window, operand 5']
    #allocation13 [shape = 'u8[2048]{0}', space=vmem, size = 0x800, scoped, tag = 'input window, operand 6']
    #allocation14 [shape = 'u8[6144]{0}', space=vmem, size = 0x1800, scoped, tag = 'input window, operand 8']
    #allocation15 [shape = 'u8[2048]{0}', space=vmem, size = 0x800, scoped, tag = 'input window, operand 10']
    #allocation16 [shape = 'u8[2048]{0}', space=vmem, size = 0x800, scoped, tag = 'input window, operand 11']
    #allocation17 [shape = 'u8[2048]{0}', space=vmem, size = 0x800, scoped, tag = 'input window, operand 12']
    #allocation18 [shape = 'u8[1048576]{0}', space=vmem, size = 0x100000, scoped, tag = 'input window, operand 13']
    #allocation19 [shape = 'u8[1048576]{0}', space=vmem, size = 0x100000, scoped, tag = 'input window, operand 15']
    #allocation20 [shape = 'u8[2048]{0}', space=vmem, size = 0x800, scoped, tag = 'input window, operand 16']
    #allocation21 [shape = 'u8[1024]{0}', space=vmem, size = 0x400, scoped, tag = 'input window, operand 17, single buffered']
    #allocation22 [shape = 'u8[1024]{0}', space=vmem, size = 0x400, scoped, tag = 'input window, operand 18, single buffered']
    #allocation23 [shape = 'u8[65536]{0}', space=vmem, size = 0x10000, scoped, tag = 'input window, operand 19, single buffered']
    #allocation24 [shape = 's32[1]{0}', space=sflag, size = 0x4, scoped, tag = 'scoped memory for encode_image.1']
    #allocation25 [shape = 'u8[1024]{0}', space=vmem, size = 0x400, scoped, tag = 'output window, operand 0']
    %25 = vsyncpa [#allocation5], 0
    %26 = vsyncpa [#allocation8], 0
    %27 = vsyncpa [#allocation11], 0
    %28 = vsyncpa [#allocation24], 0
    %29 = vsyncpa [#allocation6], 0
    %s30 = scalar_lea.sflag [#allocation6], 1
    %31 = vsyncpa %s30, 0
    loop: start=0, step=1, limit=6
    $region2: #{encode_image.1} parent=1 // loop_pre_header
      _
    $region3: #{encode_image.1} parent=1 // loop_header
      %s33 = sphi 0, %s37
      %p34 = scmp.ge.s32.totalorder %s33, 6
      %s40 = sphi 0, %s52
      %s41 = sphi 0, %s48
      %s42 = sphi 0, %s40
      %s43 = sphi 0, %s41
      %s44 = sphi 0, %s42
      %s45 = sphi 0, %s43
      %s55 = sphi 0, %s57
      %s58 = sphi 0, %s55
      %s59 = sphi 0, %s58
      %s75 = sphi 0, %s59
      %s79 = sphi 0, %s79
      %s81 = sphi 0, %s79
      %s82 = sphi 0, %s81
      %s96 = sphi 0, %s82
      %s100 = sphi 0, %s100
      %s102 = sphi 0, %s100
      %s103 = sphi 0, %s102
      %s117 = sphi 0, %s103
      %s121 = sphi 0, %s121
      %s123 = sphi 0, %s121
      %s124 = sphi 0, %s123
      %s138 = sphi 0, %s124
      %s142 = sphi 0, %s142
      %s144 = sphi 0, %s142
      %s145 = sphi 0, %s144
      %s159 = sphi 0, %s145
      %s165 = sphi 0, %s167
      %s168 = sphi 0, %s165
      %s169 = sphi 0, %s168
      %s185 = sphi 0, %s169
      %s191 = sphi 0, %s193
      %s194 = sphi 0, %s191
      %s195 = sphi 0, %s194
      %s211 = sphi 0, %s195
      %s217 = sphi 0, %s219
      %s220 = sphi 0, %s217
      %s221 = sphi 0, %s220
      %s237 = sphi 0, %s221
      %s243 = sphi 0, %s245
      %s246 = sphi 0, %s243
      %s247 = sphi 0, %s246
      %s263 = sphi 0, %s247
      %s269 = sphi 0, %s271
      %s272 = sphi 0, %s269
      %s273 = sphi 0, %s272
      %s289 = sphi 0, %s273
      %s295 = sphi 0, %s297
      %s298 = sphi 0, %s295
      %s299 = sphi 0, %s298
      %s315 = sphi 0, %s299
      %s321 = sphi 0, %s323
      %s324 = sphi 0, %s321
      %s325 = sphi 0, %s324
      %s341 = sphi 0, %s325
      %s347 = sphi 0, %s349
      %s350 = sphi 0, %s347
      %s351 = sphi 0, %s350
      %s367 = sphi 0, %s351
      %s373 = sphi 0, %s375
      %s376 = sphi 0, %s373
      %s377 = sphi 0, %s376
      %s393 = sphi 0, %s377
      %s399 = sphi 0, %s401
      %s402 = sphi 0, %s399
      %s403 = sphi 0, %s402
      %s419 = sphi 0, %s403
      %s425 = sphi 0, %s427
      %s428 = sphi 0, %s425
      %s429 = sphi 0, %s428
      %s445 = sphi 0, %s429
      %s451 = sphi 0, %s453
      %s454 = sphi 0, %s451
      %s455 = sphi 0, %s454
      %s471 = sphi 0, %s455
      %s475 = sphi 0, %s475
      %s477 = sphi 0, %s475
      %s478 = sphi 0, %s477
      %s492 = sphi 0, %s478
      %s496 = sphi 0, %s496
      %s498 = sphi 0, %s496
      %s499 = sphi 0, %s498
      %s513 = sphi 0, %s499
      %s517 = sphi 0, %s517
      %s519 = sphi 0, %s517
      %s520 = sphi 0, %s519
      %s534 = sphi 0, %s520
      %s540 = sphi 0, %s542
      %s543 = sphi 0, %s540
      %s544 = sphi 0, %s543
      %s560 = sphi 0, %s544
    $region4: #{encode_image.1} parent=1 // loop_header_branch
      %36 = sbr.rel (%p34) target = $region8
    $region5: #{encode_image.1} parent=1 // loop_body
      %s38 = ssub.s32 %s33, 1
      %s39 = ssub.s32 %s33, 2
      %s46 = sadd.s32 1, %s41
      %p47 = scmp.ge.s32.totalorder %s46, 2
      %s48 = scalar_select %p47, 0, %s46
      %s49 = sadd.s32 1, %s40
      %s50 = scalar_select %p47, %s49, %s40
      %p51 = scmp.ge.s32.totalorder %s50, 2
      %s52 = scalar_select %p51, 0, %s50
      %s53 = ssub.s32 %s40, %s52
      %p54 = scmp.eq.s32.totalorder %s53, 0
      %s56 = sadd.s32 %s55, 1
      %s57 = scalar_select %p54, %s55, %s56
      %p60 = pneg %p54
      %p61 = scmp.eq.s32.totalorder %s33, 3
      %p62 = por %p60, %p61
      %p63 = scmp.ne.s32.totalorder %s55, %s58
      %p64 = scmp.eq.s32.totalorder %s33, 0
      %p65 = por %p63, %p64
      %p66 = scmp.ne.s32.totalorder %s55, %s58
      %p67 = scmp.eq.s32.totalorder %s38, 3
      %p68 = por %p66, %p67
      %p69 = scmp.ne.s32.totalorder %s58, %s59
      %p70 = scmp.eq.s32.totalorder %s38, 0
      %p71 = por %p69, %p70
      %p72 = scmp.ne.s32.totalorder %s58, %s59
      %p73 = scmp.eq.s32.totalorder %s39, 3
      %p74 = por %p72, %p73
      %p76 = scmp.ne.s32.totalorder %s59, %s75
      %p77 = scmp.eq.s32.totalorder %s39, 0
      %p78 = por %p76, %p77
      %s80 = sadd.s32 %s79, 1
      %p83 = scmp.eq.s32.totalorder %s33, 3
      %p84 = scmp.ne.s32.totalorder %s79, %s81
      %p85 = scmp.eq.s32.totalorder %s33, 0
      %p86 = por %p84, %p85
      %p87 = scmp.ne.s32.totalorder %s79, %s81
      %p88 = scmp.eq.s32.totalorder %s38, 3
      %p89 = por %p87, %p88
      %p90 = scmp.ne.s32.totalorder %s81, %s82
      %p91 = scmp.eq.s32.totalorder %s38, 0
      %p92 = por %p90, %p91
      %p93 = scmp.ne.s32.totalorder %s81, %s82
      %p94 = scmp.eq.s32.totalorder %s39, 3
      %p95 = por %p93, %p94
      %p97 = scmp.ne.s32.totalorder %s82, %s96
      %p98 = scmp.eq.s32.totalorder %s39, 0
      %p99 = por %p97, %p98
      %s101 = sadd.s32 %s100, 1
      %p104 = scmp.eq.s32.totalorder %s33, 3
      %p105 = scmp.ne.s32.totalorder %s100, %s102
      %p106 = scmp.eq.s32.totalorder %s33, 0
      %p107 = por %p105, %p106
      %p108 = scmp.ne.s32.totalorder %s100, %s102
      %p109 = scmp.eq.s32.totalorder %s38, 3
      %p110 = por %p108, %p109
      %p111 = scmp.ne.s32.totalorder %s102, %s103
      %p112 = scmp.eq.s32.totalorder %s38, 0
      %p113 = por %p111, %p112
      %p114 = scmp.ne.s32.totalorder %s102, %s103
      %p115 = scmp.eq.s32.totalorder %s39, 3
      %p116 = por %p114, %p115
      %p118 = scmp.ne.s32.totalorder %s103, %s117
      %p119 = scmp.eq.s32.totalorder %s39, 0
      %p120 = por %p118, %p119
      %s122 = sadd.s32 %s121, 1
      %p125 = scmp.eq.s32.totalorder %s33, 3
      %p126 = scmp.ne.s32.totalorder %s121, %s123
      %p127 = scmp.eq.s32.totalorder %s33, 0
      %p128 = por %p126, %p127
      %p129 = scmp.ne.s32.totalorder %s121, %s123
      %p130 = scmp.eq.s32.totalorder %s38, 3
      %p131 = por %p129, %p130
      %p132 = scmp.ne.s32.totalorder %s123, %s124
      %p133 = scmp.eq.s32.totalorder %s38, 0
      %p134 = por %p132, %p133
      %p135 = scmp.ne.s32.totalorder %s123, %s124
      %p136 = scmp.eq.s32.totalorder %s39, 3
      %p137 = por %p135, %p136
      %p139 = scmp.ne.s32.totalorder %s124, %s138
      %p140 = scmp.eq.s32.totalorder %s39, 0
      %p141 = por %p139, %p140
      %s143 = sadd.s32 %s142, 1
      %p146 = scmp.eq.s32.totalorder %s33, 3
      %p147 = scmp.ne.s32.totalorder %s142, %s144
      %p148 = scmp.eq.s32.totalorder %s33, 0
      %p149 = por %p147, %p148
      %p150 = scmp.ne.s32.totalorder %s142, %s144
      %p151 = scmp.eq.s32.totalorder %s38, 3
      %p152 = por %p150, %p151
      %p153 = scmp.ne.s32.totalorder %s144, %s145
      %p154 = scmp.eq.s32.totalorder %s38, 0
      %p155 = por %p153, %p154
      %p156 = scmp.ne.s32.totalorder %s144, %s145
      %p157 = scmp.eq.s32.totalorder %s39, 3
      %p158 = por %p156, %p157
      %p160 = scmp.ne.s32.totalorder %s145, %s159
      %p161 = scmp.eq.s32.totalorder %s39, 0
      %p162 = por %p160, %p161
      %s163 = ssub.s32 %s41, %s48
      %p164 = scmp.eq.s32.totalorder %s163, 0
      %s166 = sadd.s32 %s165, 1
      %s167 = scalar_select %p164, %s165, %s166
      %p170 = pneg %p164
      %p171 = scmp.eq.s32.totalorder %s33, 3
      %p172 = por %p170, %p171
      %p173 = scmp.ne.s32.totalorder %s165, %s168
      %p174 = scmp.eq.s32.totalorder %s33, 0
      %p175 = por %p173, %p174
      %p176 = scmp.ne.s32.totalorder %s165, %s168
      %p177 = scmp.eq.s32.totalorder %s38, 3
      %p178 = por %p176, %p177
      %p179 = scmp.ne.s32.totalorder %s168, %s169
      %p180 = scmp.eq.s32.totalorder %s38, 0
      %p181 = por %p179, %p180
      %p182 = scmp.ne.s32.totalorder %s168, %s169
      %p183 = scmp.eq.s32.totalorder %s39, 3
      %p184 = por %p182, %p183
      %p186 = scmp.ne.s32.totalorder %s169, %s185
      %p187 = scmp.eq.s32.totalorder %s39, 0
      %p188 = por %p186, %p187
      %s189 = ssub.s32 %s41, %s48
      %p190 = scmp.eq.s32.totalorder %s189, 0
      %s192 = sadd.s32 %s191, 1
      %s193 = scalar_select %p190, %s191, %s192
      %p196 = pneg %p190
      %p197 = scmp.eq.s32.totalorder %s33, 3
      %p198 = por %p196, %p197
      %p199 = scmp.ne.s32.totalorder %s191, %s194
      %p200 = scmp.eq.s32.totalorder %s33, 0
      %p201 = por %p199, %p200
      %p202 = scmp.ne.s32.totalorder %s191, %s194
      %p203 = scmp.eq.s32.totalorder %s38, 3
      %p204 = por %p202, %p203
      %p205 = scmp.ne.s32.totalorder %s194, %s195
      %p206 = scmp.eq.s32.totalorder %s38, 0
      %p207 = por %p205, %p206
      %p208 = scmp.ne.s32.totalorder %s194, %s195
      %p209 = scmp.eq.s32.totalorder %s39, 3
      %p210 = por %p208, %p209
      %p212 = scmp.ne.s32.totalorder %s195, %s211
      %p213 = scmp.eq.s32.totalorder %s39, 0
      %p214 = por %p212, %p213
      %s215 = ssub.s32 %s41, %s48
      %p216 = scmp.eq.s32.totalorder %s215, 0
      %s218 = sadd.s32 %s217, 1
      %s219 = scalar_select %p216, %s217, %s218
      %p222 = pneg %p216
      %p223 = scmp.eq.s32.totalorder %s33, 3
      %p224 = por %p222, %p223
      %p225 = scmp.ne.s32.totalorder %s217, %s220
      %p226 = scmp.eq.s32.totalorder %s33, 0
      %p227 = por %p225, %p226
      %p228 = scmp.ne.s32.totalorder %s217, %s220
      %p229 = scmp.eq.s32.totalorder %s38, 3
      %p230 = por %p228, %p229
      %p231 = scmp.ne.s32.totalorder %s220, %s221
      %p232 = scmp.eq.s32.totalorder %s38, 0
      %p233 = por %p231, %p232
      %p234 = scmp.ne.s32.totalorder %s220, %s221
      %p235 = scmp.eq.s32.totalorder %s39, 3
      %p236 = por %p234, %p235
      %p238 = scmp.ne.s32.totalorder %s221, %s237
      %p239 = scmp.eq.s32.totalorder %s39, 0
      %p240 = por %p238, %p239
      %s241 = ssub.s32 %s41, %s48
      %p242 = scmp.eq.s32.totalorder %s241, 0
      %s244 = sadd.s32 %s243, 1
      %s245 = scalar_select %p242, %s243, %s244
      %p248 = pneg %p242
      %p249 = scmp.eq.s32.totalorder %s33, 3
      %p250 = por %p248, %p249
      %p251 = scmp.ne.s32.totalorder %s243, %s246
      %p252 = scmp.eq.s32.totalorder %s33, 0
      %p253 = por %p251, %p252
      %p254 = scmp.ne.s32.totalorder %s243, %s246
      %p255 = scmp.eq.s32.totalorder %s38, 3
      %p256 = por %p254, %p255
      %p257 = scmp.ne.s32.totalorder %s246, %s247
      %p258 = scmp.eq.s32.totalorder %s38, 0
      %p259 = por %p257, %p258
      %p260 = scmp.ne.s32.totalorder %s246, %s247
      %p261 = scmp.eq.s32.totalorder %s39, 3
      %p262 = por %p260, %p261
      %p264 = scmp.ne.s32.totalorder %s247, %s263
      %p265 = scmp.eq.s32.totalorder %s39, 0
      %p266 = por %p264, %p265
      %s267 = ssub.s32 %s41, %s48
      %p268 = scmp.eq.s32.totalorder %s267, 0
      %s270 = sadd.s32 %s269, 1
      %s271 = scalar_select %p268, %s269, %s270
      %p274 = pneg %p268
      %p275 = scmp.eq.s32.totalorder %s33, 3
      %p276 = por %p274, %p275
      %p277 = scmp.ne.s32.totalorder %s269, %s272
      %p278 = scmp.eq.s32.totalorder %s33, 0
      %p279 = por %p277, %p278
      %p280 = scmp.ne.s32.totalorder %s269, %s272
      %p281 = scmp.eq.s32.totalorder %s38, 3
      %p282 = por %p280, %p281
      %p283 = scmp.ne.s32.totalorder %s272, %s273
      %p284 = scmp.eq.s32.totalorder %s38, 0
      %p285 = por %p283, %p284
      %p286 = scmp.ne.s32.totalorder %s272, %s273
      %p287 = scmp.eq.s32.totalorder %s39, 3
      %p288 = por %p286, %p287
      %p290 = scmp.ne.s32.totalorder %s273, %s289
      %p291 = scmp.eq.s32.totalorder %s39, 0
      %p292 = por %p290, %p291
      %s293 = ssub.s32 %s41, %s48
      %p294 = scmp.eq.s32.totalorder %s293, 0
      %s296 = sadd.s32 %s295, 1
      %s297 = scalar_select %p294, %s295, %s296
      %p300 = pneg %p294
      %p301 = scmp.eq.s32.totalorder %s33, 3
      %p302 = por %p300, %p301
      %p303 = scmp.ne.s32.totalorder %s295, %s298
      %p304 = scmp.eq.s32.totalorder %s33, 0
      %p305 = por %p303, %p304
      %p306 = scmp.ne.s32.totalorder %s295, %s298
      %p307 = scmp.eq.s32.totalorder %s38, 3
      %p308 = por %p306, %p307
      %p309 = scmp.ne.s32.totalorder %s298, %s299
      %p310 = scmp.eq.s32.totalorder %s38, 0
      %p311 = por %p309, %p310
      %p312 = scmp.ne.s32.totalorder %s298, %s299
      %p313 = scmp.eq.s32.totalorder %s39, 3
      %p314 = por %p312, %p313
      %p316 = scmp.ne.s32.totalorder %s299, %s315
      %p317 = scmp.eq.s32.totalorder %s39, 0
      %p318 = por %p316, %p317
      %s319 = ssub.s32 %s41, %s48
      %p320 = scmp.eq.s32.totalorder %s319, 0
      %s322 = sadd.s32 %s321, 1
      %s323 = scalar_select %p320, %s321, %s322
      %p326 = pneg %p320
      %p327 = scmp.eq.s32.totalorder %s33, 3
      %p328 = por %p326, %p327
      %p329 = scmp.ne.s32.totalorder %s321, %s324
      %p330 = scmp.eq.s32.totalorder %s33, 0
      %p331 = por %p329, %p330
      %p332 = scmp.ne.s32.totalorder %s321, %s324
      %p333 = scmp.eq.s32.totalorder %s38, 3
      %p334 = por %p332, %p333
      %p335 = scmp.ne.s32.totalorder %s324, %s325
      %p336 = scmp.eq.s32.totalorder %s38, 0
      %p337 = por %p335, %p336
      %p338 = scmp.ne.s32.totalorder %s324, %s325
      %p339 = scmp.eq.s32.totalorder %s39, 3
      %p340 = por %p338, %p339
      %p342 = scmp.ne.s32.totalorder %s325, %s341
      %p343 = scmp.eq.s32.totalorder %s39, 0
      %p344 = por %p342, %p343
      %s345 = ssub.s32 %s41, %s48
      %p346 = scmp.eq.s32.totalorder %s345, 0
      %s348 = sadd.s32 %s347, 1
      %s349 = scalar_select %p346, %s347, %s348
      %p352 = pneg %p346
      %p353 = scmp.eq.s32.totalorder %s33, 3
      %p354 = por %p352, %p353
      %p355 = scmp.ne.s32.totalorder %s347, %s350
      %p356 = scmp.eq.s32.totalorder %s33, 0
      %p357 = por %p355, %p356
      %p358 = scmp.ne.s32.totalorder %s347, %s350
      %p359 = scmp.eq.s32.totalorder %s38, 3
      %p360 = por %p358, %p359
      %p361 = scmp.ne.s32.totalorder %s350, %s351
      %p362 = scmp.eq.s32.totalorder %s38, 0
      %p363 = por %p361, %p362
      %p364 = scmp.ne.s32.totalorder %s350, %s351
      %p365 = scmp.eq.s32.totalorder %s39, 3
      %p366 = por %p364, %p365
      %p368 = scmp.ne.s32.totalorder %s351, %s367
      %p369 = scmp.eq.s32.totalorder %s39, 0
      %p370 = por %p368, %p369
      %s371 = ssub.s32 %s41, %s48
      %p372 = scmp.eq.s32.totalorder %s371, 0
      %s374 = sadd.s32 %s373, 1
      %s375 = scalar_select %p372, %s373, %s374
      %p378 = pneg %p372
      %p379 = scmp.eq.s32.totalorder %s33, 3
      %p380 = por %p378, %p379
      %p381 = scmp.ne.s32.totalorder %s373, %s376
      %p382 = scmp.eq.s32.totalorder %s33, 0
      %p383 = por %p381, %p382
      %p384 = scmp.ne.s32.totalorder %s373, %s376
      %p385 = scmp.eq.s32.totalorder %s38, 3
      %p386 = por %p384, %p385
      %p387 = scmp.ne.s32.totalorder %s376, %s377
      %p388 = scmp.eq.s32.totalorder %s38, 0
      %p389 = por %p387, %p388
      %p390 = scmp.ne.s32.totalorder %s376, %s377
      %p391 = scmp.eq.s32.totalorder %s39, 3
      %p392 = por %p390, %p391
      %p394 = scmp.ne.s32.totalorder %s377, %s393
      %p395 = scmp.eq.s32.totalorder %s39, 0
      %p396 = por %p394, %p395
      %s397 = ssub.s32 %s41, %s48
      %p398 = scmp.eq.s32.totalorder %s397, 0
      %s400 = sadd.s32 %s399, 1
      %s401 = scalar_select %p398, %s399, %s400
      %p404 = pneg %p398
      %p405 = scmp.eq.s32.totalorder %s33, 3
      %p406 = por %p404, %p405
      %p407 = scmp.ne.s32.totalorder %s399, %s402
      %p408 = scmp.eq.s32.totalorder %s33, 0
      %p409 = por %p407, %p408
      %p410 = scmp.ne.s32.totalorder %s399, %s402
      %p411 = scmp.eq.s32.totalorder %s38, 3
      %p412 = por %p410, %p411
      %p413 = scmp.ne.s32.totalorder %s402, %s403
      %p414 = scmp.eq.s32.totalorder %s38, 0
      %p415 = por %p413, %p414
      %p416 = scmp.ne.s32.totalorder %s402, %s403
      %p417 = scmp.eq.s32.totalorder %s39, 3
      %p418 = por %p416, %p417
      %p420 = scmp.ne.s32.totalorder %s403, %s419
      %p421 = scmp.eq.s32.totalorder %s39, 0
      %p422 = por %p420, %p421
      %s423 = ssub.s32 %s41, %s48
      %p424 = scmp.eq.s32.totalorder %s423, 0
      %s426 = sadd.s32 %s425, 1
      %s427 = scalar_select %p424, %s425, %s426
      %p430 = pneg %p424
      %p431 = scmp.eq.s32.totalorder %s33, 3
      %p432 = por %p430, %p431
      %p433 = scmp.ne.s32.totalorder %s425, %s428
      %p434 = scmp.eq.s32.totalorder %s33, 0
      %p435 = por %p433, %p434
      %p436 = scmp.ne.s32.totalorder %s425, %s428
      %p437 = scmp.eq.s32.totalorder %s38, 3
      %p438 = por %p436, %p437
      %p439 = scmp.ne.s32.totalorder %s428, %s429
      %p440 = scmp.eq.s32.totalorder %s38, 0
      %p441 = por %p439, %p440
      %p442 = scmp.ne.s32.totalorder %s428, %s429
      %p443 = scmp.eq.s32.totalorder %s39, 3
      %p444 = por %p442, %p443
      %p446 = scmp.ne.s32.totalorder %s429, %s445
      %p447 = scmp.eq.s32.totalorder %s39, 0
      %p448 = por %p446, %p447
      %s449 = ssub.s32 %s41, %s48
      %p450 = scmp.eq.s32.totalorder %s449, 0
      %s452 = sadd.s32 %s451, 1
      %s453 = scalar_select %p450, %s451, %s452
      %p456 = pneg %p450
      %p457 = scmp.eq.s32.totalorder %s33, 3
      %p458 = por %p456, %p457
      %p459 = scmp.ne.s32.totalorder %s451, %s454
      %p460 = scmp.eq.s32.totalorder %s33, 0
      %p461 = por %p459, %p460
      %p462 = scmp.ne.s32.totalorder %s451, %s454
      %p463 = scmp.eq.s32.totalorder %s38, 3
      %p464 = por %p462, %p463
      %p465 = scmp.ne.s32.totalorder %s454, %s455
      %p466 = scmp.eq.s32.totalorder %s38, 0
      %p467 = por %p465, %p466
      %p468 = scmp.ne.s32.totalorder %s454, %s455
      %p469 = scmp.eq.s32.totalorder %s39, 3
      %p470 = por %p468, %p469
      %p472 = scmp.ne.s32.totalorder %s455, %s471
      %p473 = scmp.eq.s32.totalorder %s39, 0
      %p474 = por %p472, %p473
      %s476 = sadd.s32 %s475, 1
      %p479 = scmp.eq.s32.totalorder %s33, 3
      %p480 = scmp.ne.s32.totalorder %s475, %s477
      %p481 = scmp.eq.s32.totalorder %s33, 0
      %p482 = por %p480, %p481
      %p483 = scmp.ne.s32.totalorder %s475, %s477
      %p484 = scmp.eq.s32.totalorder %s38, 3
      %p485 = por %p483, %p484
      %p486 = scmp.ne.s32.totalorder %s477, %s478
      %p487 = scmp.eq.s32.totalorder %s38, 0
      %p488 = por %p486, %p487
      %p489 = scmp.ne.s32.totalorder %s477, %s478
      %p490 = scmp.eq.s32.totalorder %s39, 3
      %p491 = por %p489, %p490
      %p493 = scmp.ne.s32.totalorder %s478, %s492
      %p494 = scmp.eq.s32.totalorder %s39, 0
      %p495 = por %p493, %p494
      %s497 = sadd.s32 %s496, 1
      %p500 = scmp.eq.s32.totalorder %s33, 3
      %p501 = scmp.ne.s32.totalorder %s496, %s498
      %p502 = scmp.eq.s32.totalorder %s33, 0
      %p503 = por %p501, %p502
      %p504 = scmp.ne.s32.totalorder %s496, %s498
      %p505 = scmp.eq.s32.totalorder %s38, 3
      %p506 = por %p504, %p505
      %p507 = scmp.ne.s32.totalorder %s498, %s499
      %p508 = scmp.eq.s32.totalorder %s38, 0
      %p509 = por %p507, %p508
      %p510 = scmp.ne.s32.totalorder %s498, %s499
      %p511 = scmp.eq.s32.totalorder %s39, 3
      %p512 = por %p510, %p511
      %p514 = scmp.ne.s32.totalorder %s499, %s513
      %p515 = scmp.eq.s32.totalorder %s39, 0
      %p516 = por %p514, %p515
      %s518 = sadd.s32 %s517, 1
      %p521 = scmp.eq.s32.totalorder %s33, 3
      %p522 = scmp.ne.s32.totalorder %s517, %s519
      %p523 = scmp.eq.s32.totalorder %s33, 0
      %p524 = por %p522, %p523
      %p525 = scmp.ne.s32.totalorder %s517, %s519
      %p526 = scmp.eq.s32.totalorder %s38, 3
      %p527 = por %p525, %p526
      %p528 = scmp.ne.s32.totalorder %s519, %s520
      %p529 = scmp.eq.s32.totalorder %s38, 0
      %p530 = por %p528, %p529
      %p531 = scmp.ne.s32.totalorder %s519, %s520
      %p532 = scmp.eq.s32.totalorder %s39, 3
      %p533 = por %p531, %p532
      %p535 = scmp.ne.s32.totalorder %s520, %s534
      %p536 = scmp.eq.s32.totalorder %s39, 0
      %p537 = por %p535, %p536
      %s538 = ssub.s32 %s40, %s52
      %p539 = scmp.eq.s32.totalorder %s538, 0
      %s541 = sadd.s32 %s540, 1
      %s542 = scalar_select %p539, %s540, %s541
      %p545 = pneg %p539
      %p546 = scmp.eq.s32.totalorder %s33, 3
      %p547 = por %p545, %p546
      %p548 = scmp.ne.s32.totalorder %s540, %s543
      %p549 = scmp.eq.s32.totalorder %s33, 0
      %p550 = por %p548, %p549
      %p551 = scmp.ne.s32.totalorder %s540, %s543
      %p552 = scmp.eq.s32.totalorder %s38, 3
      %p553 = por %p551, %p552
      %p554 = scmp.ne.s32.totalorder %s543, %s544
      %p555 = scmp.eq.s32.totalorder %s38, 0
      %p556 = por %p554, %p555
      %p557 = scmp.ne.s32.totalorder %s543, %s544
      %p558 = scmp.eq.s32.totalorder %s39, 3
      %p559 = por %p557, %p558
      %p561 = scmp.ne.s32.totalorder %s544, %s560
      %p562 = scmp.eq.s32.totalorder %s39, 0
      %p563 = por %p561, %p562
      %p564 = scmp.le.s32.totalorder 1, %s33
      %p565 = scmp.lt.s32.totalorder %s33, 5
      %p566 = pnand %p564, %p565
      %p567 = pneg %p566
      // Predicated region
      $region9: #{encode_image.1} parent=5 // pred_check
        _
      $region10: #{encode_image.1} parent=5 // pred_check_branch
        %569 = sbr.rel (%p566) target = $region12
      $region11: #{encode_image.1} parent=5 // pred_region
        %s570 = ssub.s32 %s33, 1
        // Predicated region
        $region13: #{encode_image.1} parent=11 // pred_check
          %p571 = pneg %p92
        $region14: #{encode_image.1} parent=11 // pred_check_branch
          %573 = sbr.rel (%p571) target = $region16
        $region15: #{encode_image.1} parent=11 // pred_region
          %s575 = ssub.s32 3072, 3072
          %576 = vsyncadd [#allocation5], %s575
          %s577 = sshll.u32 [#allocation4], 4
          %s578 = int_to_ptr.vmem [resolvable:$true] %s577
          %583 = dma.hbm_to_vmem [thread:$0]  %s1, 3072, %s578, [#allocation5], 128, 128, 8
        $region16: #{encode_image.1} parent=11 // pred_fallthru
          _
        // Predicated region
        $region17: #{encode_image.1} parent=11 // pred_check
          %p584 = pneg %p113
        $region18: #{encode_image.1} parent=11 // pred_check_branch
          %586 = sbr.rel (%p584) target = $region20
        $region19: #{encode_image.1} parent=11 // pred_region
          %s588 = ssub.s32 768, 768
          %589 = vsyncadd [#allocation8], %s588
          %s590 = sshll.u32 [#allocation7], 4
          %s591 = int_to_ptr.vmem [resolvable:$true] %s590
          %596 = dma.hbm_to_vmem [thread:$0]  %s2, 768, %s591, [#allocation8], 256, 256, 16
        $region20: #{encode_image.1} parent=11 // pred_fallthru
          _
        // Predicated region
        $region21: #{encode_image.1} parent=11 // pred_check
          %p597 = pneg %p134
        $region22: #{encode_image.1} parent=11 // pred_check_branch
          %599 = sbr.rel (%p597) target = $region24
        $region23: #{encode_image.1} parent=11 // pred_region
          %s601 = ssub.s32 32, 32
          %602 = vsyncadd [#allocation8], %s601
          %s604 = sshll.u32 [#allocation9], 4
          %s605 = int_to_ptr.vmem [resolvable:$true] %s604
          %607 = dma.hbm_to_vmem [thread:$0]  %s3, 32, %s605, [#allocation8]
        $region24: #{encode_image.1} parent=11 // pred_fallthru
          _
        // Predicated region
        $region25: #{encode_image.1} parent=11 // pred_check
          %p608 = pneg %p155
        $region26: #{encode_image.1} parent=11 // pred_check_branch
          %610 = sbr.rel (%p608) target = $region28
        $region27: #{encode_image.1} parent=11 // pred_region
          %s612 = ssub.s32 32, 32
          %613 = vsyncadd [#allocation11], %s612
          %s615 = sshll.u32 [#allocation10], 4
          %s616 = int_to_ptr.vmem [resolvable:$true] %s615
          %618 = dma.hbm_to_vmem [thread:$0]  %s4, 32, %s616, [#allocation11]
        $region28: #{encode_image.1} parent=11 // pred_fallthru
          _
        // Predicated region
        $region29: #{encode_image.1} parent=11 // pred_check
          %p619 = pneg %p488
        $region30: #{encode_image.1} parent=11 // pred_check_branch
          %621 = sbr.rel (%p619) target = $region32
        $region31: #{encode_image.1} parent=11 // pred_region
          %s623 = ssub.s32 32, 32
          %624 = vsyncadd [#allocation8], %s623
          %s626 = sshll.u32 [#allocation21], 4
          %s627 = int_to_ptr.vmem [resolvable:$true] %s626
          %629 = dma.hbm_to_vmem [thread:$0]  %s17, 32, %s627, [#allocation8]
        $region32: #{encode_image.1} parent=11 // pred_fallthru
          _
        // Predicated region
        $region33: #{encode_image.1} parent=11 // pred_check
          %p630 = pneg %p509
        $region34: #{encode_image.1} parent=11 // pred_check_branch
          %632 = sbr.rel (%p630) target = $region36
        $region35: #{encode_image.1} parent=11 // pred_region
          %s634 = ssub.s32 32, 32
          %635 = vsyncadd [#allocation11], %s634
          %s637 = sshll.u32 [#allocation22], 4
          %s638 = int_to_ptr.vmem [resolvable:$true] %s637
          %640 = dma.hbm_to_vmem [thread:$0]  %s18, 32, %s638, [#allocation11]
        $region36: #{encode_image.1} parent=11 // pred_fallthru
          _
        // Predicated region
        $region37: #{encode_image.1} parent=11 // pred_check
          %p641 = pneg %p530
        $region38: #{encode_image.1} parent=11 // pred_check_branch
          %643 = sbr.rel (%p641) target = $region40
        $region39: #{encode_image.1} parent=11 // pred_region
          %s645 = ssub.s32 2048, 2048
          %646 = vsyncadd [#allocation24], %s645
          %s647 = sshll.u32 [#allocation23], 4
          %s648 = int_to_ptr.vmem [resolvable:$true] %s647
          %653 = dma.hbm_to_vmem [thread:$0]  %s19, 2048, %s648, [#allocation24], 64, 64, 4
        $region40: #{encode_image.1} parent=11 // pred_fallthru
          _
      $region12: #{encode_image.1} parent=5 // pred_fallthru
        _
      %p654 = scmp.lt.s32.totalorder %s33, 4
      // Predicated region
      $region41: #{encode_image.1} parent=5 // pred_check
        %p655 = pneg %p654
      $region42: #{encode_image.1} parent=5 // pred_check_branch
        %657 = sbr.rel (%p655) target = $region44
      $region43: #{encode_image.1} parent=5 // pred_region
        // Predicated region
        $region45: #{encode_image.1} parent=43 // pred_check
          %p658 = pneg %p65
        $region46: #{encode_image.1} parent=43 // pred_check_branch
          %660 = sbr.rel (%p658) target = $region48
        $region47: #{encode_image.1} parent=43 // pred_region
          %p661 = scmp.lt.s32.totalorder %s40, 1
          %s662 = scalar_select %p661, %s40, 1
          %s663 = smul.addr %s662, 6
          %s664 = smul.addr %s663, 4
          %s665 = scalar_lea.vmem %s0, %s664
        $region48: #{encode_image.1} parent=43 // pred_fallthru
          _
        // Predicated region
        $region49: #{encode_image.1} parent=43 // pred_check
          %p666 = pneg %p175
        $region50: #{encode_image.1} parent=43 // pred_check_branch
          %668 = sbr.rel (%p666) target = $region52
        $region51: #{encode_image.1} parent=43 // pred_region
          %s669 = sand.u32 %s33, 1
          %s670 = scalar_lea.sflag [#allocation5], %s669
          %s671 = sand.u32 %s165, 1
          %s672 = smul.addr %s671, 2
          %s673 = scalar_lea.vmem [#allocation12], %s672
          %s675 = ssub.s32 32, 32
          %676 = vsyncadd %s670, %s675
          %s677 = smul.addr %s41, 2
          %s678 = smul.addr %s677, 16
          %s679 = scalar_lea.hbm %s5, %s678
          %s681 = sshll.u32 %s673, 4
          %s682 = int_to_ptr.vmem [resolvable:$true] %s681
          %684 = dma.hbm_to_vmem [thread:$0]  %s679, 32, %s682, %s670
        $region52: #{encode_image.1} parent=43 // pred_fallthru
          _
        // Predicated region
        $region53: #{encode_image.1} parent=43 // pred_check
          %p685 = pneg %p201
        $region54: #{encode_image.1} parent=43 // pred_check_branch
          %687 = sbr.rel (%p685) target = $region56
        $region55: #{encode_image.1} parent=43 // pred_region
          %s688 = sand.u32 %s33, 1
          %s689 = scalar_lea.sflag [#allocation5], %s688
          %s690 = sand.u32 %s191, 1
          %s691 = smul.addr %s690, 2
          %s692 = scalar_lea.vmem [#allocation13], %s691
          %s694 = ssub.s32 32, 32
          %695 = vsyncadd %s689, %s694
          %s696 = smul.addr %s41, 2
          %s697 = smul.addr %s696, 16
          %s698 = scalar_lea.hbm %s6, %s697
          %s700 = sshll.u32 %s692, 4
          %s701 = int_to_ptr.vmem [resolvable:$true] %s700
          %703 = dma.hbm_to_vmem [thread:$0]  %s698, 32, %s701, %s689
        $region56: #{encode_image.1} parent=43 // pred_fallthru
          _
        // Predicated region
        $region57: #{encode_image.1} parent=43 // pred_check
          %p704 = pneg %p227
        $region58: #{encode_image.1} parent=43 // pred_check_branch
          %706 = sbr.rel (%p704) target = $region60
        $region59: #{encode_image.1} parent=43 // pred_region
          %p707 = scmp.lt.s32.totalorder %s41, 1
          %s708 = scalar_select %p707, %s41, 1
          %s709 = smul.addr %s708, 192
          %s710 = smul.addr %s709, 4
          %s711 = scalar_lea.vmem %s7, %s710
        $region60: #{encode_image.1} parent=43 // pred_fallthru
          _
        // Predicated region
        $region61: #{encode_image.1} parent=43 // pred_check
          %p712 = pneg %p253
        $region62: #{encode_image.1} parent=43 // pred_check_branch
          %714 = sbr.rel (%p712) target = $region64
        $region63: #{encode_image.1} parent=43 // pred_region
          %s715 = sand.u32 %s33, 1
          %s716 = scalar_lea.sflag [#allocation5], %s715
          %s717 = sand.u32 %s243, 1
          %s718 = smul.addr %s717, 6
          %s719 = scalar_lea.vmem [#allocation14], %s718
          %s721 = ssub.s32 96, 96
          %722 = vsyncadd %s716, %s721
          %s723 = smul.addr %s41, 6
          %s724 = smul.addr %s723, 16
          %s725 = scalar_lea.hbm %s8, %s724
          %s727 = sshll.u32 %s719, 4
          %s728 = int_to_ptr.vmem [resolvable:$true] %s727
          %730 = dma.hbm_to_vmem [thread:$0]  %s725, 96, %s728, %s716
        $region64: #{encode_image.1} parent=43 // pred_fallthru
          _
        // Predicated region
        $region65: #{encode_image.1} parent=43 // pred_check
          %p731 = pneg %p279
        $region66: #{encode_image.1} parent=43 // pred_check_branch
          %733 = sbr.rel (%p731) target = $region68
        $region67: #{encode_image.1} parent=43 // pred_region
          %p734 = scmp.lt.s32.totalorder %s41, 1
          %s735 = scalar_select %p734, %s41, 1
          %s736 = smul.addr %s735, 64
          %s737 = smul.addr %s736, 4
          %s738 = scalar_lea.vmem %s9, %s737
        $region68: #{encode_image.1} parent=43 // pred_fallthru
          _
        // Predicated region
        $region69: #{encode_image.1} parent=43 // pred_check
          %p739 = pneg %p305
        $region70: #{encode_image.1} parent=43 // pred_check_branch
          %741 = sbr.rel (%p739) target = $region72
        $region71: #{encode_image.1} parent=43 // pred_region
          %s742 = sand.u32 %s33, 1
          %s743 = scalar_lea.sflag [#allocation5], %s742
          %s744 = sand.u32 %s295, 1
          %s745 = smul.addr %s744, 2
          %s746 = scalar_lea.vmem [#allocation15], %s745
          %s748 = ssub.s32 32, 32
          %749 = vsyncadd %s743, %s748
          %s750 = smul.addr %s41, 2
          %s751 = smul.addr %s750, 16
          %s752 = scalar_lea.hbm %s10, %s751
          %s754 = sshll.u32 %s746, 4
          %s755 = int_to_ptr.vmem [resolvable:$true] %s754
          %757 = dma.hbm_to_vmem [thread:$0]  %s752, 32, %s755, %s743
        $region72: #{encode_image.1} parent=43 // pred_fallthru
          _
        // Predicated region
        $region73: #{encode_image.1} parent=43 // pred_check
          %p758 = pneg %p331
        $region74: #{encode_image.1} parent=43 // pred_check_branch
          %760 = sbr.rel (%p758) target = $region76
        $region75: #{encode_image.1} parent=43 // pred_region
          %s761 = sand.u32 %s33, 1
          %s762 = scalar_lea.sflag [#allocation5], %s761
          %s763 = sand.u32 %s321, 1
          %s764 = smul.addr %s763, 2
          %s765 = scalar_lea.vmem [#allocation16], %s764
          %s767 = ssub.s32 32, 32
          %768 = vsyncadd %s762, %s767
          %s769 = smul.addr %s41, 2
          %s770 = smul.addr %s769, 16
          %s771 = scalar_lea.hbm %s11, %s770
          %s773 = sshll.u32 %s765, 4
          %s774 = int_to_ptr.vmem [resolvable:$true] %s773
          %776 = dma.hbm_to_vmem [thread:$0]  %s771, 32, %s774, %s762
        $region76: #{encode_image.1} parent=43 // pred_fallthru
          _
        // Predicated region
        $region77: #{encode_image.1} parent=43 // pred_check
          %p777 = pneg %p357
        $region78: #{encode_image.1} parent=43 // pred_check_branch
          %779 = sbr.rel (%p777) target = $region80
        $region79: #{encode_image.1} parent=43 // pred_region
          %s780 = sand.u32 %s33, 1
          %s781 = scalar_lea.sflag [#allocation5], %s780
          %s782 = sand.u32 %s347, 1
          %s783 = smul.addr %s782, 2
          %s784 = scalar_lea.vmem [#allocation17], %s783
          %s786 = ssub.s32 32, 32
          %787 = vsyncadd %s781, %s786
          %s788 = smul.addr %s41, 2
          %s789 = smul.addr %s788, 16
          %s790 = scalar_lea.hbm %s12, %s789
          %s792 = sshll.u32 %s784, 4
          %s793 = int_to_ptr.vmem [resolvable:$true] %s792
          %795 = dma.hbm_to_vmem [thread:$0]  %s790, 32, %s793, %s781
        $region80: #{encode_image.1} parent=43 // pred_fallthru
          _
        // Predicated region
        $region81: #{encode_image.1} parent=43 // pred_check
          %p796 = pneg %p383
        $region82: #{encode_image.1} parent=43 // pred_check_branch
          %798 = sbr.rel (%p796) target = $region84
        $region83: #{encode_image.1} parent=43 // pred_region
          %s799 = sand.u32 %s33, 1
          %s800 = scalar_lea.sflag [#allocation5], %s799
          %s801 = sand.u32 %s373, 1
          %s802 = smul.addr %s801, 1024
          %s803 = scalar_lea.vmem [#allocation18], %s802
          %s805 = ssub.s32 16384, 16384
          %806 = vsyncadd %s800, %s805
          %s807 = smul.addr %s41, 256
          %s808 = smul.addr %s807, 64
          %s809 = scalar_lea.hbm %s13, %s808
          %s810 = sshll.u32 %s803, 4
          %s811 = int_to_ptr.vmem [resolvable:$true] %s810
          %816 = dma.hbm_to_vmem [thread:$0]  %s809, 16384, %s811, %s800, 512, 512, 32
        $region84: #{encode_image.1} parent=43 // pred_fallthru
          _
        // Predicated region
        $region85: #{encode_image.1} parent=43 // pred_check
          %p817 = pneg %p409
        $region86: #{encode_image.1} parent=43 // pred_check_branch
          %819 = sbr.rel (%p817) target = $region88
        $region87: #{encode_image.1} parent=43 // pred_region
          %p820 = scmp.lt.s32.totalorder %s41, 1
          %s821 = scalar_select %p820, %s41, 1
          %s822 = smul.addr %s821, 8
          %s823 = scalar_lea.vmem %s14, %s822
        $region88: #{encode_image.1} parent=43 // pred_fallthru
          _
        // Predicated region
        $region89: #{encode_image.1} parent=43 // pred_check
          %p824 = pneg %p435
        $region90: #{encode_image.1} parent=43 // pred_check_branch
          %826 = sbr.rel (%p824) target = $region92
        $region91: #{encode_image.1} parent=43 // pred_region
          %s827 = sand.u32 %s33, 1
          %s828 = scalar_lea.sflag [#allocation5], %s827
          %s829 = sand.u32 %s425, 1
          %s830 = smul.addr %s829, 1024
          %s831 = scalar_lea.vmem [#allocation19], %s830
          %s833 = ssub.s32 16384, 16384
          %834 = vsyncadd %s828, %s833
          %s835 = smul.addr %s41, 256
          %s836 = smul.addr %s835, 64
          %s837 = scalar_lea.hbm %s15, %s836
          %s838 = sshll.u32 %s831, 4
          %s839 = int_to_ptr.vmem [resolvable:$true] %s838
          %844 = dma.hbm_to_vmem [thread:$0]  %s837, 16384, %s839, %s828, 128, 128, 8
        $region92: #{encode_image.1} parent=43 // pred_fallthru
          _
        // Predicated region
        $region93: #{encode_image.1} parent=43 // pred_check
          %p845 = pneg %p461
        $region94: #{encode_image.1} parent=43 // pred_check_branch
          %847 = sbr.rel (%p845) target = $region96
        $region95: #{encode_image.1} parent=43 // pred_region
          %s848 = sand.u32 %s33, 1
          %s849 = scalar_lea.sflag [#allocation5], %s848
          %s850 = sand.u32 %s451, 1
          %s851 = smul.addr %s850, 2
          %s852 = scalar_lea.vmem [#allocation20], %s851
          %s854 = ssub.s32 32, 32
          %855 = vsyncadd %s849, %s854
          %s856 = smul.addr %s41, 2
          %s857 = smul.addr %s856, 16
          %s858 = scalar_lea.hbm %s16, %s857
          %s860 = sshll.u32 %s852, 4
          %s861 = int_to_ptr.vmem [resolvable:$true] %s860
          %863 = dma.hbm_to_vmem [thread:$0]  %s858, 32, %s861, %s849
        $region96: #{encode_image.1} parent=43 // pred_fallthru
          _
      $region44: #{encode_image.1} parent=5 // pred_fallthru
        _
      %p864 = scmp.le.s32.totalorder 1, %s33
      %p865 = scmp.lt.s32.totalorder %s33, 5
      %p866 = pnand %p864, %p865
      %p867 = pneg %p866
      // Predicated region
      $region97: #{encode_image.1} parent=5 // pred_check
        _
      $region98: #{encode_image.1} parent=5 // pred_check_branch
        %869 = sbr.rel (%p866) target = $region100
      $region99: #{encode_image.1} parent=5 // pred_region
        %s870 = ssub.s32 %s33, 1
        // Predicated region
        $region101: #{encode_image.1} parent=99 // pred_check
          %p871 = pneg %p92
        $region102: #{encode_image.1} parent=99 // pred_check_branch
          %873 = sbr.rel (%p871) target = $region104
        $region103: #{encode_image.1} parent=99 // pred_region
          %874 = dma.done [#allocation5], 3072
        $region104: #{encode_image.1} parent=99 // pred_fallthru
          _
        // Predicated region
        $region105: #{encode_image.1} parent=99 // pred_check
          %p875 = pneg %p113
        $region106: #{encode_image.1} parent=99 // pred_check_branch
          %877 = sbr.rel (%p875) target = $region108
        $region107: #{encode_image.1} parent=99 // pred_region
          %878 = dma.done [#allocation8], 768
        $region108: #{encode_image.1} parent=99 // pred_fallthru
          _
        // Predicated region
        $region109: #{encode_image.1} parent=99 // pred_check
          %p879 = pneg %p134
        $region110: #{encode_image.1} parent=99 // pred_check_branch
          %881 = sbr.rel (%p879) target = $region112
        $region111: #{encode_image.1} parent=99 // pred_region
          %882 = dma.done [#allocation8], 32
        $region112: #{encode_image.1} parent=99 // pred_fallthru
          _
        // Predicated region
        $region113: #{encode_image.1} parent=99 // pred_check
          %p883 = pneg %p155
        $region114: #{encode_image.1} parent=99 // pred_check_branch
          %885 = sbr.rel (%p883) target = $region116
        $region115: #{encode_image.1} parent=99 // pred_region
          %886 = dma.done [#allocation11], 32
        $region116: #{encode_image.1} parent=99 // pred_fallthru
          _
        %s887 = sand.u32 %s38, 1
        %s888 = scalar_lea.sflag [#allocation5], %s887
        %s889 = sand.u32 %s168, 1
        %s890 = smul.addr %s889, 2
        %s891 = scalar_lea.vmem [#allocation12], %s890
        // Predicated region
        $region117: #{encode_image.1} parent=99 // pred_check
          %p892 = pneg %p181
        $region118: #{encode_image.1} parent=99 // pred_check_branch
          %894 = sbr.rel (%p892) target = $region120
        $region119: #{encode_image.1} parent=99 // pred_region
          %895 = dma.done %s888, 32
        $region120: #{encode_image.1} parent=99 // pred_fallthru
          _
        %s896 = sand.u32 %s38, 1
        %s897 = scalar_lea.sflag [#allocation5], %s896
        %s898 = sand.u32 %s194, 1
        %s899 = smul.addr %s898, 2
        %s900 = scalar_lea.vmem [#allocation13], %s899
        // Predicated region
        $region121: #{encode_image.1} parent=99 // pred_check
          %p901 = pneg %p207
        $region122: #{encode_image.1} parent=99 // pred_check_branch
          %903 = sbr.rel (%p901) target = $region124
        $region123: #{encode_image.1} parent=99 // pred_region
          %904 = dma.done %s897, 32
        $region124: #{encode_image.1} parent=99 // pred_fallthru
          _
        %s905 = sand.u32 %s38, 1
        %s906 = scalar_lea.sflag [#allocation5], %s905
        %s907 = sand.u32 %s246, 1
        %s908 = smul.addr %s907, 6
        %s909 = scalar_lea.vmem [#allocation14], %s908
        // Predicated region
        $region125: #{encode_image.1} parent=99 // pred_check
          %p910 = pneg %p259
        $region126: #{encode_image.1} parent=99 // pred_check_branch
          %912 = sbr.rel (%p910) target = $region128
        $region127: #{encode_image.1} parent=99 // pred_region
          %913 = dma.done %s906, 96
        $region128: #{encode_image.1} parent=99 // pred_fallthru
          _
        %s914 = sand.u32 %s38, 1
        %s915 = scalar_lea.sflag [#allocation5], %s914
        %s916 = sand.u32 %s298, 1
        %s917 = smul.addr %s916, 2
        %s918 = scalar_lea.vmem [#allocation15], %s917
        // Predicated region
        $region129: #{encode_image.1} parent=99 // pred_check
          %p919 = pneg %p311
        $region130: #{encode_image.1} parent=99 // pred_check_branch
          %921 = sbr.rel (%p919) target = $region132
        $region131: #{encode_image.1} parent=99 // pred_region
          %922 = dma.done %s915, 32
        $region132: #{encode_image.1} parent=99 // pred_fallthru
          _
        %s923 = sand.u32 %s38, 1
        %s924 = scalar_lea.sflag [#allocation5], %s923
        %s925 = sand.u32 %s324, 1
        %s926 = smul.addr %s925, 2
        %s927 = scalar_lea.vmem [#allocation16], %s926
        // Predicated region
        $region133: #{encode_image.1} parent=99 // pred_check
          %p928 = pneg %p337
        $region134: #{encode_image.1} parent=99 // pred_check_branch
          %930 = sbr.rel (%p928) target = $region136
        $region135: #{encode_image.1} parent=99 // pred_region
          %931 = dma.done %s924, 32
        $region136: #{encode_image.1} parent=99 // pred_fallthru
          _
        %s932 = sand.u32 %s38, 1
        %s933 = scalar_lea.sflag [#allocation5], %s932
        %s934 = sand.u32 %s350, 1
        %s935 = smul.addr %s934, 2
        %s936 = scalar_lea.vmem [#allocation17], %s935
        // Predicated region
        $region137: #{encode_image.1} parent=99 // pred_check
          %p937 = pneg %p363
        $region138: #{encode_image.1} parent=99 // pred_check_branch
          %939 = sbr.rel (%p937) target = $region140
        $region139: #{encode_image.1} parent=99 // pred_region
          %940 = dma.done %s933, 32
        $region140: #{encode_image.1} parent=99 // pred_fallthru
          _
        %s941 = sand.u32 %s38, 1
        %s942 = scalar_lea.sflag [#allocation5], %s941
        %s943 = sand.u32 %s376, 1
        %s944 = smul.addr %s943, 1024
        %s945 = scalar_lea.vmem [#allocation18], %s944
        // Predicated region
        $region141: #{encode_image.1} parent=99 // pred_check
          %p946 = pneg %p389
        $region142: #{encode_image.1} parent=99 // pred_check_branch
          %948 = sbr.rel (%p946) target = $region144
        $region143: #{encode_image.1} parent=99 // pred_region
          %949 = dma.done %s942, 16384
        $region144: #{encode_image.1} parent=99 // pred_fallthru
          _
        %s950 = sand.u32 %s38, 1
        %s951 = scalar_lea.sflag [#allocation5], %s950
        %s952 = sand.u32 %s428, 1
        %s953 = smul.addr %s952, 1024
        %s954 = scalar_lea.vmem [#allocation19], %s953
        // Predicated region
        $region145: #{encode_image.1} parent=99 // pred_check
          %p955 = pneg %p441
        $region146: #{encode_image.1} parent=99 // pred_check_branch
          %957 = sbr.rel (%p955) target = $region148
        $region147: #{encode_image.1} parent=99 // pred_region
          %958 = dma.done %s951, 16384
        $region148: #{encode_image.1} parent=99 // pred_fallthru
          _
        %s959 = sand.u32 %s38, 1
        %s960 = scalar_lea.sflag [#allocation5], %s959
        %s961 = sand.u32 %s454, 1
        %s962 = smul.addr %s961, 2
        %s963 = scalar_lea.vmem [#allocation20], %s962
        // Predicated region
        $region149: #{encode_image.1} parent=99 // pred_check
          %p964 = pneg %p467
        $region150: #{encode_image.1} parent=99 // pred_check_branch
          %966 = sbr.rel (%p964) target = $region152
        $region151: #{encode_image.1} parent=99 // pred_region
          %967 = dma.done %s960, 32
        $region152: #{encode_image.1} parent=99 // pred_fallthru
          _
        // Predicated region
        $region153: #{encode_image.1} parent=99 // pred_check
          %p968 = pneg %p488
        $region154: #{encode_image.1} parent=99 // pred_check_branch
          %970 = sbr.rel (%p968) target = $region156
        $region155: #{encode_image.1} parent=99 // pred_region
          %971 = dma.done [#allocation8], 32
        $region156: #{encode_image.1} parent=99 // pred_fallthru
          _
        // Predicated region
        $region157: #{encode_image.1} parent=99 // pred_check
          %p972 = pneg %p509
        $region158: #{encode_image.1} parent=99 // pred_check_branch
          %974 = sbr.rel (%p972) target = $region160
        $region159: #{encode_image.1} parent=99 // pred_region
          %975 = dma.done [#allocation11], 32
        $region160: #{encode_image.1} parent=99 // pred_fallthru
          _
        // Predicated region
        $region161: #{encode_image.1} parent=99 // pred_check
          %p976 = pneg %p530
        $region162: #{encode_image.1} parent=99 // pred_check_branch
          %978 = sbr.rel (%p976) target = $region164
        $region163: #{encode_image.1} parent=99 // pred_region
          %979 = dma.done [#allocation24], 2048
        $region164: #{encode_image.1} parent=99 // pred_fallthru
          _
        %p980 = scmp.lt.s32.totalorder %s42, 1
        %s981 = scalar_select %p980, %s42, 1
        %s982 = smul.addr %s981, 6
        %s983 = smul.addr %s982, 4
        %s984 = scalar_lea.vmem %s0, %s983
        %p985 = pneg %p71
        %p986 = pneg %p68
        %p987 = pneg %p92
        %p988 = pneg %p89
        %p989 = pneg %p113
        %p990 = pneg %p110
        %p991 = pneg %p134
        %p992 = pneg %p131
        %p993 = pneg %p155
        %p994 = pneg %p152
        %s995 = sand.u32 %s38, 1
        %s996 = scalar_lea.sflag [#allocation5], %s995
        %s997 = sand.u32 %s168, 1
        %s998 = smul.addr %s997, 2
        %s999 = scalar_lea.vmem [#allocation12], %s998
        %p1000 = pneg %p181
        %p1001 = pneg %p178
        %s1002 = sand.u32 %s38, 1
        %s1003 = scalar_lea.sflag [#allocation5], %s1002
        %s1004 = sand.u32 %s194, 1
        %s1005 = smul.addr %s1004, 2
        %s1006 = scalar_lea.vmem [#allocation13], %s1005
        %p1007 = pneg %p207
        %p1008 = pneg %p204
        %p1009 = scmp.lt.s32.totalorder %s43, 1
        %s1010 = scalar_select %p1009, %s43, 1
        %s1011 = smul.addr %s1010, 192
        %s1012 = smul.addr %s1011, 4
        %s1013 = scalar_lea.vmem %s7, %s1012
        %p1014 = pneg %p233
        %p1015 = pneg %p230
        %s1016 = sand.u32 %s38, 1
        %s1017 = scalar_lea.sflag [#allocation5], %s1016
        %s1018 = sand.u32 %s246, 1
        %s1019 = smul.addr %s1018, 6
        %s1020 = scalar_lea.vmem [#allocation14], %s1019
        %p1021 = pneg %p259
        %p1022 = pneg %p256
        %p1023 = scmp.lt.s32.totalorder %s43, 1
        %s1024 = scalar_select %p1023, %s43, 1
        %s1025 = smul.addr %s1024, 64
        %s1026 = smul.addr %s1025, 4
        %s1027 = scalar_lea.vmem %s9, %s1026
        %p1028 = pneg %p285
        %p1029 = pneg %p282
        %s1030 = sand.u32 %s38, 1
        %s1031 = scalar_lea.sflag [#allocation5], %s1030
        %s1032 = sand.u32 %s298, 1
        %s1033 = smul.addr %s1032, 2
        %s1034 = scalar_lea.vmem [#allocation15], %s1033
        %p1035 = pneg %p311
        %p1036 = pneg %p308
        %s1037 = sand.u32 %s38, 1
        %s1038 = scalar_lea.sflag [#allocation5], %s1037
        %s1039 = sand.u32 %s324, 1
        %s1040 = smul.addr %s1039, 2
        %s1041 = scalar_lea.vmem [#allocation16], %s1040
        %p1042 = pneg %p337
        %p1043 = pneg %p334
        %s1044 = sand.u32 %s38, 1
        %s1045 = scalar_lea.sflag [#allocation5], %s1044
        %s1046 = sand.u32 %s350, 1
        %s1047 = smul.addr %s1046, 2
        %s1048 = scalar_lea.vmem [#allocation17], %s1047
        %p1049 = pneg %p363
        %p1050 = pneg %p360
        %s1051 = sand.u32 %s38, 1
        %s1052 = scalar_lea.sflag [#allocation5], %s1051
        %s1053 = sand.u32 %s376, 1
        %s1054 = smul.addr %s1053, 1024
        %s1055 = scalar_lea.vmem [#allocation18], %s1054
        %p1056 = pneg %p389
        %p1057 = pneg %p386
        %p1058 = scmp.lt.s32.totalorder %s43, 1
        %s1059 = scalar_select %p1058, %s43, 1
        %s1060 = smul.addr %s1059, 8
        %s1061 = scalar_lea.vmem %s14, %s1060
        %p1062 = pneg %p415
        %p1063 = pneg %p412
        %s1064 = sand.u32 %s38, 1
        %s1065 = scalar_lea.sflag [#allocation5], %s1064
        %s1066 = sand.u32 %s428, 1
        %s1067 = smul.addr %s1066, 1024
        %s1068 = scalar_lea.vmem [#allocation19], %s1067
        %p1069 = pneg %p441
        %p1070 = pneg %p438
        %s1071 = sand.u32 %s38, 1
        %s1072 = scalar_lea.sflag [#allocation5], %s1071
        %s1073 = sand.u32 %s454, 1
        %s1074 = smul.addr %s1073, 2
        %s1075 = scalar_lea.vmem [#allocation20], %s1074
        %p1076 = pneg %p467
        %p1077 = pneg %p464
        %p1078 = pneg %p488
        %p1079 = pneg %p485
        %p1080 = pneg %p509
        %p1081 = pneg %p506
        %p1082 = pneg %p530
        %p1083 = pneg %p527
        %p1084 = pneg %p556
        %p1085 = pneg %p553
        %s1086 = sand.u32 %s543, 1
        %s1087 = scalar_lea.sflag [#allocation6], %s1086
        %s1088 = sand.u32 %s543, 1
        %s1089 = scalar_lea.vmem [#allocation25], %s1088
        %p1090 = scmp.lt.s32.totalorder %s42, 1
        %s1091 = scalar_select %p1090, %s42, 1
        %s1092 = smul.addr %s1091, 6
        %s1093 = smul.addr %s1092, 4
        %s1094 = scalar_lea.vmem %s0, %s1093
        %p1095 = scmp.lt.s32.totalorder %s43, 1
        %s1096 = scalar_select %p1095, %s43, 1
        %s1097 = smul.addr %s1096, 192
        %s1098 = smul.addr %s1097, 4
        %s1099 = scalar_lea.vmem %s7, %s1098
        %p1100 = scmp.lt.s32.totalorder %s43, 1
        %s1101 = scalar_select %p1100, %s43, 1
        %s1102 = smul.addr %s1101, 64
        %s1103 = smul.addr %s1102, 4
        %s1104 = scalar_lea.vmem %s9, %s1103
        %p1105 = scmp.lt.s32.totalorder %s43, 1
        %s1106 = scalar_select %p1105, %s43, 1
        %s1107 = smul.addr %s1106, 8
        %s1108 = scalar_lea.vmem %s14, %s1107
        %p1110 = scmp.eq.s32.totalorder %s43, 0
        // Predicated region
        $region165: #{encode_image.1} parent=99 // pred_check
          %p1111 = pneg %p1110
        $region166: #{encode_image.1} parent=99 // pred_check_branch
          %1113 = sbr.rel (%p1111) target = $region168
        $region167: #{encode_image.1} parent=99 // pred_region
          %v1114 = vld [vmem:[%s1094] sm:$0xff]
          %v1115 = vld [vmem:[%s1094 + $0x8] sm:$0xff]
          %v1116 = vld [vmem:[%s1094 + $0x10] sm:$0x11]
          %v1117 = vld [vmem:[#allocation4] sm:$0xff]
          %v1118 = vld [vmem:[#allocation4 + $0x8] sm:$0xff]
          %v1119 = vld [vmem:[#allocation4 + $0x10] sm:$0xff]
          %v1120 = vld [vmem:[#allocation4 + $0x18] sm:$0xff]
          %v1121 = vld [vmem:[#allocation4 + $0x20] sm:$0xff]
          %v1122 = vld [vmem:[#allocation4 + $0x28] sm:$0xff]
          %v1123 = vld [vmem:[#allocation4 + $0x30] sm:$0xff]
          %v1124 = vld [vmem:[#allocation4 + $0x38] sm:$0xff]
          %v1125 = vld [vmem:[#allocation4 + $0x40] sm:$0xff]
          %v1126 = vld [vmem:[#allocation4 + $0x48] sm:$0xff]
          %v1127 = vld [vmem:[#allocation4 + $0x50] sm:$0xff]
          %v1128 = vld [vmem:[#allocation4 + $0x58] sm:$0xff]
          %v1129 = vld [vmem:[#allocation4 + $0x60] sm:$0xff]
          %v1130 = vld [vmem:[#allocation4 + $0x68] sm:$0xff]
          %v1131 = vld [vmem:[#allocation4 + $0x70] sm:$0xff]
          %v1132 = vld [vmem:[#allocation4 + $0x78] sm:$0xff]
          %v1133 = vld [vmem:[#allocation4 + $0x80] sm:$0xff]
          %v1134 = vld [vmem:[#allocation4 + $0x88] sm:$0xff]
          %v1135 = vld [vmem:[#allocation4 + $0x90] sm:$0xff]
          %v1136 = vld [vmem:[#allocation4 + $0x98] sm:$0xff]
          %v1137 = vld [vmem:[#allocation4 + $0xa0] sm:$0xff]
          %v1138 = vld [vmem:[#allocation4 + $0xa8] sm:$0xff]
          %v1139 = vld [vmem:[#allocation4 + $0xb0] sm:$0xff]
          %v1140 = vld [vmem:[#allocation4 + $0xb8] sm:$0xff]
          %v1141 = vld [vmem:[#allocation7] sm:$0xff]
          %v1142 = vld [vmem:[#allocation7 + $0x8] sm:$0xff]
          %v1143 = vld [vmem:[#allocation7 + $0x10] sm:$0xff]
          %v1144 = vld [vmem:[#allocation7 + $0x18] sm:$0xff]
          %v1145 = vld [vmem:[#allocation7 + $0x20] sm:$0x1]
          %v1146 = vld [vmem:[#allocation7 + $0x28] sm:$0x1]
          %v1150 = vunpack.c.l.b16 %v1114
          %v1151 = vunpack.c.h.b16 %v1114
          %v1152 = vunpack.c.l.b16 %v1115
          %v1153 = vunpack.c.h.b16 %v1115
          %v1154 = vunpack.c.l.b16 %v1116
          %v1155 = vunpack.c.h.b16 %v1116
          %v1156 = vpack.c.b16 %v1152, %v1150
          %v1157 = vpack.c.b16 %v1153, %v1151
          %v1158 = vpack.c.b16 %v1154, %v1154
          %v1159 = vpack.c.b16 %v1155, %v1155
          %v1186 = vunpack.c.l.b16 %v1117
          %v1187 = vunpack.c.h.b16 %v1117
          %v1188 = vunpack.c.l.b16 %v1118
          %v1189 = vunpack.c.h.b16 %v1118
          %v1190 = vunpack.c.l.b16 %v1119
          %v1191 = vunpack.c.h.b16 %v1119
          %v1192 = vunpack.c.l.b16 %v1120
          %v1193 = vunpack.c.h.b16 %v1120
          %v1194 = vunpack.c.l.b16 %v1121
          %v1195 = vunpack.c.h.b16 %v1121
          %v1196 = vunpack.c.l.b16 %v1122
          %v1197 = vunpack.c.h.b16 %v1122
          %v1198 = vunpack.c.l.b16 %v1123
          %v1199 = vunpack.c.h.b16 %v1123
          %v1200 = vunpack.c.l.b16 %v1124
          %v1201 = vunpack.c.h.b16 %v1124
          %v1202 = vunpack.c.l.b16 %v1125
          %v1203 = vunpack.c.h.b16 %v1125
          %v1204 = vunpack.c.l.b16 %v1126
          %v1205 = vunpack.c.h.b16 %v1126
          %v1206 = vunpack.c.l.b16 %v1127
          %v1207 = vunpack.c.h.b16 %v1127
          %v1208 = vunpack.c.l.b16 %v1128
          %v1209 = vunpack.c.h.b16 %v1128
          %v1210 = vunpack.c.l.b16 %v1129
          %v1211 = vunpack.c.h.b16 %v1129
          %v1212 = vunpack.c.l.b16 %v1130
          %v1213 = vunpack.c.h.b16 %v1130
          %v1214 = vunpack.c.l.b16 %v1131
          %v1215 = vunpack.c.h.b16 %v1131
          %v1216 = vunpack.c.l.b16 %v1132
          %v1217 = vunpack.c.h.b16 %v1132
          %v1218 = vunpack.c.l.b16 %v1133
          %v1219 = vunpack.c.h.b16 %v1133
          %v1220 = vunpack.c.l.b16 %v1134
          %v1221 = vunpack.c.h.b16 %v1134
          %v1222 = vunpack.c.l.b16 %v1135
          %v1223 = vunpack.c.h.b16 %v1135
          %v1224 = vunpack.c.l.b16 %v1136
          %v1225 = vunpack.c.h.b16 %v1136
          %v1226 = vunpack.c.l.b16 %v1137
          %v1227 = vunpack.c.h.b16 %v1137
          %v1228 = vunpack.c.l.b16 %v1138
          %v1229 = vunpack.c.h.b16 %v1138
          %v1230 = vunpack.c.l.b16 %v1139
          %v1231 = vunpack.c.h.b16 %v1139
          %v1232 = vunpack.c.l.b16 %v1140
          %v1233 = vunpack.c.h.b16 %v1140
          %v1234 = vpack.c.b16 %v1188, %v1186
          %v1235 = vpack.c.b16 %v1189, %v1187
          %v1236 = vpack.c.b16 %v1192, %v1190
          %v1237 = vpack.c.b16 %v1193, %v1191
          %v1238 = vpack.c.b16 %v1196, %v1194
          %v1239 = vpack.c.b16 %v1197, %v1195
          %v1240 = vpack.c.b16 %v1200, %v1198
          %v1241 = vpack.c.b16 %v1201, %v1199
          %v1242 = vpack.c.b16 %v1204, %v1202
          %v1243 = vpack.c.b16 %v1205, %v1203
          %v1244 = vpack.c.b16 %v1208, %v1206
          %v1245 = vpack.c.b16 %v1209, %v1207
          %v1246 = vpack.c.b16 %v1212, %v1210
          %v1247 = vpack.c.b16 %v1213, %v1211
          %v1248 = vpack.c.b16 %v1216, %v1214
          %v1249 = vpack.c.b16 %v1217, %v1215
          %v1250 = vpack.c.b16 %v1220, %v1218
          %v1251 = vpack.c.b16 %v1221, %v1219
          %v1252 = vpack.c.b16 %v1224, %v1222
          %v1253 = vpack.c.b16 %v1225, %v1223
          %v1254 = vpack.c.b16 %v1228, %v1226
          %v1255 = vpack.c.b16 %v1229, %v1227
          %v1256 = vpack.c.b16 %v1232, %v1230
          %v1257 = vpack.c.b16 %v1233, %v1231
          %vm1282 = vcmask 523264
          %v1284 = vsel %vm1282, %v1157, 0
          %v1287 = vsel %vm1282, %v1159, 0
          %1289 = vmatprep.subr.bf16.mxu0 %v1249
          %1290 = vmatpush1.bf16.msra.mxu0 %v1248
          %1291 = vmatprep.subr.bf16.mxu0 %v1247
          %1292 = vmatpush1.bf16.msra.mxu0 %v1246
          %1293 = vmatprep.subr.bf16.mxu0 %v1245
          %1294 = vmatpush1.bf16.msra.mxu0 %v1244
          %1295 = vmatprep.subr.bf16.mxu0 %v1243
          %1296 = vmatpush1.bf16.msra.mxu0 %v1242
          %1297 = vmatprep.subr.bf16.mxu0 %v1241
          %1298 = vmatpush1.bf16.msra.mxu0 %v1240
          %1299 = vmatprep.subr.bf16.mxu0 %v1239
          %1300 = vmatpush1.bf16.msra.mxu0 %v1238
          %1301 = vmatprep.subr.bf16.mxu0 %v1237
          %1302 = vmatpush1.bf16.msra.mxu0 %v1236
          %1303 = vmatprep.subr.bf16.mxu0 %v1235
          %1304 = vmatpush1.bf16.msra.mxu0 %v1234
          %1305 = vmatprep.subr.bf16.mxu0 0
          %1306 = vmatpush2.bf16.msra.mxu0 0
          %1307 = vmatprep.subr.bf16.mxu0 0
          %1308 = vmatpush2.bf16.msra.mxu0 0
          %1309 = vmatprep.subr.bf16.mxu0 0
          %1310 = vmatpush2.bf16.msra.mxu0 0
          %1311 = vmatprep.subr.bf16.mxu0 0
          %1312 = vmatpush2.bf16.msra.mxu0 0
          %1313 = vmatprep.subr.bf16.mxu0 %v1257
          %1314 = vmatpush2.bf16.msra.mxu0 %v1256
          %1315 = vmatprep.subr.bf16.mxu0 %v1255
          %1316 = vmatpush2.bf16.msra.mxu0 %v1254
          %1317 = vmatprep.subr.bf16.mxu0 %v1253
          %1318 = vmatpush2.bf16.msra.mxu0 %v1252
          %1319 = vmatprep.subr.bf16.mxu0 %v1251
          %1320 = vmatpush2.bf16.msra.mxu0 %v1250
          %1321 = vmatprep.mubr.bf16.mxu0 %v1284
          %1322 = vmatmul.mubr.bf16.gmra.mxu0 %v1156
          %v1323 = vpop.f32.mrf.mxu0
          %v1324 = vadd.f32 %v1141, %v1323
          %v1325 = vpop.f32.mrf.mxu0
          %v1326 = vadd.f32 %v1142, %v1325
          %v1327 = vpop.f32.mrf.mxu0
          %v1328 = vadd.f32 %v1143, %v1327
          %v1329 = vpop.f32.mrf.mxu0
          %v1330 = vadd.f32 %v1144, %v1329
          %1331 = vmatprep.mubr.bf16.mxu0 %v1287
          %1332 = vmatmul.mubr.bf16.gmra.mxu0 %v1158
          %v1333 = vpop.f32.mrf.mxu0
          %v1334 = vadd.f32 %v1145, %v1333
          %v1335 = vpop.f32.mrf.mxu0
          %v1336 = vadd.f32 %v1146, %v1335
          %v1337 = vpop.f32.mrf.mxu0
          %v1338 = vpop.f32.mrf.mxu0
          %1339 = vdwg.mxu0
          %v1340 = vld [vmem:[#allocation9] sm:$0x3]
          %v1341 = vld [vmem:[#allocation10] sm:$0x3]
          %v1342 = vadd.f32 %v1324, %v1326
          %1343 = vadd.xlane.f32.xlu0 %v1342
          %v1344 = vpop.xlane.xlu0 %1343
          %v1345 = vadd.f32 %v1328, %v1330
          %1346 = vadd.xlane.f32.xlu0 %v1345
          %v1347 = vpop.xlane.xlu0 %1346
          %vm1348 = vcmask 1040384
          %v1349 = vsel %vm1348, %v1334, 0.0
          %v1350 = vsel %vm1348, %v1336, 0.0
          %v1351 = vadd.f32 %v1349, %v1350
          %1352 = vadd.xlane.f32.xlu0 %v1351
          %v1353 = vpop.xlane.xlu0 %1352
          %v1354 = vrcp.pop 256.0
          %v1355 = vmul.f32 %v1344, %v1354
          %v1356 = vmul.f32 %v1347, %v1354
          %v1357 = vmul.f32 %v1353, %v1354
          %v1358 = vsub.f32 %v1324, %v1355
          %v1359 = vsub.f32 %v1326, %v1355
          %v1360 = vsub.f32 %v1328, %v1356
          %v1361 = vsub.f32 %v1330, %v1356
          %v1362 = vsub.f32 %v1334, %v1357
          %v1363 = vsub.f32 %v1336, %v1357
          %v1364 = vmul.f32 %v1358, %v1358
          %v1365 = vmul.f32 %v1359, %v1359
          %v1366 = vmul.f32 %v1360, %v1360
          %v1367 = vmul.f32 %v1361, %v1361
          %v1368 = vmul.f32 %v1362, %v1362
          %v1369 = vmul.f32 %v1363, %v1363
          %v1370 = vadd.f32 %v1364, %v1365
          %1371 = vadd.xlane.f32.xlu0 %v1370
          %v1372 = vpop.xlane.xlu0 %1371
          %v1373 = vadd.f32 %v1366, %v1367
          %1374 = vadd.xlane.f32.xlu0 %v1373
          %v1375 = vpop.xlane.xlu0 %1374
          %v1376 = vsel %vm1348, %v1368, 0.0
          %v1377 = vsel %vm1348, %v1369, 0.0
          %v1378 = vadd.f32 %v1376, %v1377
          %1379 = vadd.xlane.f32.xlu0 %v1378
          %v1380 = vpop.xlane.xlu0 %1379
          %v1381 = vmul.f32 %v1372, %v1354
          %v1382 = vmul.f32 %v1375, %v1354
          %v1383 = vmul.f32 %v1380, %v1354
          %v1384 = vadd.f32 %v1381, 1e-05
          %v1385 = vadd.f32 %v1382, 1e-05
          %v1386 = vadd.f32 %v1383, 1e-05
          %v1387 = vrsqrt.pop %v1384
          %v1388 = vrsqrt.pop %v1385
          %v1389 = vrsqrt.pop %v1386
          %v1390 = vmul.f32 %v1358, %v1387
          %v1391 = vmul.f32 %v1359, %v1387
          %v1392 = vmul.f32 %v1360, %v1388
          %v1393 = vmul.f32 %v1361, %v1388
          %v1394 = vmul.f32 %v1362, %v1389
          %v1395 = vmul.f32 %v1363, %v1389
          %v1397 = vlaneseq
          %v1398 = vshrl.u32 %v1397, 7
          %v1399 = vsub.s32 0, %v1398
          %v1400 = vrot.slane %v1340, %v1399
          %v1401 = vlaneseq
          %v1402 = vshrl.u32 %v1401, 7
          %v1403 = vsub.s32 1, %v1402
          %v1404 = vrot.slane %v1340, %v1403
          %v1407 = vmul.f32 %v1390, %v1400
          %v1408 = vmul.f32 %v1391, %v1404
          %v1409 = vmul.f32 %v1392, %v1400
          %v1410 = vmul.f32 %v1393, %v1404
          %v1411 = vmul.f32 %v1394, %v1400
          %v1412 = vmul.f32 %v1395, %v1404
          %v1414 = vlaneseq
          %v1415 = vshrl.u32 %v1414, 7
          %v1416 = vsub.s32 0, %v1415
          %v1417 = vrot.slane %v1341, %v1416
          %v1418 = vlaneseq
          %v1419 = vshrl.u32 %v1418, 7
          %v1420 = vsub.s32 1, %v1419
          %v1421 = vrot.slane %v1341, %v1420
          %v1424 = vadd.f32 %v1407, %v1417
          %v1425 = vadd.f32 %v1408, %v1421
          %v1426 = vadd.f32 %v1409, %v1417
          %v1427 = vadd.f32 %v1410, %v1421
          %v1428 = vadd.f32 %v1411, %v1417
          %v1429 = vadd.f32 %v1412, %v1421
          %1430 = vst [vmem:[#allocation2] sm:$0xff] %v1424
          %1431 = vst [vmem:[#allocation2 + $0x8] sm:$0xff] %v1425
          %1432 = vst [vmem:[#allocation2 + $0x10] sm:$0xff] %v1426
          %1433 = vst [vmem:[#allocation2 + $0x18] sm:$0xff] %v1427
          %1434 = vst [vmem:[#allocation2 + $0x20] sm:$0x1] %v1428
          %1435 = vst [vmem:[#allocation2 + $0x28] sm:$0x1] %v1429
        $region168: #{encode_image.1} parent=99 // pred_fallthru
          _
        %v1436 = vld [vmem:[#allocation2] sm:$0xff]
        %v1437 = vld [vmem:[#allocation2 + $0x8] sm:$0xff]
        %v1438 = vld [vmem:[#allocation2 + $0x10] sm:$0xff]
        %v1439 = vld [vmem:[#allocation2 + $0x18] sm:$0xff]
        %v1440 = vld [vmem:[#allocation2 + $0x20] sm:$0x1]
        %v1441 = vld [vmem:[#allocation2 + $0x28] sm:$0x1]
        %v1442 = vld [vmem:[%s891] sm:$0x3]
        %v1443 = vld [vmem:[%s900] sm:$0x3]
        %v1444 = vadd.f32 %v1436, %v1437
        %1445 = vadd.xlane.f32.xlu0 %v1444
        %v1446 = vpop.xlane.xlu0 %1445
        %v1447 = vadd.f32 %v1438, %v1439
        %1448 = vadd.xlane.f32.xlu0 %v1447
        %v1449 = vpop.xlane.xlu0 %1448
        %vm1450 = vcmask 1040384
        %v1451 = vsel %vm1450, %v1440, 0.0
        %v1452 = vsel %vm1450, %v1441, 0.0
        %v1453 = vadd.f32 %v1451, %v1452
        %1454 = vadd.xlane.f32.xlu0 %v1453
        %v1455 = vpop.xlane.xlu0 %1454
        %v1456 = vrcp.pop 256.0
        %v1457 = vmul.f32 %v1446, %v1456
        %v1458 = vmul.f32 %v1449, %v1456
        %v1459 = vmul.f32 %v1455, %v1456
        %v1460 = vsub.f32 %v1436, %v1457
        %v1461 = vsub.f32 %v1437, %v1457
        %v1462 = vsub.f32 %v1438, %v1458
        %v1463 = vsub.f32 %v1439, %v1458
        %v1464 = vsub.f32 %v1440, %v1459
        %v1465 = vsub.f32 %v1441, %v1459
        %v1466 = vmul.f32 %v1460, %v1460
        %v1467 = vmul.f32 %v1461, %v1461
        %v1468 = vmul.f32 %v1462, %v1462
        %v1469 = vmul.f32 %v1463, %v1463
        %v1470 = vmul.f32 %v1464, %v1464
        %v1471 = vmul.f32 %v1465, %v1465
        %v1472 = vadd.f32 %v1466, %v1467
        %1473 = vadd.xlane.f32.xlu0 %v1472
        %v1474 = vpop.xlane.xlu0 %1473
        %v1475 = vadd.f32 %v1468, %v1469
        %1476 = vadd.xlane.f32.xlu0 %v1475
        %v1477 = vpop.xlane.xlu0 %1476
        %v1478 = vsel %vm1450, %v1470, 0.0
        %v1479 = vsel %vm1450, %v1471, 0.0
        %v1480 = vadd.f32 %v1478, %v1479
        %1481 = vadd.xlane.f32.xlu0 %v1480
        %v1482 = vpop.xlane.xlu0 %1481
        %v1483 = vmul.f32 %v1474, %v1456
        %v1484 = vmul.f32 %v1477, %v1456
        %v1485 = vmul.f32 %v1482, %v1456
        %v1486 = vadd.f32 %v1483, 1e-05
        %v1487 = vadd.f32 %v1484, 1e-05
        %v1488 = vadd.f32 %v1485, 1e-05
        %v1489 = vrsqrt.pop %v1486
        %v1490 = vrsqrt.pop %v1487
        %v1491 = vrsqrt.pop %v1488
        %v1492 = vmul.f32 %v1460, %v1489
        %v1493 = vmul.f32 %v1461, %v1489
        %v1494 = vmul.f32 %v1462, %v1490
        %v1495 = vmul.f32 %v1463, %v1490
        %v1496 = vmul.f32 %v1464, %v1491
        %v1497 = vmul.f32 %v1465, %v1491
        %v1499 = vlaneseq
        %v1500 = vshrl.u32 %v1499, 7
        %v1501 = vsub.s32 0, %v1500
        %v1502 = vrot.slane %v1442, %v1501
        %v1503 = vlaneseq
        %v1504 = vshrl.u32 %v1503, 7
        %v1505 = vsub.s32 1, %v1504
        %v1506 = vrot.slane %v1442, %v1505
        %v1509 = vmul.f32 %v1492, %v1502
        %v1510 = vmul.f32 %v1493, %v1506
        %v1511 = vmul.f32 %v1494, %v1502
        %v1512 = vmul.f32 %v1495, %v1506
        %v1513 = vmul.f32 %v1496, %v1502
        %v1514 = vmul.f32 %v1497, %v1506
        %v1516 = vlaneseq
        %v1517 = vshrl.u32 %v1516, 7
        %v1518 = vsub.s32 0, %v1517
        %v1519 = vrot.slane %v1443, %v1518
        %v1520 = vlaneseq
        %v1521 = vshrl.u32 %v1520, 7
        %v1522 = vsub.s32 1, %v1521
        %v1523 = vrot.slane %v1443, %v1522
        %v1526 = vadd.f32 %v1509, %v1519
        %v1527 = vadd.f32 %v1510, %v1523
        %v1528 = vadd.f32 %v1511, %v1519
        %v1529 = vadd.f32 %v1512, %v1523
        %v1530 = vadd.f32 %v1513, %v1519
        %v1531 = vadd.f32 %v1514, %v1523
        %v1532 = vpack.c.bf16 %v1528, %v1526
        %v1533 = vpack.c.bf16 %v1529, %v1527
        %v1534 = vpack.c.bf16 %v1530, %v1530
        %v1535 = vpack.c.bf16 %v1531, %v1531
        %v1536 = vld [vmem:[%s1099] sm:$0xff]
        %v1537 = vld [vmem:[%s1099 + $0x8] sm:$0xff]
        %v1538 = vld [vmem:[%s1099 + $0x10] sm:$0xff]
        %v1539 = vld [vmem:[%s1099 + $0x18] sm:$0xff]
        %v1540 = vld [vmem:[%s1099 + $0x20] sm:$0xff]
        %v1541 = vld [vmem:[%s1099 + $0x28] sm:$0xff]
        %v1542 = vld [vmem:[%s1099 + $0x30] sm:$0xff]
        %v1543 = vld [vmem:[%s1099 + $0x38] sm:$0xff]
        %v1544 = vld [vmem:[%s1099 + $0x40] sm:$0xff]
        %v1545 = vld [vmem:[%s1099 + $0x48] sm:$0xff]
        %v1546 = vld [vmem:[%s1099 + $0x50] sm:$0xff]
        %v1547 = vld [vmem:[%s1099 + $0x58] sm:$0xff]
        %v1548 = vld [vmem:[%s1099 + $0x60] sm:$0xff]
        %v1549 = vld [vmem:[%s1099 + $0x68] sm:$0xff]
        %v1550 = vld [vmem:[%s1099 + $0x70] sm:$0xff]
        %v1551 = vld [vmem:[%s1099 + $0x78] sm:$0xff]
        %v1552 = vld [vmem:[%s1099 + $0x80] sm:$0xff]
        %v1553 = vld [vmem:[%s1099 + $0x88] sm:$0xff]
        %v1554 = vld [vmem:[%s1099 + $0x90] sm:$0xff]
        %v1555 = vld [vmem:[%s1099 + $0x98] sm:$0xff]
        %v1556 = vld [vmem:[%s1099 + $0xa0] sm:$0xff]
        %v1557 = vld [vmem:[%s1099 + $0xa8] sm:$0xff]
        %v1558 = vld [vmem:[%s1099 + $0xb0] sm:$0xff]
        %v1559 = vld [vmem:[%s1099 + $0xb8] sm:$0xff]
        %v1560 = vld [vmem:[%s1099 + $0xc0] sm:$0xff]
        %v1561 = vld [vmem:[%s1099 + $0xc8] sm:$0xff]
        %v1562 = vld [vmem:[%s1099 + $0xd0] sm:$0xff]
        %v1563 = vld [vmem:[%s1099 + $0xd8] sm:$0xff]
        %v1564 = vld [vmem:[%s1099 + $0xe0] sm:$0xff]
        %v1565 = vld [vmem:[%s1099 + $0xe8] sm:$0xff]
        %v1566 = vld [vmem:[%s1099 + $0xf0] sm:$0xff]
        %v1567 = vld [vmem:[%s1099 + $0xf8] sm:$0xff]
        %v1568 = vld [vmem:[%s1099 + $0x100] sm:$0xff]
        %v1569 = vld [vmem:[%s1099 + $0x108] sm:$0xff]
        %v1570 = vld [vmem:[%s1099 + $0x110] sm:$0xff]
        %v1571 = vld [vmem:[%s1099 + $0x118] sm:$0xff]
        %v1572 = vld [vmem:[%s1099 + $0x120] sm:$0xff]
        %v1573 = vld [vmem:[%s1099 + $0x128] sm:$0xff]
        %v1574 = vld [vmem:[%s1099 + $0x130] sm:$0xff]
        %v1575 = vld [vmem:[%s1099 + $0x138] sm:$0xff]
        %v1576 = vld [vmem:[%s1099 + $0x140] sm:$0xff]
        %v1577 = vld [vmem:[%s1099 + $0x148] sm:$0xff]
        %v1578 = vld [vmem:[%s1099 + $0x150] sm:$0xff]
        %v1579 = vld [vmem:[%s1099 + $0x158] sm:$0xff]
        %v1580 = vld [vmem:[%s1099 + $0x160] sm:$0xff]
        %v1581 = vld [vmem:[%s1099 + $0x168] sm:$0xff]
        %v1582 = vld [vmem:[%s1099 + $0x170] sm:$0xff]
        %v1583 = vld [vmem:[%s1099 + $0x178] sm:$0xff]
        %v1584 = vld [vmem:[%s1099 + $0x180] sm:$0xff]
        %v1585 = vld [vmem:[%s1099 + $0x188] sm:$0xff]
        %v1586 = vld [vmem:[%s1099 + $0x190] sm:$0xff]
        %v1587 = vld [vmem:[%s1099 + $0x198] sm:$0xff]
        %v1588 = vld [vmem:[%s1099 + $0x1a0] sm:$0xff]
        %v1589 = vld [vmem:[%s1099 + $0x1a8] sm:$0xff]
        %v1590 = vld [vmem:[%s1099 + $0x1b0] sm:$0xff]
        %v1591 = vld [vmem:[%s1099 + $0x1b8] sm:$0xff]
        %v1592 = vld [vmem:[%s1099 + $0x1c0] sm:$0xff]
        %v1593 = vld [vmem:[%s1099 + $0x1c8] sm:$0xff]
        %v1594 = vld [vmem:[%s1099 + $0x1d0] sm:$0xff]
        %v1595 = vld [vmem:[%s1099 + $0x1d8] sm:$0xff]
        %v1596 = vld [vmem:[%s1099 + $0x1e0] sm:$0xff]
        %v1597 = vld [vmem:[%s1099 + $0x1e8] sm:$0xff]
        %v1598 = vld [vmem:[%s1099 + $0x1f0] sm:$0xff]
        %v1599 = vld [vmem:[%s1099 + $0x1f8] sm:$0xff]
        %v1600 = vld [vmem:[%s1099 + $0x200] sm:$0xff]
        %v1601 = vld [vmem:[%s1099 + $0x208] sm:$0xff]
        %v1602 = vld [vmem:[%s1099 + $0x210] sm:$0xff]
        %v1603 = vld [vmem:[%s1099 + $0x218] sm:$0xff]
        %v1604 = vld [vmem:[%s1099 + $0x220] sm:$0xff]
        %v1605 = vld [vmem:[%s1099 + $0x228] sm:$0xff]
        %v1606 = vld [vmem:[%s1099 + $0x230] sm:$0xff]
        %v1607 = vld [vmem:[%s1099 + $0x238] sm:$0xff]
        %v1608 = vld [vmem:[%s1099 + $0x240] sm:$0xff]
        %v1609 = vld [vmem:[%s1099 + $0x248] sm:$0xff]
        %v1610 = vld [vmem:[%s1099 + $0x250] sm:$0xff]
        %v1611 = vld [vmem:[%s1099 + $0x258] sm:$0xff]
        %v1612 = vld [vmem:[%s1099 + $0x260] sm:$0xff]
        %v1613 = vld [vmem:[%s1099 + $0x268] sm:$0xff]
        %v1614 = vld [vmem:[%s1099 + $0x270] sm:$0xff]
        %v1615 = vld [vmem:[%s1099 + $0x278] sm:$0xff]
        %v1616 = vld [vmem:[%s1099 + $0x280] sm:$0xff]
        %v1617 = vld [vmem:[%s1099 + $0x288] sm:$0xff]
        %v1618 = vld [vmem:[%s1099 + $0x290] sm:$0xff]
        %v1619 = vld [vmem:[%s1099 + $0x298] sm:$0xff]
        %v1620 = vld [vmem:[%s1099 + $0x2a0] sm:$0xff]
        %v1621 = vld [vmem:[%s1099 + $0x2a8] sm:$0xff]
        %v1622 = vld [vmem:[%s1099 + $0x2b0] sm:$0xff]
        %v1623 = vld [vmem:[%s1099 + $0x2b8] sm:$0xff]
        %v1624 = vld [vmem:[%s1099 + $0x2c0] sm:$0xff]
        %v1625 = vld [vmem:[%s1099 + $0x2c8] sm:$0xff]
        %v1626 = vld [vmem:[%s1099 + $0x2d0] sm:$0xff]
        %v1627 = vld [vmem:[%s1099 + $0x2d8] sm:$0xff]
        %v1628 = vld [vmem:[%s1099 + $0x2e0] sm:$0xff]
        %v1629 = vld [vmem:[%s1099 + $0x2e8] sm:$0xff]
        %v1630 = vld [vmem:[%s1099 + $0x2f0] sm:$0xff]
        %v1631 = vld [vmem:[%s1099 + $0x2f8] sm:$0xff]
        %v1632 = vld [vmem:[%s909] sm:$0x3f]
        %v1634 = vlaneseq
        %v1635 = vshrl.u32 %v1634, 7
        %v1636 = vsub.s32 0, %v1635
        %v1637 = vrot.slane %v1632, %v1636
        %v1638 = vlaneseq
        %v1639 = vshrl.u32 %v1638, 7
        %v1640 = vsub.s32 1, %v1639
        %v1641 = vrot.slane %v1632, %v1640
        %v1642 = vlaneseq
        %v1643 = vshrl.u32 %v1642, 7
        %v1644 = vsub.s32 2, %v1643
        %v1645 = vrot.slane %v1632, %v1644
        %v1646 = vlaneseq
        %v1647 = vshrl.u32 %v1646, 7
        %v1648 = vsub.s32 3, %v1647
        %v1649 = vrot.slane %v1632, %v1648
        %v1650 = vlaneseq
        %v1651 = vshrl.u32 %v1650, 7
        %v1652 = vsub.s32 4, %v1651
        %v1653 = vrot.slane %v1632, %v1652
        %v1654 = vlaneseq
        %v1655 = vshrl.u32 %v1654, 7
        %v1656 = vsub.s32 5, %v1655
        %v1657 = vrot.slane %v1632, %v1656
        %v1760 = vunpack.c.l.b16 %v1536
        %v1761 = vunpack.c.h.b16 %v1536
        %v1762 = vunpack.c.l.b16 %v1537
        %v1763 = vunpack.c.h.b16 %v1537
        %v1764 = vunpack.c.l.b16 %v1538
        %v1765 = vunpack.c.h.b16 %v1538
        %v1766 = vunpack.c.l.b16 %v1539
        %v1767 = vunpack.c.h.b16 %v1539
        %v1768 = vunpack.c.l.b16 %v1540
        %v1769 = vunpack.c.h.b16 %v1540
        %v1770 = vunpack.c.l.b16 %v1541
        %v1771 = vunpack.c.h.b16 %v1541
        %v1772 = vunpack.c.l.b16 %v1542
        %v1773 = vunpack.c.h.b16 %v1542
        %v1774 = vunpack.c.l.b16 %v1543
        %v1775 = vunpack.c.h.b16 %v1543
        %v1776 = vunpack.c.l.b16 %v1544
        %v1777 = vunpack.c.h.b16 %v1544
        %v1778 = vunpack.c.l.b16 %v1545
        %v1779 = vunpack.c.h.b16 %v1545
        %v1780 = vunpack.c.l.b16 %v1546
        %v1781 = vunpack.c.h.b16 %v1546
        %v1782 = vunpack.c.l.b16 %v1547
        %v1783 = vunpack.c.h.b16 %v1547
        %v1784 = vunpack.c.l.b16 %v1548
        %v1785 = vunpack.c.h.b16 %v1548
        %v1786 = vunpack.c.l.b16 %v1549
        %v1787 = vunpack.c.h.b16 %v1549
        %v1788 = vunpack.c.l.b16 %v1550
        %v1789 = vunpack.c.h.b16 %v1550
        %v1790 = vunpack.c.l.b16 %v1551
        %v1791 = vunpack.c.h.b16 %v1551
        %v1792 = vunpack.c.l.b16 %v1552
        %v1793 = vunpack.c.h.b16 %v1552
        %v1794 = vunpack.c.l.b16 %v1553
        %v1795 = vunpack.c.h.b16 %v1553
        %v1796 = vunpack.c.l.b16 %v1554
        %v1797 = vunpack.c.h.b16 %v1554
        %v1798 = vunpack.c.l.b16 %v1555
        %v1799 = vunpack.c.h.b16 %v1555
        %v1800 = vunpack.c.l.b16 %v1556
        %v1801 = vunpack.c.h.b16 %v1556
        %v1802 = vunpack.c.l.b16 %v1557
        %v1803 = vunpack.c.h.b16 %v1557
        %v1804 = vunpack.c.l.b16 %v1558
        %v1805 = vunpack.c.h.b16 %v1558
        %v1806 = vunpack.c.l.b16 %v1559
        %v1807 = vunpack.c.h.b16 %v1559
        %v1808 = vunpack.c.l.b16 %v1560
        %v1809 = vunpack.c.h.b16 %v1560
        %v1810 = vunpack.c.l.b16 %v1561
        %v1811 = vunpack.c.h.b16 %v1561
        %v1812 = vunpack.c.l.b16 %v1562
        %v1813 = vunpack.c.h.b16 %v1562
        %v1814 = vunpack.c.l.b16 %v1563
        %v1815 = vunpack.c.h.b16 %v1563
        %v1816 = vunpack.c.l.b16 %v1564
        %v1817 = vunpack.c.h.b16 %v1564
        %v1818 = vunpack.c.l.b16 %v1565
        %v1819 = vunpack.c.h.b16 %v1565
        %v1820 = vunpack.c.l.b16 %v1566
        %v1821 = vunpack.c.h.b16 %v1566
        %v1822 = vunpack.c.l.b16 %v1567
        %v1823 = vunpack.c.h.b16 %v1567
        %v1824 = vunpack.c.l.b16 %v1568
        %v1825 = vunpack.c.h.b16 %v1568
        %v1826 = vunpack.c.l.b16 %v1569
        %v1827 = vunpack.c.h.b16 %v1569
        %v1828 = vunpack.c.l.b16 %v1570
        %v1829 = vunpack.c.h.b16 %v1570
        %v1830 = vunpack.c.l.b16 %v1571
        %v1831 = vunpack.c.h.b16 %v1571
        %v1832 = vunpack.c.l.b16 %v1572
        %v1833 = vunpack.c.h.b16 %v1572
        %v1834 = vunpack.c.l.b16 %v1573
        %v1835 = vunpack.c.h.b16 %v1573
        %v1836 = vunpack.c.l.b16 %v1574
        %v1837 = vunpack.c.h.b16 %v1574
        %v1838 = vunpack.c.l.b16 %v1575
        %v1839 = vunpack.c.h.b16 %v1575
        %v1840 = vunpack.c.l.b16 %v1576
        %v1841 = vunpack.c.h.b16 %v1576
        %v1842 = vunpack.c.l.b16 %v1577
        %v1843 = vunpack.c.h.b16 %v1577
        %v1844 = vunpack.c.l.b16 %v1578
        %v1845 = vunpack.c.h.b16 %v1578
        %v1846 = vunpack.c.l.b16 %v1579
        %v1847 = vunpack.c.h.b16 %v1579
        %v1848 = vunpack.c.l.b16 %v1580
        %v1849 = vunpack.c.h.b16 %v1580
        %v1850 = vunpack.c.l.b16 %v1581
        %v1851 = vunpack.c.h.b16 %v1581
        %v1852 = vunpack.c.l.b16 %v1582
        %v1853 = vunpack.c.h.b16 %v1582
        %v1854 = vunpack.c.l.b16 %v1583
        %v1855 = vunpack.c.h.b16 %v1583
        %v1856 = vunpack.c.l.b16 %v1584
        %v1857 = vunpack.c.h.b16 %v1584
        %v1858 = vunpack.c.l.b16 %v1585
        %v1859 = vunpack.c.h.b16 %v1585
        %v1860 = vunpack.c.l.b16 %v1586
        %v1861 = vunpack.c.h.b16 %v1586
        %v1862 = vunpack.c.l.b16 %v1587
        %v1863 = vunpack.c.h.b16 %v1587
        %v1864 = vunpack.c.l.b16 %v1588
        %v1865 = vunpack.c.h.b16 %v1588
        %v1866 = vunpack.c.l.b16 %v1589
        %v1867 = vunpack.c.h.b16 %v1589
        %v1868 = vunpack.c.l.b16 %v1590
        %v1869 = vunpack.c.h.b16 %v1590
        %v1870 = vunpack.c.l.b16 %v1591
        %v1871 = vunpack.c.h.b16 %v1591
        %v1872 = vunpack.c.l.b16 %v1592
        %v1873 = vunpack.c.h.b16 %v1592
        %v1874 = vunpack.c.l.b16 %v1593
        %v1875 = vunpack.c.h.b16 %v1593
        %v1876 = vunpack.c.l.b16 %v1594
        %v1877 = vunpack.c.h.b16 %v1594
        %v1878 = vunpack.c.l.b16 %v1595
        %v1879 = vunpack.c.h.b16 %v1595
        %v1880 = vunpack.c.l.b16 %v1596
        %v1881 = vunpack.c.h.b16 %v1596
        %v1882 = vunpack.c.l.b16 %v1597
        %v1883 = vunpack.c.h.b16 %v1597
        %v1884 = vunpack.c.l.b16 %v1598
        %v1885 = vunpack.c.h.b16 %v1598
        %v1886 = vunpack.c.l.b16 %v1599
        %v1887 = vunpack.c.h.b16 %v1599
        %v1888 = vunpack.c.l.b16 %v1600
        %v1889 = vunpack.c.h.b16 %v1600
        %v1890 = vunpack.c.l.b16 %v1601
        %v1891 = vunpack.c.h.b16 %v1601
        %v1892 = vunpack.c.l.b16 %v1602
        %v1893 = vunpack.c.h.b16 %v1602
        %v1894 = vunpack.c.l.b16 %v1603
        %v1895 = vunpack.c.h.b16 %v1603
        %v1896 = vunpack.c.l.b16 %v1604
        %v1897 = vunpack.c.h.b16 %v1604
        %v1898 = vunpack.c.l.b16 %v1605
        %v1899 = vunpack.c.h.b16 %v1605
        %v1900 = vunpack.c.l.b16 %v1606
        %v1901 = vunpack.c.h.b16 %v1606
        %v1902 = vunpack.c.l.b16 %v1607
        %v1903 = vunpack.c.h.b16 %v1607
        %v1904 = vunpack.c.l.b16 %v1608
        %v1905 = vunpack.c.h.b16 %v1608
        %v1906 = vunpack.c.l.b16 %v1609
        %v1907 = vunpack.c.h.b16 %v1609
        %v1908 = vunpack.c.l.b16 %v1610
        %v1909 = vunpack.c.h.b16 %v1610
        %v1910 = vunpack.c.l.b16 %v1611
        %v1911 = vunpack.c.h.b16 %v1611
        %v1912 = vunpack.c.l.b16 %v1612
        %v1913 = vunpack.c.h.b16 %v1612
        %v1914 = vunpack.c.l.b16 %v1613
        %v1915 = vunpack.c.h.b16 %v1613
        %v1916 = vunpack.c.l.b16 %v1614
        %v1917 = vunpack.c.h.b16 %v1614
        %v1918 = vunpack.c.l.b16 %v1615
        %v1919 = vunpack.c.h.b16 %v1615
        %v1920 = vunpack.c.l.b16 %v1616
        %v1921 = vunpack.c.h.b16 %v1616
        %v1922 = vunpack.c.l.b16 %v1617
        %v1923 = vunpack.c.h.b16 %v1617
        %v1924 = vunpack.c.l.b16 %v1618
        %v1925 = vunpack.c.h.b16 %v1618
        %v1926 = vunpack.c.l.b16 %v1619
        %v1927 = vunpack.c.h.b16 %v1619
        %v1928 = vunpack.c.l.b16 %v1620
        %v1929 = vunpack.c.h.b16 %v1620
        %v1930 = vunpack.c.l.b16 %v1621
        %v1931 = vunpack.c.h.b16 %v1621
        %v1932 = vunpack.c.l.b16 %v1622
        %v1933 = vunpack.c.h.b16 %v1622
        %v1934 = vunpack.c.l.b16 %v1623
        %v1935 = vunpack.c.h.b16 %v1623
        %v1936 = vunpack.c.l.b16 %v1624
        %v1937 = vunpack.c.h.b16 %v1624
        %v1938 = vunpack.c.l.b16 %v1625
        %v1939 = vunpack.c.h.b16 %v1625
        %v1940 = vunpack.c.l.b16 %v1626
        %v1941 = vunpack.c.h.b16 %v1626
        %v1942 = vunpack.c.l.b16 %v1627
        %v1943 = vunpack.c.h.b16 %v1627
        %v1944 = vunpack.c.l.b16 %v1628
        %v1945 = vunpack.c.h.b16 %v1628
        %v1946 = vunpack.c.l.b16 %v1629
        %v1947 = vunpack.c.h.b16 %v1629
        %v1948 = vunpack.c.l.b16 %v1630
        %v1949 = vunpack.c.h.b16 %v1630
        %v1950 = vunpack.c.l.b16 %v1631
        %v1951 = vunpack.c.h.b16 %v1631
        %v1952 = vpack.c.b16 %v1766, %v1760
        %v1953 = vpack.c.b16 %v1767, %v1761
        %v1954 = vpack.c.b16 %v1768, %v1762
        %v1955 = vpack.c.b16 %v1769, %v1763
        %v1956 = vpack.c.b16 %v1770, %v1764
        %v1957 = vpack.c.b16 %v1771, %v1765
        %v1958 = vpack.c.b16 %v1778, %v1772
        %v1959 = vpack.c.b16 %v1779, %v1773
        %v1960 = vpack.c.b16 %v1780, %v1774
        %v1961 = vpack.c.b16 %v1781, %v1775
        %v1962 = vpack.c.b16 %v1782, %v1776
        %v1963 = vpack.c.b16 %v1783, %v1777
        %v1964 = vpack.c.b16 %v1790, %v1784
        %v1965 = vpack.c.b16 %v1791, %v1785
        %v1966 = vpack.c.b16 %v1792, %v1786
        %v1967 = vpack.c.b16 %v1793, %v1787
        %v1968 = vpack.c.b16 %v1794, %v1788
        %v1969 = vpack.c.b16 %v1795, %v1789
        %v1970 = vpack.c.b16 %v1802, %v1796
        %v1971 = vpack.c.b16 %v1803, %v1797
        %v1972 = vpack.c.b16 %v1804, %v1798
        %v1973 = vpack.c.b16 %v1805, %v1799
        %v1974 = vpack.c.b16 %v1806, %v1800
        %v1975 = vpack.c.b16 %v1807, %v1801
        %v1976 = vpack.c.b16 %v1814, %v1808
        %v1977 = vpack.c.b16 %v1815, %v1809
        %v1978 = vpack.c.b16 %v1816, %v1810
        %v1979 = vpack.c.b16 %v1817, %v1811
        %v1980 = vpack.c.b16 %v1818, %v1812
        %v1981 = vpack.c.b16 %v1819, %v1813
        %v1982 = vpack.c.b16 %v1826, %v1820
        %v1983 = vpack.c.b16 %v1827, %v1821
        %v1984 = vpack.c.b16 %v1828, %v1822
        %v1985 = vpack.c.b16 %v1829, %v1823
        %v1986 = vpack.c.b16 %v1830, %v1824
        %v1987 = vpack.c.b16 %v1831, %v1825
        %v1988 = vpack.c.b16 %v1838, %v1832
        %v1989 = vpack.c.b16 %v1839, %v1833
        %v1990 = vpack.c.b16 %v1840, %v1834
        %v1991 = vpack.c.b16 %v1841, %v1835
        %v1992 = vpack.c.b16 %v1842, %v1836
        %v1993 = vpack.c.b16 %v1843, %v1837
        %v1994 = vpack.c.b16 %v1850, %v1844
        %v1995 = vpack.c.b16 %v1851, %v1845
        %v1996 = vpack.c.b16 %v1852, %v1846
        %v1997 = vpack.c.b16 %v1853, %v1847
        %v1998 = vpack.c.b16 %v1854, %v1848
        %v1999 = vpack.c.b16 %v1855, %v1849
        %v2000 = vpack.c.b16 %v1862, %v1856
        %v2001 = vpack.c.b16 %v1863, %v1857
        %v2002 = vpack.c.b16 %v1864, %v1858
        %v2003 = vpack.c.b16 %v1865, %v1859
        %v2004 = vpack.c.b16 %v1866, %v1860
        %v2005 = vpack.c.b16 %v1867, %v1861
        %v2006 = vpack.c.b16 %v1874, %v1868
        %v2007 = vpack.c.b16 %v1875, %v1869
        %v2008 = vpack.c.b16 %v1876, %v1870
        %v2009 = vpack.c.b16 %v1877, %v1871
        %v2010 = vpack.c.b16 %v1878, %v1872
        %v2011 = vpack.c.b16 %v1879, %v1873
        %v2012 = vpack.c.b16 %v1886, %v1880
        %v2013 = vpack.c.b16 %v1887, %v1881
        %v2014 = vpack.c.b16 %v1888, %v1882
        %v2015 = vpack.c.b16 %v1889, %v1883
        %v2016 = vpack.c.b16 %v1890, %v1884
        %v2017 = vpack.c.b16 %v1891, %v1885
        %v2018 = vpack.c.b16 %v1898, %v1892
        %v2019 = vpack.c.b16 %v1899, %v1893
        %v2020 = vpack.c.b16 %v1900, %v1894
        %v2021 = vpack.c.b16 %v1901, %v1895
        %v2022 = vpack.c.b16 %v1902, %v1896
        %v2023 = vpack.c.b16 %v1903, %v1897
        %v2024 = vpack.c.b16 %v1910, %v1904
        %v2025 = vpack.c.b16 %v1911, %v1905
        %v2026 = vpack.c.b16 %v1912, %v1906
        %v2027 = vpack.c.b16 %v1913, %v1907
        %v2028 = vpack.c.b16 %v1914, %v1908
        %v2029 = vpack.c.b16 %v1915, %v1909
        %v2030 = vpack.c.b16 %v1922, %v1916
        %v2031 = vpack.c.b16 %v1923, %v1917
        %v2032 = vpack.c.b16 %v1924, %v1918
        %v2033 = vpack.c.b16 %v1925, %v1919
        %v2034 = vpack.c.b16 %v1926, %v1920
        %v2035 = vpack.c.b16 %v1927, %v1921
        %v2036 = vpack.c.b16 %v1934, %v1928
        %v2037 = vpack.c.b16 %v1935, %v1929
        %v2038 = vpack.c.b16 %v1936, %v1930
        %v2039 = vpack.c.b16 %v1937, %v1931
        %v2040 = vpack.c.b16 %v1938, %v1932
        %v2041 = vpack.c.b16 %v1939, %v1933
        %v2042 = vpack.c.b16 %v1946, %v1940
        %v2043 = vpack.c.b16 %v1947, %v1941
        %v2044 = vpack.c.b16 %v1948, %v1942
        %v2045 = vpack.c.b16 %v1949, %v1943
        %v2046 = vpack.c.b16 %v1950, %v1944
        %v2047 = vpack.c.b16 %v1951, %v1945
        %2144 = vmatprep.subr.bf16.mxu0 %v1995
        %2145 = vmatpush1.bf16.msra.mxu0 %v1994
        %2146 = vmatprep.subr.bf16.mxu0 %v1989
        %2147 = vmatpush1.bf16.msra.mxu0 %v1988
        %2148 = vmatprep.subr.bf16.mxu0 %v1983
        %2149 = vmatpush1.bf16.msra.mxu0 %v1982
        %2150 = vmatprep.subr.bf16.mxu0 %v1977
        %2151 = vmatpush1.bf16.msra.mxu0 %v1976
        %2152 = vmatprep.subr.bf16.mxu0 %v1971
        %2153 = vmatpush1.bf16.msra.mxu0 %v1970
        %2154 = vmatprep.subr.bf16.mxu0 %v1965
        %2155 = vmatpush1.bf16.msra.mxu0 %v1964
        %2156 = vmatprep.subr.bf16.mxu0 %v1959
        %2157 = vmatpush1.bf16.msra.mxu0 %v1958
        %2158 = vmatprep.subr.bf16.mxu0 %v1953
        %2159 = vmatpush1.bf16.msra.mxu0 %v1952
        %2160 = vmatprep.subr.bf16.mxu0 %v2043
        %2161 = vmatpush2.bf16.msra.mxu0 %v2042
        %2162 = vmatprep.subr.bf16.mxu0 %v2037
        %2163 = vmatpush2.bf16.msra.mxu0 %v2036
        %2164 = vmatprep.subr.bf16.mxu0 %v2031
        %2165 = vmatpush2.bf16.msra.mxu0 %v2030
        %2166 = vmatprep.subr.bf16.mxu0 %v2025
        %2167 = vmatpush2.bf16.msra.mxu0 %v2024
        %2168 = vmatprep.subr.bf16.mxu0 %v2019
        %2169 = vmatpush2.bf16.msra.mxu0 %v2018
        %2170 = vmatprep.subr.bf16.mxu0 %v2013
        %2171 = vmatpush2.bf16.msra.mxu0 %v2012
        %2172 = vmatprep.subr.bf16.mxu0 %v2007
        %2173 = vmatpush2.bf16.msra.mxu0 %v2006
        %2174 = vmatprep.subr.bf16.mxu0 %v2001
        %2175 = vmatpush2.bf16.msra.mxu0 %v2000
        %2176 = vmatprep.mubr.bf16.mxu0 %v1533
        %2177 = vmatmul.mubr.bf16.gmra.mxu0 %v1532
        %v2178 = vpop.f32.mrf.mxu0
        %v2179 = vadd.f32 %v1637, %v2178
        %v2180 = vpop.f32.mrf.mxu0
        %v2181 = vadd.f32 %v1641, %v2180
        %v2182 = vpop.f32.mrf.mxu0
        %v2183 = vadd.f32 %v1637, %v2182
        %v2184 = vpop.f32.mrf.mxu0
        %v2185 = vadd.f32 %v1641, %v2184
        %2186 = vmatprep.mubr.bf16.mxu0 %v1535
        %2187 = vmatmul.mubr.bf16.gmra.mxu0 %v1534
        %v2188 = vpop.f32.mrf.mxu0
        %v2189 = vadd.f32 %v1637, %v2188
        %v2190 = vpop.f32.mrf.mxu0
        %v2191 = vadd.f32 %v1641, %v2190
        %v2192 = vpop.f32.mrf.mxu0
        %v2193 = vpop.f32.mrf.mxu0
        %2194 = vdwg.mxu0
        %2195 = vmatprep.subr.bf16.mxu0 %v1997
        %2196 = vmatpush1.bf16.msra.mxu0 %v1996
        %2197 = vmatprep.subr.bf16.mxu0 %v1991
        %2198 = vmatpush1.bf16.msra.mxu0 %v1990
        %2199 = vmatprep.subr.bf16.mxu0 %v1985
        %2200 = vmatpush1.bf16.msra.mxu0 %v1984
        %2201 = vmatprep.subr.bf16.mxu0 %v1979
        %2202 = vmatpush1.bf16.msra.mxu0 %v1978
        %2203 = vmatprep.subr.bf16.mxu0 %v1973
        %2204 = vmatpush1.bf16.msra.mxu0 %v1972
        %2205 = vmatprep.subr.bf16.mxu0 %v1967
        %2206 = vmatpush1.bf16.msra.mxu0 %v1966
        %2207 = vmatprep.subr.bf16.mxu0 %v1961
        %2208 = vmatpush1.bf16.msra.mxu0 %v1960
        %2209 = vmatprep.subr.bf16.mxu0 %v1955
        %2210 = vmatpush1.bf16.msra.mxu0 %v1954
        %2211 = vmatprep.subr.bf16.mxu0 %v2045
        %2212 = vmatpush2.bf16.msra.mxu0 %v2044
        %2213 = vmatprep.subr.bf16.mxu0 %v2039
        %2214 = vmatpush2.bf16.msra.mxu0 %v2038
        %2215 = vmatprep.subr.bf16.mxu0 %v2033
        %2216 = vmatpush2.bf16.msra.mxu0 %v2032
        %2217 = vmatprep.subr.bf16.mxu0 %v2027
        %2218 = vmatpush2.bf16.msra.mxu0 %v2026
        %2219 = vmatprep.subr.bf16.mxu0 %v2021
        %2220 = vmatpush2.bf16.msra.mxu0 %v2020
        %2221 = vmatprep.subr.bf16.mxu0 %v2015
        %2222 = vmatpush2.bf16.msra.mxu0 %v2014
        %2223 = vmatprep.subr.bf16.mxu0 %v2009
        %2224 = vmatpush2.bf16.msra.mxu0 %v2008
        %2225 = vmatprep.subr.bf16.mxu0 %v2003
        %2226 = vmatpush2.bf16.msra.mxu0 %v2002
        %2227 = vmatprep.mubr.bf16.mxu0 %v1533
        %2228 = vmatmul.mubr.bf16.gmra.mxu0 %v1532
        %v2229 = vpop.f32.mrf.mxu0
        %v2230 = vadd.f32 %v1645, %v2229
        %v2231 = vpop.f32.mrf.mxu0
        %v2232 = vadd.f32 %v1649, %v2231
        %v2233 = vpop.f32.mrf.mxu0
        %v2234 = vadd.f32 %v1645, %v2233
        %v2235 = vpop.f32.mrf.mxu0
        %v2236 = vadd.f32 %v1649, %v2235
        %2237 = vmatprep.mubr.bf16.mxu0 %v1535
        %2238 = vmatmul.mubr.bf16.gmra.mxu0 %v1534
        %v2239 = vpop.f32.mrf.mxu0
        %v2240 = vadd.f32 %v1645, %v2239
        %v2241 = vpop.f32.mrf.mxu0
        %v2242 = vadd.f32 %v1649, %v2241
        %v2243 = vpop.f32.mrf.mxu0
        %v2244 = vpop.f32.mrf.mxu0
        %2245 = vdwg.mxu0
        %2246 = vmatprep.subr.bf16.mxu0 %v1999
        %2247 = vmatpush1.bf16.msra.mxu0 %v1998
        %2248 = vmatprep.subr.bf16.mxu0 %v1993
        %2249 = vmatpush1.bf16.msra.mxu0 %v1992
        %2250 = vmatprep.subr.bf16.mxu0 %v1987
        %2251 = vmatpush1.bf16.msra.mxu0 %v1986
        %2252 = vmatprep.subr.bf16.mxu0 %v1981
        %2253 = vmatpush1.bf16.msra.mxu0 %v1980
        %2254 = vmatprep.subr.bf16.mxu0 %v1975
        %2255 = vmatpush1.bf16.msra.mxu0 %v1974
        %2256 = vmatprep.subr.bf16.mxu0 %v1969
        %2257 = vmatpush1.bf16.msra.mxu0 %v1968
        %2258 = vmatprep.subr.bf16.mxu0 %v1963
        %2259 = vmatpush1.bf16.msra.mxu0 %v1962
        %2260 = vmatprep.subr.bf16.mxu0 %v1957
        %2261 = vmatpush1.bf16.msra.mxu0 %v1956
        %2262 = vmatprep.subr.bf16.mxu0 %v2047
        %2263 = vmatpush2.bf16.msra.mxu0 %v2046
        %2264 = vmatprep.subr.bf16.mxu0 %v2041
        %2265 = vmatpush2.bf16.msra.mxu0 %v2040
        %2266 = vmatprep.subr.bf16.mxu0 %v2035
        %2267 = vmatpush2.bf16.msra.mxu0 %v2034
        %2268 = vmatprep.subr.bf16.mxu0 %v2029
        %2269 = vmatpush2.bf16.msra.mxu0 %v2028
        %2270 = vmatprep.subr.bf16.mxu0 %v2023
        %2271 = vmatpush2.bf16.msra.mxu0 %v2022
        %2272 = vmatprep.subr.bf16.mxu0 %v2017
        %2273 = vmatpush2.bf16.msra.mxu0 %v2016
        %2274 = vmatprep.subr.bf16.mxu0 %v2011
        %2275 = vmatpush2.bf16.msra.mxu0 %v2010
        %2276 = vmatprep.subr.bf16.mxu0 %v2005
        %2277 = vmatpush2.bf16.msra.mxu0 %v2004
        %2278 = vmatprep.mubr.bf16.mxu0 %v1533
        %2279 = vmatmul.mubr.bf16.gmra.mxu0 %v1532
        %v2280 = vpop.f32.mrf.mxu0
        %v2281 = vadd.f32 %v1653, %v2280
        %v2282 = vpop.f32.mrf.mxu0
        %v2283 = vadd.f32 %v1657, %v2282
        %v2284 = vpop.f32.mrf.mxu0
        %v2285 = vadd.f32 %v1653, %v2284
        %v2286 = vpop.f32.mrf.mxu0
        %v2287 = vadd.f32 %v1657, %v2286
        %2288 = vmatprep.mubr.bf16.mxu0 %v1535
        %2289 = vmatmul.mubr.bf16.gmra.mxu0 %v1534
        %v2290 = vpop.f32.mrf.mxu0
        %v2291 = vadd.f32 %v1653, %v2290
        %v2292 = vpop.f32.mrf.mxu0
        %v2293 = vadd.f32 %v1657, %v2292
        %v2294 = vpop.f32.mrf.mxu0
        %v2295 = vpop.f32.mrf.mxu0
        %2296 = vdwg.mxu0
        %v2297 = vpack.c.bf16 %v2183, %v2179
        %v2298 = vpack.c.bf16 %v2185, %v2181
        %v2299 = vpack.c.bf16 %v2234, %v2230
        %v2300 = vpack.c.bf16 %v2236, %v2232
        %v2301 = vpack.c.bf16 %v2285, %v2281
        %v2302 = vpack.c.bf16 %v2287, %v2283
        %v2303 = vpack.c.bf16 %v2189, %v2189
        %v2304 = vpack.c.bf16 %v2191, %v2191
        %v2305 = vpack.c.bf16 %v2240, %v2240
        %v2306 = vpack.c.bf16 %v2242, %v2242
        %v2307 = vpack.c.bf16 %v2291, %v2291
        %v2308 = vpack.c.bf16 %v2293, %v2293
        %2309 = vmatprep.subr.bf16.mxu0 0
        %2310 = vmatpush1.bf16.xpose.msra.mxu0 0
        %2311 = vmatprep.subr.bf16.mxu0 0
        %2312 = vmatpush1.bf16.xpose.msra.mxu0 0
        %2313 = vmatprep.subr.bf16.mxu0 0
        %2314 = vmatpush1.bf16.xpose.msra.mxu0 0
        %2315 = vmatprep.subr.bf16.mxu0 0
        %2316 = vmatpush1.bf16.xpose.msra.mxu0 0
        %2317 = vmatprep.subr.bf16.mxu0 0
        %2318 = vmatpush1.bf16.xpose.msra.mxu0 0
        %2319 = vmatprep.subr.bf16.mxu0 0
        %2320 = vmatpush1.bf16.xpose.msra.mxu0 0
        %2321 = vmatprep.subr.bf16.mxu0 0
        %2322 = vmatpush1.bf16.xpose.msra.mxu0 %v2305
        %2323 = vmatprep.subr.bf16.mxu0 0
        %2324 = vmatpush1.bf16.xpose.msra.mxu0 %v2299
        %2325 = vmatprep.subr.bf16.mxu0 0
        %2326 = vmatpush2.bf16.xpose.msra.mxu0 0
        %2327 = vmatprep.subr.bf16.mxu0 0
        %2328 = vmatpush2.bf16.xpose.msra.mxu0 0
        %2329 = vmatprep.subr.bf16.mxu0 0
        %2330 = vmatpush2.bf16.xpose.msra.mxu0 0
        %2331 = vmatprep.subr.bf16.mxu0 0
        %2332 = vmatpush2.bf16.xpose.msra.mxu0 0
        %2333 = vmatprep.subr.bf16.mxu0 0
        %2334 = vmatpush2.bf16.xpose.msra.mxu0 0
        %2335 = vmatprep.subr.bf16.mxu0 0
        %2336 = vmatpush2.bf16.xpose.msra.mxu0 0
        %2337 = vmatprep.subr.bf16.mxu0 0
        %2338 = vmatpush2.bf16.xpose.msra.mxu0 0
        %2339 = vmatprep.subr.bf16.mxu0 0
        %2340 = vmatpush2.bf16.xpose.msra.mxu0 0
        %2341 = vmatprep.mubr.bf16.mxu0 0
        %2342 = vmatmul.mubr.bf16.gmra.mxu0 %v2297
        %v2343 = vpop.f32.mrf.mxu0
        %v2344 = vadd.f32 0.0, %v2343
        %v2345 = vpop.f32.mrf.mxu0
        %v2346 = vpop.f32.mrf.mxu0
        %v2347 = vadd.f32 0.0, %v2346
        %v2348 = vpop.f32.mrf.mxu0
        %2349 = vmatprep.mubr.bf16.mxu0 0
        %2350 = vmatmul.mubr.bf16.gmra.mxu0 %v2303
        %v2351 = vpop.f32.mrf.mxu0
        %v2352 = vadd.f32 0.0, %v2351
        %v2353 = vpop.f32.mrf.mxu0
        %v2354 = vpop.f32.mrf.mxu0
        %v2355 = vpop.f32.mrf.mxu0
        %2356 = vdwg.mxu0
        %v2357 = vmul.f32 %v2344, 0.088388346
        %v2358 = vmul.f32 %v2347, 0.088388346
        %v2359 = vmul.f32 %v2352, 0.088388346
        %vm2360 = vcmask 138240
        %v2361 = vsel %vm2360, %v2357, -inf
        %2362 = vmax.xlane.f32.xlu0 %v2361
        %v2363 = vpop.xlane.xlu0 %2362
        %v2364 = vsel %vm2360, %v2358, -inf
        %2365 = vmax.xlane.f32.xlu0 %v2364
        %v2366 = vpop.xlane.xlu0 %2365
        %vm2367 = vcmask 131072
        %v2368 = vsel %vm2367, %v2359, -inf
        %2369 = vmax.xlane.f32.xlu0 %v2368
        %v2370 = vpop.xlane.xlu0 %2369
        %v2371 = vsub.f32 %v2357, %v2363
        %v2372 = vsub.f32 %v2358, %v2366
        %v2373 = vsub.f32 %v2359, %v2370
        %v2374 = vmul.f32 %v2371, 1.442695
        %v2375 = vpow.pop %v2374
        %v2376 = vmul.f32 %v2372, 1.442695
        %v2377 = vpow.pop %v2376
        %v2378 = vmul.f32 %v2373, 1.442695
        %v2379 = vpow.pop %v2378
        %v2380 = vsel %vm2360, %v2375, 0.0
        %2381 = vadd.xlane.f32.xlu0 %v2380
        %v2382 = vpop.xlane.xlu0 %2381
        %v2383 = vsel %vm2360, %v2377, 0.0
        %2384 = vadd.xlane.f32.xlu0 %v2383
        %v2385 = vpop.xlane.xlu0 %2384
        %v2386 = vsel %vm2367, %v2379, 0.0
        %2387 = vadd.xlane.f32.xlu0 %v2386
        %v2388 = vpop.xlane.xlu0 %2387
        %v2389 = vrcp.pop %v2382
        %v2390 = vrcp.pop %v2385
        %v2391 = vrcp.pop %v2388
        %v2392 = vmul.f32 %v2375, %v2389
        %v2393 = vmul.f32 %v2377, %v2390
        %v2394 = vmul.f32 %v2379, %v2391
        %v2395 = vpack.c.bf16 %v2393, %v2392
        %v2396 = vpack.c.bf16 %v2394, %v2394
        %v2398 = vsel %vm2360, %v2395, 0
        %v2401 = vsel %vm2360, %v2396, 0
        %v2403 = vsel 0, 4294967295, 65535
        %v2404 = vsel %vm1450, %v2403, 0
        %v2406 = vand.u32 %v2307, %v2404
        %2408 = vmatprep.subr.bf16.mxu0 0
        %2409 = vmatpush1.bf16.msra.mxu0 0
        %2410 = vmatprep.subr.bf16.mxu0 0
        %2411 = vmatpush1.bf16.msra.mxu0 0
        %2412 = vmatprep.subr.bf16.mxu0 0
        %2413 = vmatpush1.bf16.msra.mxu0 0
        %2414 = vmatprep.subr.bf16.mxu0 0
        %2415 = vmatpush1.bf16.msra.mxu0 0
        %2416 = vmatprep.subr.bf16.mxu0 0
        %2417 = vmatpush1.bf16.msra.mxu0 0
        %2418 = vmatprep.subr.bf16.mxu0 0
        %2419 = vmatpush1.bf16.msra.mxu0 0
        %2420 = vmatprep.subr.bf16.mxu0 0
        %2421 = vmatpush1.bf16.msra.mxu0 %v2406
        %2422 = vmatprep.subr.bf16.mxu0 0
        %2423 = vmatpush1.bf16.msra.mxu0 %v2301
        %2424 = vmatprep.subr.bf16.mxu0 0
        %2425 = vmatpush2.bf16.msra.mxu0 0
        %2426 = vmatprep.subr.bf16.mxu0 0
        %2427 = vmatpush2.bf16.msra.mxu0 0
        %2428 = vmatprep.subr.bf16.mxu0 0
        %2429 = vmatpush2.bf16.msra.mxu0 0
        %2430 = vmatprep.subr.bf16.mxu0 0
        %2431 = vmatpush2.bf16.msra.mxu0 0
        %2432 = vmatprep.subr.bf16.mxu0 0
        %2433 = vmatpush2.bf16.msra.mxu0 0
        %2434 = vmatprep.subr.bf16.mxu0 0
        %2435 = vmatpush2.bf16.msra.mxu0 0
        %2436 = vmatprep.subr.bf16.mxu0 0
        %2437 = vmatpush2.bf16.msra.mxu0 0
        %2438 = vmatprep.subr.bf16.mxu0 0
        %2439 = vmatpush2.bf16.msra.mxu0 0
        %2440 = vmatprep.mubr.bf16.mxu0 0
        %2441 = vmatmul.mubr.bf16.gmra.mxu0 %v2398
        %v2442 = vpop.f32.mrf.mxu0
        %v2443 = vadd.f32 0.0, %v2442
        %v2444 = vpop.f32.mrf.mxu0
        %v2445 = vpop.f32.mrf.mxu0
        %v2446 = vadd.f32 0.0, %v2445
        %v2447 = vpop.f32.mrf.mxu0
        %2448 = vmatprep.mubr.bf16.mxu0 0
        %2449 = vmatmul.mubr.bf16.gmra.mxu0 %v2401
        %v2450 = vpop.f32.mrf.mxu0
        %v2451 = vadd.f32 0.0, %v2450
        %v2452 = vpop.f32.mrf.mxu0
        %v2453 = vpop.f32.mrf.mxu0
        %v2454 = vpop.f32.mrf.mxu0
        %2455 = vdwg.mxu0
        %v2456 = vpack.c.bf16 %v2446, %v2443
        %v2457 = vpack.c.bf16 %v2451, %v2451
        %v2460 = vunpack.c.l.b16 %v2456
        %v2461 = vunpack.c.h.b16 %v2456
        %v2462 = vunpack.c.l.b16 %v2457
        %v2463 = vpack.c.b16 %v2460, %v2460
        %v2464 = vpack.c.b16 %v2461, %v2461
        %v2465 = vpack.c.b16 %v2462, %v2462
        %2469 = vst [vmem:[#allocation3] sm:$0xf] %v2463
        %2470 = vst [vmem:[#allocation3 + $0x8] sm:$0xf] %v2464
        %vm2471 = vcmask 1040384
        %vm2472 = vsmask.f32 256
        %vm2473 = vmand %vm2471, %vm2472
        %v2474 = vld [vmem:[#allocation3 + $0x10] sm:$0x1]
        %v2475 = vsel %vm2473, %v2465, %v2474
        %2476 = vst [vmem:[#allocation3 + $0x10] sm:$0x1] %v2475
        %2477 = vmatprep.subr.bf16.mxu0 0
        %2478 = vmatpush1.bf16.xpose.msra.mxu0 0
        %2479 = vmatprep.subr.bf16.mxu0 0
        %2480 = vmatpush1.bf16.xpose.msra.mxu0 0
        %2481 = vmatprep.subr.bf16.mxu0 0
        %2482 = vmatpush1.bf16.xpose.msra.mxu0 0
        %2483 = vmatprep.subr.bf16.mxu0 0
        %2484 = vmatpush1.bf16.xpose.msra.mxu0 0
        %2485 = vmatprep.subr.bf16.mxu0 0
        %2486 = vmatpush1.bf16.xpose.msra.mxu0 0
        %2487 = vmatprep.subr.bf16.mxu0 0
        %2488 = vmatpush1.bf16.xpose.msra.mxu0 0
        %2489 = vmatprep.subr.bf16.mxu0 0
        %2490 = vmatpush1.bf16.xpose.msra.mxu0 %v2306
        %2491 = vmatprep.subr.bf16.mxu0 0
        %2492 = vmatpush1.bf16.xpose.msra.mxu0 %v2300
        %2493 = vmatprep.subr.bf16.mxu0 0
        %2494 = vmatpush2.bf16.xpose.msra.mxu0 0
        %2495 = vmatprep.subr.bf16.mxu0 0
        %2496 = vmatpush2.bf16.xpose.msra.mxu0 0
        %2497 = vmatprep.subr.bf16.mxu0 0
        %2498 = vmatpush2.bf16.xpose.msra.mxu0 0
        %2499 = vmatprep.subr.bf16.mxu0 0
        %2500 = vmatpush2.bf16.xpose.msra.mxu0 0
        %2501 = vmatprep.subr.bf16.mxu0 0
        %2502 = vmatpush2.bf16.xpose.msra.mxu0 0
        %2503 = vmatprep.subr.bf16.mxu0 0
        %2504 = vmatpush2.bf16.xpose.msra.mxu0 0
        %2505 = vmatprep.subr.bf16.mxu0 0
        %2506 = vmatpush2.bf16.xpose.msra.mxu0 0
        %2507 = vmatprep.subr.bf16.mxu0 0
        %2508 = vmatpush2.bf16.xpose.msra.mxu0 0
        %2509 = vmatprep.mubr.bf16.mxu0 0
        %2510 = vmatmul.mubr.bf16.gmra.mxu0 %v2298
        %v2511 = vpop.f32.mrf.mxu0
        %v2512 = vadd.f32 0.0, %v2511
        %v2513 = vpop.f32.mrf.mxu0
        %v2514 = vpop.f32.mrf.mxu0
        %v2515 = vadd.f32 0.0, %v2514
        %v2516 = vpop.f32.mrf.mxu0
        %2517 = vmatprep.mubr.bf16.mxu0 0
        %2518 = vmatmul.mubr.bf16.gmra.mxu0 %v2304
        %v2519 = vpop.f32.mrf.mxu0
        %v2520 = vadd.f32 0.0, %v2519
        %v2521 = vpop.f32.mrf.mxu0
        %v2522 = vpop.f32.mrf.mxu0
        %v2523 = vpop.f32.mrf.mxu0
        %2524 = vdwg.mxu0
        %v2525 = vmul.f32 %v2512, 0.088388346
        %v2526 = vmul.f32 %v2515, 0.088388346
        %v2527 = vmul.f32 %v2520, 0.088388346
        %v2528 = vsel %vm2360, %v2525, -inf
        %2529 = vmax.xlane.f32.xlu0 %v2528
        %v2530 = vpop.xlane.xlu0 %2529
        %v2531 = vsel %vm2360, %v2526, -inf
        %2532 = vmax.xlane.f32.xlu0 %v2531
        %v2533 = vpop.xlane.xlu0 %2532
        %v2534 = vsel %vm2367, %v2527, -inf
        %2535 = vmax.xlane.f32.xlu0 %v2534
        %v2536 = vpop.xlane.xlu0 %2535
        %v2537 = vsub.f32 %v2525, %v2530
        %v2538 = vsub.f32 %v2526, %v2533
        %v2539 = vsub.f32 %v2527, %v2536
        %v2540 = vmul.f32 %v2537, 1.442695
        %v2541 = vpow.pop %v2540
        %v2542 = vmul.f32 %v2538, 1.442695
        %v2543 = vpow.pop %v2542
        %v2544 = vmul.f32 %v2539, 1.442695
        %v2545 = vpow.pop %v2544
        %v2546 = vsel %vm2360, %v2541, 0.0
        %2547 = vadd.xlane.f32.xlu0 %v2546
        %v2548 = vpop.xlane.xlu0 %2547
        %v2549 = vsel %vm2360, %v2543, 0.0
        %2550 = vadd.xlane.f32.xlu0 %v2549
        %v2551 = vpop.xlane.xlu0 %2550
        %v2552 = vsel %vm2367, %v2545, 0.0
        %2553 = vadd.xlane.f32.xlu0 %v2552
        %v2554 = vpop.xlane.xlu0 %2553
        %v2555 = vrcp.pop %v2548
        %v2556 = vrcp.pop %v2551
        %v2557 = vrcp.pop %v2554
        %v2558 = vmul.f32 %v2541, %v2555
        %v2559 = vmul.f32 %v2543, %v2556
        %v2560 = vmul.f32 %v2545, %v2557
        %v2561 = vpack.c.bf16 %v2559, %v2558
        %v2562 = vpack.c.bf16 %v2560, %v2560
        %v2564 = vsel %vm2360, %v2561, 0
        %v2567 = vsel %vm2360, %v2562, 0
        %v2570 = vand.u32 %v2308, %v2404
        %2572 = vmatprep.subr.bf16.mxu0 0
        %2573 = vmatpush1.bf16.msra.mxu0 0
        %2574 = vmatprep.subr.bf16.mxu0 0
        %2575 = vmatpush1.bf16.msra.mxu0 0
        %2576 = vmatprep.subr.bf16.mxu0 0
        %2577 = vmatpush1.bf16.msra.mxu0 0
        %2578 = vmatprep.subr.bf16.mxu0 0
        %2579 = vmatpush1.bf16.msra.mxu0 0
        %2580 = vmatprep.subr.bf16.mxu0 0
        %2581 = vmatpush1.bf16.msra.mxu0 0
        %2582 = vmatprep.subr.bf16.mxu0 0
        %2583 = vmatpush1.bf16.msra.mxu0 0
        %2584 = vmatprep.subr.bf16.mxu0 0
        %2585 = vmatpush1.bf16.msra.mxu0 %v2570
        %2586 = vmatprep.subr.bf16.mxu0 0
        %2587 = vmatpush1.bf16.msra.mxu0 %v2302
        %2588 = vmatprep.subr.bf16.mxu0 0
        %2589 = vmatpush2.bf16.msra.mxu0 0
        %2590 = vmatprep.subr.bf16.mxu0 0
        %2591 = vmatpush2.bf16.msra.mxu0 0
        %2592 = vmatprep.subr.bf16.mxu0 0
        %2593 = vmatpush2.bf16.msra.mxu0 0
        %2594 = vmatprep.subr.bf16.mxu0 0
        %2595 = vmatpush2.bf16.msra.mxu0 0
        %2596 = vmatprep.subr.bf16.mxu0 0
        %2597 = vmatpush2.bf16.msra.mxu0 0
        %2598 = vmatprep.subr.bf16.mxu0 0
        %2599 = vmatpush2.bf16.msra.mxu0 0
        %2600 = vmatprep.subr.bf16.mxu0 0
        %2601 = vmatpush2.bf16.msra.mxu0 0
        %2602 = vmatprep.subr.bf16.mxu0 0
        %2603 = vmatpush2.bf16.msra.mxu0 0
        %2604 = vmatprep.mubr.bf16.mxu0 0
        %2605 = vmatmul.mubr.bf16.gmra.mxu0 %v2564
        %v2606 = vpop.f32.mrf.mxu0
        %v2607 = vadd.f32 0.0, %v2606
        %v2608 = vpop.f32.mrf.mxu0
        %v2609 = vpop.f32.mrf.mxu0
        %v2610 = vadd.f32 0.0, %v2609
        %v2611 = vpop.f32.mrf.mxu0
        %2612 = vmatprep.mubr.bf16.mxu0 0
        %2613 = vmatmul.mubr.bf16.gmra.mxu0 %v2567
        %v2614 = vpop.f32.mrf.mxu0
        %v2615 = vadd.f32 0.0, %v2614
        %v2616 = vpop.f32.mrf.mxu0
        %v2617 = vpop.f32.mrf.mxu0
        %v2618 = vpop.f32.mrf.mxu0
        %2619 = vdwg.mxu0
        %v2620 = vpack.c.bf16 %v2610, %v2607
        %v2621 = vpack.c.bf16 %v2615, %v2615
        %v2624 = vunpack.c.l.b16 %v2620
        %v2625 = vunpack.c.h.b16 %v2620
        %v2626 = vunpack.c.l.b16 %v2621
        %v2627 = vpack.c.b16 %v2624, %v2624
        %v2628 = vpack.c.b16 %v2625, %v2625
        %v2629 = vpack.c.b16 %v2626, %v2626
        %2633 = vst [vmem:[#allocation3 + $0x4] sm:$0xf] %v2627
        %2634 = vst [vmem:[#allocation3 + $0xc] sm:$0xf] %v2628
        %v2635 = vld [vmem:[#allocation3 + $0x14] sm:$0x1]
        %v2636 = vsel %vm2473, %v2629, %v2635
        %2637 = vst [vmem:[#allocation3 + $0x14] sm:$0x1] %v2636
        %v2638 = vld [vmem:[#allocation3] sm:$0xff]
        %v2639 = vld [vmem:[#allocation3 + $0x8] sm:$0xff]
        %v2640 = vld [vmem:[#allocation3 + $0x10] sm:$0x11]
        %v2641 = vld [vmem:[%s1104] sm:$0xff]
        %v2642 = vld [vmem:[%s1104 + $0x8] sm:$0xff]
        %v2643 = vld [vmem:[%s1104 + $0x10] sm:$0xff]
        %v2644 = vld [vmem:[%s1104 + $0x18] sm:$0xff]
        %v2645 = vld [vmem:[%s1104 + $0x20] sm:$0xff]
        %v2646 = vld [vmem:[%s1104 + $0x28] sm:$0xff]
        %v2647 = vld [vmem:[%s1104 + $0x30] sm:$0xff]
        %v2648 = vld [vmem:[%s1104 + $0x38] sm:$0xff]
        %v2649 = vld [vmem:[%s1104 + $0x40] sm:$0xff]
        %v2650 = vld [vmem:[%s1104 + $0x48] sm:$0xff]
        %v2651 = vld [vmem:[%s1104 + $0x50] sm:$0xff]
        %v2652 = vld [vmem:[%s1104 + $0x58] sm:$0xff]
        %v2653 = vld [vmem:[%s1104 + $0x60] sm:$0xff]
        %v2654 = vld [vmem:[%s1104 + $0x68] sm:$0xff]
        %v2655 = vld [vmem:[%s1104 + $0x70] sm:$0xff]
        %v2656 = vld [vmem:[%s1104 + $0x78] sm:$0xff]
        %v2657 = vld [vmem:[%s1104 + $0x80] sm:$0xff]
        %v2658 = vld [vmem:[%s1104 + $0x88] sm:$0xff]
        %v2659 = vld [vmem:[%s1104 + $0x90] sm:$0xff]
        %v2660 = vld [vmem:[%s1104 + $0x98] sm:$0xff]
        %v2661 = vld [vmem:[%s1104 + $0xa0] sm:$0xff]
        %v2662 = vld [vmem:[%s1104 + $0xa8] sm:$0xff]
        %v2663 = vld [vmem:[%s1104 + $0xb0] sm:$0xff]
        %v2664 = vld [vmem:[%s1104 + $0xb8] sm:$0xff]
        %v2665 = vld [vmem:[%s1104 + $0xc0] sm:$0xff]
        %v2666 = vld [vmem:[%s1104 + $0xc8] sm:$0xff]
        %v2667 = vld [vmem:[%s1104 + $0xd0] sm:$0xff]
        %v2668 = vld [vmem:[%s1104 + $0xd8] sm:$0xff]
        %v2669 = vld [vmem:[%s1104 + $0xe0] sm:$0xff]
        %v2670 = vld [vmem:[%s1104 + $0xe8] sm:$0xff]
        %v2671 = vld [vmem:[%s1104 + $0xf0] sm:$0xff]
        %v2672 = vld [vmem:[%s1104 + $0xf8] sm:$0xff]
        %v2673 = vld [vmem:[%s918] sm:$0x3]
        %v2675 = vlaneseq
        %v2676 = vshrl.u32 %v2675, 7
        %v2677 = vsub.s32 0, %v2676
        %v2678 = vrot.slane %v2673, %v2677
        %v2679 = vlaneseq
        %v2680 = vshrl.u32 %v2679, 7
        %v2681 = vsub.s32 1, %v2680
        %v2682 = vrot.slane %v2673, %v2681
        %v2688 = vunpack.c.l.b16 %v2638
        %v2689 = vunpack.c.h.b16 %v2638
        %v2690 = vunpack.c.l.b16 %v2639
        %v2691 = vunpack.c.h.b16 %v2639
        %v2692 = vunpack.c.l.b16 %v2640
        %v2693 = vunpack.c.h.b16 %v2640
        %v2694 = vpack.c.b16 %v2690, %v2688
        %v2695 = vpack.c.b16 %v2691, %v2689
        %v2696 = vpack.c.b16 %v2692, %v2692
        %v2697 = vpack.c.b16 %v2693, %v2693
        %v2734 = vunpack.c.l.b16 %v2641
        %v2735 = vunpack.c.h.b16 %v2641
        %v2736 = vunpack.c.l.b16 %v2642
        %v2737 = vunpack.c.h.b16 %v2642
        %v2738 = vunpack.c.l.b16 %v2643
        %v2739 = vunpack.c.h.b16 %v2643
        %v2740 = vunpack.c.l.b16 %v2644
        %v2741 = vunpack.c.h.b16 %v2644
        %v2742 = vunpack.c.l.b16 %v2645
        %v2743 = vunpack.c.h.b16 %v2645
        %v2744 = vunpack.c.l.b16 %v2646
        %v2745 = vunpack.c.h.b16 %v2646
        %v2746 = vunpack.c.l.b16 %v2647
        %v2747 = vunpack.c.h.b16 %v2647
        %v2748 = vunpack.c.l.b16 %v2648
        %v2749 = vunpack.c.h.b16 %v2648
        %v2750 = vunpack.c.l.b16 %v2649
        %v2751 = vunpack.c.h.b16 %v2649
        %v2752 = vunpack.c.l.b16 %v2650
        %v2753 = vunpack.c.h.b16 %v2650
        %v2754 = vunpack.c.l.b16 %v2651
        %v2755 = vunpack.c.h.b16 %v2651
        %v2756 = vunpack.c.l.b16 %v2652
        %v2757 = vunpack.c.h.b16 %v2652
        %v2758 = vunpack.c.l.b16 %v2653
        %v2759 = vunpack.c.h.b16 %v2653
        %v2760 = vunpack.c.l.b16 %v2654
        %v2761 = vunpack.c.h.b16 %v2654
        %v2762 = vunpack.c.l.b16 %v2655
        %v2763 = vunpack.c.h.b16 %v2655
        %v2764 = vunpack.c.l.b16 %v2656
        %v2765 = vunpack.c.h.b16 %v2656
        %v2766 = vunpack.c.l.b16 %v2657
        %v2767 = vunpack.c.h.b16 %v2657
        %v2768 = vunpack.c.l.b16 %v2658
        %v2769 = vunpack.c.h.b16 %v2658
        %v2770 = vunpack.c.l.b16 %v2659
        %v2771 = vunpack.c.h.b16 %v2659
        %v2772 = vunpack.c.l.b16 %v2660
        %v2773 = vunpack.c.h.b16 %v2660
        %v2774 = vunpack.c.l.b16 %v2661
        %v2775 = vunpack.c.h.b16 %v2661
        %v2776 = vunpack.c.l.b16 %v2662
        %v2777 = vunpack.c.h.b16 %v2662
        %v2778 = vunpack.c.l.b16 %v2663
        %v2779 = vunpack.c.h.b16 %v2663
        %v2780 = vunpack.c.l.b16 %v2664
        %v2781 = vunpack.c.h.b16 %v2664
        %v2782 = vunpack.c.l.b16 %v2665
        %v2783 = vunpack.c.h.b16 %v2665
        %v2784 = vunpack.c.l.b16 %v2666
        %v2785 = vunpack.c.h.b16 %v2666
        %v2786 = vunpack.c.l.b16 %v2667
        %v2787 = vunpack.c.h.b16 %v2667
        %v2788 = vunpack.c.l.b16 %v2668
        %v2789 = vunpack.c.h.b16 %v2668
        %v2790 = vunpack.c.l.b16 %v2669
        %v2791 = vunpack.c.h.b16 %v2669
        %v2792 = vunpack.c.l.b16 %v2670
        %v2793 = vunpack.c.h.b16 %v2670
        %v2794 = vunpack.c.l.b16 %v2671
        %v2795 = vunpack.c.h.b16 %v2671
        %v2796 = vunpack.c.l.b16 %v2672
        %v2797 = vunpack.c.h.b16 %v2672
        %v2798 = vpack.c.b16 %v2736, %v2734
        %v2799 = vpack.c.b16 %v2737, %v2735
        %v2800 = vpack.c.b16 %v2740, %v2738
        %v2801 = vpack.c.b16 %v2741, %v2739
        %v2802 = vpack.c.b16 %v2744, %v2742
        %v2803 = vpack.c.b16 %v2745, %v2743
        %v2804 = vpack.c.b16 %v2748, %v2746
        %v2805 = vpack.c.b16 %v2749, %v2747
        %v2806 = vpack.c.b16 %v2752, %v2750
        %v2807 = vpack.c.b16 %v2753, %v2751
        %v2808 = vpack.c.b16 %v2756, %v2754
        %v2809 = vpack.c.b16 %v2757, %v2755
        %v2810 = vpack.c.b16 %v2760, %v2758
        %v2811 = vpack.c.b16 %v2761, %v2759
        %v2812 = vpack.c.b16 %v2764, %v2762
        %v2813 = vpack.c.b16 %v2765, %v2763
        %v2814 = vpack.c.b16 %v2768, %v2766
        %v2815 = vpack.c.b16 %v2769, %v2767
        %v2816 = vpack.c.b16 %v2772, %v2770
        %v2817 = vpack.c.b16 %v2773, %v2771
        %v2818 = vpack.c.b16 %v2776, %v2774
        %v2819 = vpack.c.b16 %v2777, %v2775
        %v2820 = vpack.c.b16 %v2780, %v2778
        %v2821 = vpack.c.b16 %v2781, %v2779
        %v2822 = vpack.c.b16 %v2784, %v2782
        %v2823 = vpack.c.b16 %v2785, %v2783
        %v2824 = vpack.c.b16 %v2788, %v2786
        %v2825 = vpack.c.b16 %v2789, %v2787
        %v2826 = vpack.c.b16 %v2792, %v2790
        %v2827 = vpack.c.b16 %v2793, %v2791
        %v2828 = vpack.c.b16 %v2796, %v2794
        %v2829 = vpack.c.b16 %v2797, %v2795
        %2862 = vmatprep.subr.bf16.mxu0 %v2813
        %2863 = vmatpush1.bf16.msra.mxu0 %v2812
        %2864 = vmatprep.subr.bf16.mxu0 %v2811
        %2865 = vmatpush1.bf16.msra.mxu0 %v2810
        %2866 = vmatprep.subr.bf16.mxu0 %v2809
        %2867 = vmatpush1.bf16.msra.mxu0 %v2808
        %2868 = vmatprep.subr.bf16.mxu0 %v2807
        %2869 = vmatpush1.bf16.msra.mxu0 %v2806
        %2870 = vmatprep.subr.bf16.mxu0 %v2805
        %2871 = vmatpush1.bf16.msra.mxu0 %v2804
        %2872 = vmatprep.subr.bf16.mxu0 %v2803
        %2873 = vmatpush1.bf16.msra.mxu0 %v2802
        %2874 = vmatprep.subr.bf16.mxu0 %v2801
        %2875 = vmatpush1.bf16.msra.mxu0 %v2800
        %2876 = vmatprep.subr.bf16.mxu0 %v2799
        %2877 = vmatpush1.bf16.msra.mxu0 %v2798
        %2878 = vmatprep.subr.bf16.mxu0 %v2829
        %2879 = vmatpush2.bf16.msra.mxu0 %v2828
        %2880 = vmatprep.subr.bf16.mxu0 %v2827
        %2881 = vmatpush2.bf16.msra.mxu0 %v2826
        %2882 = vmatprep.subr.bf16.mxu0 %v2825
        %2883 = vmatpush2.bf16.msra.mxu0 %v2824
        %2884 = vmatprep.subr.bf16.mxu0 %v2823
        %2885 = vmatpush2.bf16.msra.mxu0 %v2822
        %2886 = vmatprep.subr.bf16.mxu0 %v2821
        %2887 = vmatpush2.bf16.msra.mxu0 %v2820
        %2888 = vmatprep.subr.bf16.mxu0 %v2819
        %2889 = vmatpush2.bf16.msra.mxu0 %v2818
        %2890 = vmatprep.subr.bf16.mxu0 %v2817
        %2891 = vmatpush2.bf16.msra.mxu0 %v2816
        %2892 = vmatprep.subr.bf16.mxu0 %v2815
        %2893 = vmatpush2.bf16.msra.mxu0 %v2814
        %2894 = vmatprep.mubr.bf16.mxu0 %v2695
        %2895 = vmatmul.mubr.bf16.gmra.mxu0 %v2694
        %v2896 = vpop.f32.mrf.mxu0
        %v2897 = vadd.f32 %v2678, %v2896
        %v2898 = vpop.f32.mrf.mxu0
        %v2899 = vadd.f32 %v2682, %v2898
        %v2900 = vpop.f32.mrf.mxu0
        %v2901 = vadd.f32 %v2678, %v2900
        %v2902 = vpop.f32.mrf.mxu0
        %v2903 = vadd.f32 %v2682, %v2902
        %2904 = vmatprep.mubr.bf16.mxu0 %v2697
        %2905 = vmatmul.mubr.bf16.gmra.mxu0 %v2696
        %v2906 = vpop.f32.mrf.mxu0
        %v2907 = vadd.f32 %v2678, %v2906
        %v2908 = vpop.f32.mrf.mxu0
        %v2909 = vadd.f32 %v2682, %v2908
        %v2910 = vpop.f32.mrf.mxu0
        %v2911 = vpop.f32.mrf.mxu0
        %2912 = vdwg.mxu0
        %v2913 = vadd.f32 %v1436, %v2897
        %v2914 = vadd.f32 %v1437, %v2899
        %v2915 = vadd.f32 %v1438, %v2901
        %v2916 = vadd.f32 %v1439, %v2903
        %v2917 = vadd.f32 %v1440, %v2907
        %v2918 = vadd.f32 %v1441, %v2909
        %v2919 = vld [vmem:[%s927] sm:$0x3]
        %v2920 = vld [vmem:[%s936] sm:$0x3]
        %v2921 = vadd.f32 %v2913, %v2914
        %2922 = vadd.xlane.f32.xlu0 %v2921
        %v2923 = vpop.xlane.xlu0 %2922
        %v2924 = vadd.f32 %v2915, %v2916
        %2925 = vadd.xlane.f32.xlu0 %v2924
        %v2926 = vpop.xlane.xlu0 %2925
        %v2927 = vsel %vm1450, %v2917, 0.0
        %v2928 = vsel %vm1450, %v2918, 0.0
        %v2929 = vadd.f32 %v2927, %v2928
        %2930 = vadd.xlane.f32.xlu0 %v2929
        %v2931 = vpop.xlane.xlu0 %2930
        %v2932 = vmul.f32 %v2923, %v1456
        %v2933 = vmul.f32 %v2926, %v1456
        %v2934 = vmul.f32 %v2931, %v1456
        %v2935 = vsub.f32 %v2913, %v2932
        %v2936 = vsub.f32 %v2914, %v2932
        %v2937 = vsub.f32 %v2915, %v2933
        %v2938 = vsub.f32 %v2916, %v2933
        %v2939 = vsub.f32 %v2917, %v2934
        %v2940 = vsub.f32 %v2918, %v2934
        %v2941 = vmul.f32 %v2935, %v2935
        %v2942 = vmul.f32 %v2936, %v2936
        %v2943 = vmul.f32 %v2937, %v2937
        %v2944 = vmul.f32 %v2938, %v2938
        %v2945 = vmul.f32 %v2939, %v2939
        %v2946 = vmul.f32 %v2940, %v2940
        %v2947 = vadd.f32 %v2941, %v2942
        %2948 = vadd.xlane.f32.xlu0 %v2947
        %v2949 = vpop.xlane.xlu0 %2948
        %v2950 = vadd.f32 %v2943, %v2944
        %2951 = vadd.xlane.f32.xlu0 %v2950
        %v2952 = vpop.xlane.xlu0 %2951
        %v2953 = vsel %vm1450, %v2945, 0.0
        %v2954 = vsel %vm1450, %v2946, 0.0
        %v2955 = vadd.f32 %v2953, %v2954
        %2956 = vadd.xlane.f32.xlu0 %v2955
        %v2957 = vpop.xlane.xlu0 %2956
        %v2958 = vmul.f32 %v2949, %v1456
        %v2959 = vmul.f32 %v2952, %v1456
        %v2960 = vmul.f32 %v2957, %v1456
        %v2961 = vadd.f32 %v2958, 1e-05
        %v2962 = vadd.f32 %v2959, 1e-05
        %v2963 = vadd.f32 %v2960, 1e-05
        %v2964 = vrsqrt.pop %v2961
        %v2965 = vrsqrt.pop %v2962
        %v2966 = vrsqrt.pop %v2963
        %v2967 = vmul.f32 %v2935, %v2964
        %v2968 = vmul.f32 %v2936, %v2964
        %v2969 = vmul.f32 %v2937, %v2965
        %v2970 = vmul.f32 %v2938, %v2965
        %v2971 = vmul.f32 %v2939, %v2966
        %v2972 = vmul.f32 %v2940, %v2966
        %v2974 = vlaneseq
        %v2975 = vshrl.u32 %v2974, 7
        %v2976 = vsub.s32 0, %v2975
        %v2977 = vrot.slane %v2919, %v2976
        %v2978 = vlaneseq
        %v2979 = vshrl.u32 %v2978, 7
        %v2980 = vsub.s32 1, %v2979
        %v2981 = vrot.slane %v2919, %v2980
        %v2984 = vmul.f32 %v2967, %v2977
        %v2985 = vmul.f32 %v2968, %v2981
        %v2986 = vmul.f32 %v2969, %v2977
        %v2987 = vmul.f32 %v2970, %v2981
        %v2988 = vmul.f32 %v2971, %v2977
        %v2989 = vmul.f32 %v2972, %v2981
        %v2991 = vlaneseq
        %v2992 = vshrl.u32 %v2991, 7
        %v2993 = vsub.s32 0, %v2992
        %v2994 = vrot.slane %v2920, %v2993
        %v2995 = vlaneseq
        %v2996 = vshrl.u32 %v2995, 7
        %v2997 = vsub.s32 1, %v2996
        %v2998 = vrot.slane %v2920, %v2997
        %v3001 = vadd.f32 %v2984, %v2994
        %v3002 = vadd.f32 %v2985, %v2998
        %v3003 = vadd.f32 %v2986, %v2994
        %v3004 = vadd.f32 %v2987, %v2998
        %v3005 = vadd.f32 %v2988, %v2994
        %v3006 = vadd.f32 %v2989, %v2998
        %v3007 = vpack.c.bf16 %v3003, %v3001
        %v3008 = vpack.c.bf16 %v3004, %v3002
        %v3009 = vpack.c.bf16 %v3005, %v3005
        %v3010 = vpack.c.bf16 %v3006, %v3006
        %v3011 = vld [vmem:[%s945] sm:$0xff]
        %v3012 = vld [vmem:[%s945 + $0x8] sm:$0xff]
        %v3013 = vld [vmem:[%s945 + $0x10] sm:$0xff]
        %v3014 = vld [vmem:[%s945 + $0x18] sm:$0xff]
        %v3015 = vld [vmem:[%s945 + $0x20] sm:$0xff]
        %v3016 = vld [vmem:[%s945 + $0x28] sm:$0xff]
        %v3017 = vld [vmem:[%s945 + $0x30] sm:$0xff]
        %v3018 = vld [vmem:[%s945 + $0x38] sm:$0xff]
        %v3019 = vld [vmem:[%s945 + $0x40] sm:$0xff]
        %v3020 = vld [vmem:[%s945 + $0x48] sm:$0xff]
        %v3021 = vld [vmem:[%s945 + $0x50] sm:$0xff]
        %v3022 = vld [vmem:[%s945 + $0x58] sm:$0xff]
        %v3023 = vld [vmem:[%s945 + $0x60] sm:$0xff]
        %v3024 = vld [vmem:[%s945 + $0x68] sm:$0xff]
        %v3025 = vld [vmem:[%s945 + $0x70] sm:$0xff]
        %v3026 = vld [vmem:[%s945 + $0x78] sm:$0xff]
        %v3027 = vld [vmem:[%s945 + $0x80] sm:$0xff]
        %v3028 = vld [vmem:[%s945 + $0x88] sm:$0xff]
        %v3029 = vld [vmem:[%s945 + $0x90] sm:$0xff]
        %v3030 = vld [vmem:[%s945 + $0x98] sm:$0xff]
        %v3031 = vld [vmem:[%s945 + $0xa0] sm:$0xff]
        %v3032 = vld [vmem:[%s945 + $0xa8] sm:$0xff]
        %v3033 = vld [vmem:[%s945 + $0xb0] sm:$0xff]
        %v3034 = vld [vmem:[%s945 + $0xb8] sm:$0xff]
        %v3035 = vld [vmem:[%s945 + $0xc0] sm:$0xff]
        %v3036 = vld [vmem:[%s945 + $0xc8] sm:$0xff]
        %v3037 = vld [vmem:[%s945 + $0xd0] sm:$0xff]
        %v3038 = vld [vmem:[%s945 + $0xd8] sm:$0xff]
        %v3039 = vld [vmem:[%s945 + $0xe0] sm:$0xff]
        %v3040 = vld [vmem:[%s945 + $0xe8] sm:$0xff]
        %v3041 = vld [vmem:[%s945 + $0xf0] sm:$0xff]
        %v3042 = vld [vmem:[%s945 + $0xf8] sm:$0xff]
        %v3043 = vld [vmem:[%s945 + $0x100] sm:$0xff]
        %v3044 = vld [vmem:[%s945 + $0x108] sm:$0xff]
        %v3045 = vld [vmem:[%s945 + $0x110] sm:$0xff]
        %v3046 = vld [vmem:[%s945 + $0x118] sm:$0xff]
        %v3047 = vld [vmem:[%s945 + $0x120] sm:$0xff]
        %v3048 = vld [vmem:[%s945 + $0x128] sm:$0xff]
        %v3049 = vld [vmem:[%s945 + $0x130] sm:$0xff]
        %v3050 = vld [vmem:[%s945 + $0x138] sm:$0xff]
        %v3051 = vld [vmem:[%s945 + $0x140] sm:$0xff]
        %v3052 = vld [vmem:[%s945 + $0x148] sm:$0xff]
        %v3053 = vld [vmem:[%s945 + $0x150] sm:$0xff]
        %v3054 = vld [vmem:[%s945 + $0x158] sm:$0xff]
        %v3055 = vld [vmem:[%s945 + $0x160] sm:$0xff]
        %v3056 = vld [vmem:[%s945 + $0x168] sm:$0xff]
        %v3057 = vld [vmem:[%s945 + $0x170] sm:$0xff]
        %v3058 = vld [vmem:[%s945 + $0x178] sm:$0xff]
        %v3059 = vld [vmem:[%s945 + $0x180] sm:$0xff]
        %v3060 = vld [vmem:[%s945 + $0x188] sm:$0xff]
        %v3061 = vld [vmem:[%s945 + $0x190] sm:$0xff]
        %v3062 = vld [vmem:[%s945 + $0x198] sm:$0xff]
        %v3063 = vld [vmem:[%s945 + $0x1a0] sm:$0xff]
        %v3064 = vld [vmem:[%s945 + $0x1a8] sm:$0xff]
        %v3065 = vld [vmem:[%s945 + $0x1b0] sm:$0xff]
        %v3066 = vld [vmem:[%s945 + $0x1b8] sm:$0xff]
        %v3067 = vld [vmem:[%s945 + $0x1c0] sm:$0xff]
        %v3068 = vld [vmem:[%s945 + $0x1c8] sm:$0xff]
        %v3069 = vld [vmem:[%s945 + $0x1d0] sm:$0xff]
        %v3070 = vld [vmem:[%s945 + $0x1d8] sm:$0xff]
        %v3071 = vld [vmem:[%s945 + $0x1e0] sm:$0xff]
        %v3072 = vld [vmem:[%s945 + $0x1e8] sm:$0xff]
        %v3073 = vld [vmem:[%s945 + $0x1f0] sm:$0xff]
        %v3074 = vld [vmem:[%s945 + $0x1f8] sm:$0xff]
        %v3075 = vld [vmem:[%s945 + $0x200] sm:$0xff]
        %v3076 = vld [vmem:[%s945 + $0x208] sm:$0xff]
        %v3077 = vld [vmem:[%s945 + $0x210] sm:$0xff]
        %v3078 = vld [vmem:[%s945 + $0x218] sm:$0xff]
        %v3079 = vld [vmem:[%s945 + $0x220] sm:$0xff]
        %v3080 = vld [vmem:[%s945 + $0x228] sm:$0xff]
        %v3081 = vld [vmem:[%s945 + $0x230] sm:$0xff]
        %v3082 = vld [vmem:[%s945 + $0x238] sm:$0xff]
        %v3083 = vld [vmem:[%s945 + $0x240] sm:$0xff]
        %v3084 = vld [vmem:[%s945 + $0x248] sm:$0xff]
        %v3085 = vld [vmem:[%s945 + $0x250] sm:$0xff]
        %v3086 = vld [vmem:[%s945 + $0x258] sm:$0xff]
        %v3087 = vld [vmem:[%s945 + $0x260] sm:$0xff]
        %v3088 = vld [vmem:[%s945 + $0x268] sm:$0xff]
        %v3089 = vld [vmem:[%s945 + $0x270] sm:$0xff]
        %v3090 = vld [vmem:[%s945 + $0x278] sm:$0xff]
        %v3091 = vld [vmem:[%s945 + $0x280] sm:$0xff]
        %v3092 = vld [vmem:[%s945 + $0x288] sm:$0xff]
        %v3093 = vld [vmem:[%s945 + $0x290] sm:$0xff]
        %v3094 = vld [vmem:[%s945 + $0x298] sm:$0xff]
        %v3095 = vld [vmem:[%s945 + $0x2a0] sm:$0xff]
        %v3096 = vld [vmem:[%s945 + $0x2a8] sm:$0xff]
        %v3097 = vld [vmem:[%s945 + $0x2b0] sm:$0xff]
        %v3098 = vld [vmem:[%s945 + $0x2b8] sm:$0xff]
        %v3099 = vld [vmem:[%s945 + $0x2c0] sm:$0xff]
        %v3100 = vld [vmem:[%s945 + $0x2c8] sm:$0xff]
        %v3101 = vld [vmem:[%s945 + $0x2d0] sm:$0xff]
        %v3102 = vld [vmem:[%s945 + $0x2d8] sm:$0xff]
        %v3103 = vld [vmem:[%s945 + $0x2e0] sm:$0xff]
        %v3104 = vld [vmem:[%s945 + $0x2e8] sm:$0xff]
        %v3105 = vld [vmem:[%s945 + $0x2f0] sm:$0xff]
        %v3106 = vld [vmem:[%s945 + $0x2f8] sm:$0xff]
        %v3107 = vld [vmem:[%s945 + $0x300] sm:$0xff]
        %v3108 = vld [vmem:[%s945 + $0x308] sm:$0xff]
        %v3109 = vld [vmem:[%s945 + $0x310] sm:$0xff]
        %v3110 = vld [vmem:[%s945 + $0x318] sm:$0xff]
        %v3111 = vld [vmem:[%s945 + $0x320] sm:$0xff]
        %v3112 = vld [vmem:[%s945 + $0x328] sm:$0xff]
        %v3113 = vld [vmem:[%s945 + $0x330] sm:$0xff]
        %v3114 = vld [vmem:[%s945 + $0x338] sm:$0xff]
        %v3115 = vld [vmem:[%s945 + $0x340] sm:$0xff]
        %v3116 = vld [vmem:[%s945 + $0x348] sm:$0xff]
        %v3117 = vld [vmem:[%s945 + $0x350] sm:$0xff]
        %v3118 = vld [vmem:[%s945 + $0x358] sm:$0xff]
        %v3119 = vld [vmem:[%s945 + $0x360] sm:$0xff]
        %v3120 = vld [vmem:[%s945 + $0x368] sm:$0xff]
        %v3121 = vld [vmem:[%s945 + $0x370] sm:$0xff]
        %v3122 = vld [vmem:[%s945 + $0x378] sm:$0xff]
        %v3123 = vld [vmem:[%s945 + $0x380] sm:$0xff]
        %v3124 = vld [vmem:[%s945 + $0x388] sm:$0xff]
        %v3125 = vld [vmem:[%s945 + $0x390] sm:$0xff]
        %v3126 = vld [vmem:[%s945 + $0x398] sm:$0xff]
        %v3127 = vld [vmem:[%s945 + $0x3a0] sm:$0xff]
        %v3128 = vld [vmem:[%s945 + $0x3a8] sm:$0xff]
        %v3129 = vld [vmem:[%s945 + $0x3b0] sm:$0xff]
        %v3130 = vld [vmem:[%s945 + $0x3b8] sm:$0xff]
        %v3131 = vld [vmem:[%s945 + $0x3c0] sm:$0xff]
        %v3132 = vld [vmem:[%s945 + $0x3c8] sm:$0xff]
        %v3133 = vld [vmem:[%s945 + $0x3d0] sm:$0xff]
        %v3134 = vld [vmem:[%s945 + $0x3d8] sm:$0xff]
        %v3135 = vld [vmem:[%s945 + $0x3e0] sm:$0xff]
        %v3136 = vld [vmem:[%s945 + $0x3e8] sm:$0xff]
        %v3137 = vld [vmem:[%s945 + $0x3f0] sm:$0xff]
        %v3138 = vld [vmem:[%s945 + $0x3f8] sm:$0xff]
        %v3139 = vld [vmem:[%s1108] sm:$0xff]
        %v3141 = vlaneseq
        %v3142 = vshrl.u32 %v3141, 7
        %v3143 = vsub.s32 0, %v3142
        %v3144 = vrot.slane %v3139, %v3143
        %v3145 = vlaneseq
        %v3146 = vshrl.u32 %v3145, 7
        %v3147 = vsub.s32 1, %v3146
        %v3148 = vrot.slane %v3139, %v3147
        %v3149 = vlaneseq
        %v3150 = vshrl.u32 %v3149, 7
        %v3151 = vsub.s32 2, %v3150
        %v3152 = vrot.slane %v3139, %v3151
        %v3153 = vlaneseq
        %v3154 = vshrl.u32 %v3153, 7
        %v3155 = vsub.s32 3, %v3154
        %v3156 = vrot.slane %v3139, %v3155
        %v3157 = vlaneseq
        %v3158 = vshrl.u32 %v3157, 7
        %v3159 = vsub.s32 4, %v3158
        %v3160 = vrot.slane %v3139, %v3159
        %v3161 = vlaneseq
        %v3162 = vshrl.u32 %v3161, 7
        %v3163 = vsub.s32 5, %v3162
        %v3164 = vrot.slane %v3139, %v3163
        %v3165 = vlaneseq
        %v3166 = vshrl.u32 %v3165, 7
        %v3167 = vsub.s32 6, %v3166
        %v3168 = vrot.slane %v3139, %v3167
        %v3169 = vlaneseq
        %v3170 = vshrl.u32 %v3169, 7
        %v3171 = vsub.s32 7, %v3170
        %v3172 = vrot.slane %v3139, %v3171
        %v3309 = vunpack.c.l.b16 %v3011
        %v3310 = vunpack.c.h.b16 %v3011
        %v3311 = vunpack.c.l.b16 %v3012
        %v3312 = vunpack.c.h.b16 %v3012
        %v3313 = vunpack.c.l.b16 %v3013
        %v3314 = vunpack.c.h.b16 %v3013
        %v3315 = vunpack.c.l.b16 %v3014
        %v3316 = vunpack.c.h.b16 %v3014
        %v3317 = vunpack.c.l.b16 %v3015
        %v3318 = vunpack.c.h.b16 %v3015
        %v3319 = vunpack.c.l.b16 %v3016
        %v3320 = vunpack.c.h.b16 %v3016
        %v3321 = vunpack.c.l.b16 %v3017
        %v3322 = vunpack.c.h.b16 %v3017
        %v3323 = vunpack.c.l.b16 %v3018
        %v3324 = vunpack.c.h.b16 %v3018
        %v3325 = vunpack.c.l.b16 %v3019
        %v3326 = vunpack.c.h.b16 %v3019
        %v3327 = vunpack.c.l.b16 %v3020
        %v3328 = vunpack.c.h.b16 %v3020
        %v3329 = vunpack.c.l.b16 %v3021
        %v3330 = vunpack.c.h.b16 %v3021
        %v3331 = vunpack.c.l.b16 %v3022
        %v3332 = vunpack.c.h.b16 %v3022
        %v3333 = vunpack.c.l.b16 %v3023
        %v3334 = vunpack.c.h.b16 %v3023
        %v3335 = vunpack.c.l.b16 %v3024
        %v3336 = vunpack.c.h.b16 %v3024
        %v3337 = vunpack.c.l.b16 %v3025
        %v3338 = vunpack.c.h.b16 %v3025
        %v3339 = vunpack.c.l.b16 %v3026
        %v3340 = vunpack.c.h.b16 %v3026
        %v3341 = vunpack.c.l.b16 %v3027
        %v3342 = vunpack.c.h.b16 %v3027
        %v3343 = vunpack.c.l.b16 %v3028
        %v3344 = vunpack.c.h.b16 %v3028
        %v3345 = vunpack.c.l.b16 %v3029
        %v3346 = vunpack.c.h.b16 %v3029
        %v3347 = vunpack.c.l.b16 %v3030
        %v3348 = vunpack.c.h.b16 %v3030
        %v3349 = vunpack.c.l.b16 %v3031
        %v3350 = vunpack.c.h.b16 %v3031
        %v3351 = vunpack.c.l.b16 %v3032
        %v3352 = vunpack.c.h.b16 %v3032
        %v3353 = vunpack.c.l.b16 %v3033
        %v3354 = vunpack.c.h.b16 %v3033
        %v3355 = vunpack.c.l.b16 %v3034
        %v3356 = vunpack.c.h.b16 %v3034
        %v3357 = vunpack.c.l.b16 %v3035
        %v3358 = vunpack.c.h.b16 %v3035
        %v3359 = vunpack.c.l.b16 %v3036
        %v3360 = vunpack.c.h.b16 %v3036
        %v3361 = vunpack.c.l.b16 %v3037
        %v3362 = vunpack.c.h.b16 %v3037
        %v3363 = vunpack.c.l.b16 %v3038
        %v3364 = vunpack.c.h.b16 %v3038
        %v3365 = vunpack.c.l.b16 %v3039
        %v3366 = vunpack.c.h.b16 %v3039
        %v3367 = vunpack.c.l.b16 %v3040
        %v3368 = vunpack.c.h.b16 %v3040
        %v3369 = vunpack.c.l.b16 %v3041
        %v3370 = vunpack.c.h.b16 %v3041
        %v3371 = vunpack.c.l.b16 %v3042
        %v3372 = vunpack.c.h.b16 %v3042
        %v3373 = vunpack.c.l.b16 %v3043
        %v3374 = vunpack.c.h.b16 %v3043
        %v3375 = vunpack.c.l.b16 %v3044
        %v3376 = vunpack.c.h.b16 %v3044
        %v3377 = vunpack.c.l.b16 %v3045
        %v3378 = vunpack.c.h.b16 %v3045
        %v3379 = vunpack.c.l.b16 %v3046
        %v3380 = vunpack.c.h.b16 %v3046
        %v3381 = vunpack.c.l.b16 %v3047
        %v3382 = vunpack.c.h.b16 %v3047
        %v3383 = vunpack.c.l.b16 %v3048
        %v3384 = vunpack.c.h.b16 %v3048
        %v3385 = vunpack.c.l.b16 %v3049
        %v3386 = vunpack.c.h.b16 %v3049
        %v3387 = vunpack.c.l.b16 %v3050
        %v3388 = vunpack.c.h.b16 %v3050
        %v3389 = vunpack.c.l.b16 %v3051
        %v3390 = vunpack.c.h.b16 %v3051
        %v3391 = vunpack.c.l.b16 %v3052
        %v3392 = vunpack.c.h.b16 %v3052
        %v3393 = vunpack.c.l.b16 %v3053
        %v3394 = vunpack.c.h.b16 %v3053
        %v3395 = vunpack.c.l.b16 %v3054
        %v3396 = vunpack.c.h.b16 %v3054
        %v3397 = vunpack.c.l.b16 %v3055
        %v3398 = vunpack.c.h.b16 %v3055
        %v3399 = vunpack.c.l.b16 %v3056
        %v3400 = vunpack.c.h.b16 %v3056
        %v3401 = vunpack.c.l.b16 %v3057
        %v3402 = vunpack.c.h.b16 %v3057
        %v3403 = vunpack.c.l.b16 %v3058
        %v3404 = vunpack.c.h.b16 %v3058
        %v3405 = vunpack.c.l.b16 %v3059
        %v3406 = vunpack.c.h.b16 %v3059
        %v3407 = vunpack.c.l.b16 %v3060
        %v3408 = vunpack.c.h.b16 %v3060
        %v3409 = vunpack.c.l.b16 %v3061
        %v3410 = vunpack.c.h.b16 %v3061
        %v3411 = vunpack.c.l.b16 %v3062
        %v3412 = vunpack.c.h.b16 %v3062
        %v3413 = vunpack.c.l.b16 %v3063
        %v3414 = vunpack.c.h.b16 %v3063
        %v3415 = vunpack.c.l.b16 %v3064
        %v3416 = vunpack.c.h.b16 %v3064
        %v3417 = vunpack.c.l.b16 %v3065
        %v3418 = vunpack.c.h.b16 %v3065
        %v3419 = vunpack.c.l.b16 %v3066
        %v3420 = vunpack.c.h.b16 %v3066
        %v3421 = vunpack.c.l.b16 %v3067
        %v3422 = vunpack.c.h.b16 %v3067
        %v3423 = vunpack.c.l.b16 %v3068
        %v3424 = vunpack.c.h.b16 %v3068
        %v3425 = vunpack.c.l.b16 %v3069
        %v3426 = vunpack.c.h.b16 %v3069
        %v3427 = vunpack.c.l.b16 %v3070
        %v3428 = vunpack.c.h.b16 %v3070
        %v3429 = vunpack.c.l.b16 %v3071
        %v3430 = vunpack.c.h.b16 %v3071
        %v3431 = vunpack.c.l.b16 %v3072
        %v3432 = vunpack.c.h.b16 %v3072
        %v3433 = vunpack.c.l.b16 %v3073
        %v3434 = vunpack.c.h.b16 %v3073
        %v3435 = vunpack.c.l.b16 %v3074
        %v3436 = vunpack.c.h.b16 %v3074
        %v3437 = vunpack.c.l.b16 %v3075
        %v3438 = vunpack.c.h.b16 %v3075
        %v3439 = vunpack.c.l.b16 %v3076
        %v3440 = vunpack.c.h.b16 %v3076
        %v3441 = vunpack.c.l.b16 %v3077
        %v3442 = vunpack.c.h.b16 %v3077
        %v3443 = vunpack.c.l.b16 %v3078
        %v3444 = vunpack.c.h.b16 %v3078
        %v3445 = vunpack.c.l.b16 %v3079
        %v3446 = vunpack.c.h.b16 %v3079
        %v3447 = vunpack.c.l.b16 %v3080
        %v3448 = vunpack.c.h.b16 %v3080
        %v3449 = vunpack.c.l.b16 %v3081
        %v3450 = vunpack.c.h.b16 %v3081
        %v3451 = vunpack.c.l.b16 %v3082
        %v3452 = vunpack.c.h.b16 %v3082
        %v3453 = vunpack.c.l.b16 %v3083
        %v3454 = vunpack.c.h.b16 %v3083
        %v3455 = vunpack.c.l.b16 %v3084
        %v3456 = vunpack.c.h.b16 %v3084
        %v3457 = vunpack.c.l.b16 %v3085
        %v3458 = vunpack.c.h.b16 %v3085
        %v3459 = vunpack.c.l.b16 %v3086
        %v3460 = vunpack.c.h.b16 %v3086
        %v3461 = vunpack.c.l.b16 %v3087
        %v3462 = vunpack.c.h.b16 %v3087
        %v3463 = vunpack.c.l.b16 %v3088
        %v3464 = vunpack.c.h.b16 %v3088
        %v3465 = vunpack.c.l.b16 %v3089
        %v3466 = vunpack.c.h.b16 %v3089
        %v3467 = vunpack.c.l.b16 %v3090
        %v3468 = vunpack.c.h.b16 %v3090
        %v3469 = vunpack.c.l.b16 %v3091
        %v3470 = vunpack.c.h.b16 %v3091
        %v3471 = vunpack.c.l.b16 %v3092
        %v3472 = vunpack.c.h.b16 %v3092
        %v3473 = vunpack.c.l.b16 %v3093
        %v3474 = vunpack.c.h.b16 %v3093
        %v3475 = vunpack.c.l.b16 %v3094
        %v3476 = vunpack.c.h.b16 %v3094
        %v3477 = vunpack.c.l.b16 %v3095
        %v3478 = vunpack.c.h.b16 %v3095
        %v3479 = vunpack.c.l.b16 %v3096
        %v3480 = vunpack.c.h.b16 %v3096
        %v3481 = vunpack.c.l.b16 %v3097
        %v3482 = vunpack.c.h.b16 %v3097
        %v3483 = vunpack.c.l.b16 %v3098
        %v3484 = vunpack.c.h.b16 %v3098
        %v3485 = vunpack.c.l.b16 %v3099
        %v3486 = vunpack.c.h.b16 %v3099
        %v3487 = vunpack.c.l.b16 %v3100
        %v3488 = vunpack.c.h.b16 %v3100
        %v3489 = vunpack.c.l.b16 %v3101
        %v3490 = vunpack.c.h.b16 %v3101
        %v3491 = vunpack.c.l.b16 %v3102
        %v3492 = vunpack.c.h.b16 %v3102
        %v3493 = vunpack.c.l.b16 %v3103
        %v3494 = vunpack.c.h.b16 %v3103
        %v3495 = vunpack.c.l.b16 %v3104
        %v3496 = vunpack.c.h.b16 %v3104
        %v3497 = vunpack.c.l.b16 %v3105
        %v3498 = vunpack.c.h.b16 %v3105
        %v3499 = vunpack.c.l.b16 %v3106
        %v3500 = vunpack.c.h.b16 %v3106
        %v3501 = vunpack.c.l.b16 %v3107
        %v3502 = vunpack.c.h.b16 %v3107
        %v3503 = vunpack.c.l.b16 %v3108
        %v3504 = vunpack.c.h.b16 %v3108
        %v3505 = vunpack.c.l.b16 %v3109
        %v3506 = vunpack.c.h.b16 %v3109
        %v3507 = vunpack.c.l.b16 %v3110
        %v3508 = vunpack.c.h.b16 %v3110
        %v3509 = vunpack.c.l.b16 %v3111
        %v3510 = vunpack.c.h.b16 %v3111
        %v3511 = vunpack.c.l.b16 %v3112
        %v3512 = vunpack.c.h.b16 %v3112
        %v3513 = vunpack.c.l.b16 %v3113
        %v3514 = vunpack.c.h.b16 %v3113
        %v3515 = vunpack.c.l.b16 %v3114
        %v3516 = vunpack.c.h.b16 %v3114
        %v3517 = vunpack.c.l.b16 %v3115
        %v3518 = vunpack.c.h.b16 %v3115
        %v3519 = vunpack.c.l.b16 %v3116
        %v3520 = vunpack.c.h.b16 %v3116
        %v3521 = vunpack.c.l.b16 %v3117
        %v3522 = vunpack.c.h.b16 %v3117
        %v3523 = vunpack.c.l.b16 %v3118
        %v3524 = vunpack.c.h.b16 %v3118
        %v3525 = vunpack.c.l.b16 %v3119
        %v3526 = vunpack.c.h.b16 %v3119
        %v3527 = vunpack.c.l.b16 %v3120
        %v3528 = vunpack.c.h.b16 %v3120
        %v3529 = vunpack.c.l.b16 %v3121
        %v3530 = vunpack.c.h.b16 %v3121
        %v3531 = vunpack.c.l.b16 %v3122
        %v3532 = vunpack.c.h.b16 %v3122
        %v3533 = vunpack.c.l.b16 %v3123
        %v3534 = vunpack.c.h.b16 %v3123
        %v3535 = vunpack.c.l.b16 %v3124
        %v3536 = vunpack.c.h.b16 %v3124
        %v3537 = vunpack.c.l.b16 %v3125
        %v3538 = vunpack.c.h.b16 %v3125
        %v3539 = vunpack.c.l.b16 %v3126
        %v3540 = vunpack.c.h.b16 %v3126
        %v3541 = vunpack.c.l.b16 %v3127
        %v3542 = vunpack.c.h.b16 %v3127
        %v3543 = vunpack.c.l.b16 %v3128
        %v3544 = vunpack.c.h.b16 %v3128
        %v3545 = vunpack.c.l.b16 %v3129
        %v3546 = vunpack.c.h.b16 %v3129
        %v3547 = vunpack.c.l.b16 %v3130
        %v3548 = vunpack.c.h.b16 %v3130
        %v3549 = vunpack.c.l.b16 %v3131
        %v3550 = vunpack.c.h.b16 %v3131
        %v3551 = vunpack.c.l.b16 %v3132
        %v3552 = vunpack.c.h.b16 %v3132
        %v3553 = vunpack.c.l.b16 %v3133
        %v3554 = vunpack.c.h.b16 %v3133
        %v3555 = vunpack.c.l.b16 %v3134
        %v3556 = vunpack.c.h.b16 %v3134
        %v3557 = vunpack.c.l.b16 %v3135
        %v3558 = vunpack.c.h.b16 %v3135
        %v3559 = vunpack.c.l.b16 %v3136
        %v3560 = vunpack.c.h.b16 %v3136
        %v3561 = vunpack.c.l.b16 %v3137
        %v3562 = vunpack.c.h.b16 %v3137
        %v3563 = vunpack.c.l.b16 %v3138
        %v3564 = vunpack.c.h.b16 %v3138
        %v3565 = vpack.c.b16 %v3317, %v3309
        %v3566 = vpack.c.b16 %v3318, %v3310
        %v3567 = vpack.c.b16 %v3319, %v3311
        %v3568 = vpack.c.b16 %v3320, %v3312
        %v3569 = vpack.c.b16 %v3321, %v3313
        %v3570 = vpack.c.b16 %v3322, %v3314
        %v3571 = vpack.c.b16 %v3323, %v3315
        %v3572 = vpack.c.b16 %v3324, %v3316
        %v3573 = vpack.c.b16 %v3333, %v3325
        %v3574 = vpack.c.b16 %v3334, %v3326
        %v3575 = vpack.c.b16 %v3335, %v3327
        %v3576 = vpack.c.b16 %v3336, %v3328
        %v3577 = vpack.c.b16 %v3337, %v3329
        %v3578 = vpack.c.b16 %v3338, %v3330
        %v3579 = vpack.c.b16 %v3339, %v3331
        %v3580 = vpack.c.b16 %v3340, %v3332
        %v3581 = vpack.c.b16 %v3349, %v3341
        %v3582 = vpack.c.b16 %v3350, %v3342
        %v3583 = vpack.c.b16 %v3351, %v3343
        %v3584 = vpack.c.b16 %v3352, %v3344
        %v3585 = vpack.c.b16 %v3353, %v3345
        %v3586 = vpack.c.b16 %v3354, %v3346
        %v3587 = vpack.c.b16 %v3355, %v3347
        %v3588 = vpack.c.b16 %v3356, %v3348
        %v3589 = vpack.c.b16 %v3365, %v3357
        %v3590 = vpack.c.b16 %v3366, %v3358
        %v3591 = vpack.c.b16 %v3367, %v3359
        %v3592 = vpack.c.b16 %v3368, %v3360
        %v3593 = vpack.c.b16 %v3369, %v3361
        %v3594 = vpack.c.b16 %v3370, %v3362
        %v3595 = vpack.c.b16 %v3371, %v3363
        %v3596 = vpack.c.b16 %v3372, %v3364
        %v3597 = vpack.c.b16 %v3381, %v3373
        %v3598 = vpack.c.b16 %v3382, %v3374
        %v3599 = vpack.c.b16 %v3383, %v3375
        %v3600 = vpack.c.b16 %v3384, %v3376
        %v3601 = vpack.c.b16 %v3385, %v3377
        %v3602 = vpack.c.b16 %v3386, %v3378
        %v3603 = vpack.c.b16 %v3387, %v3379
        %v3604 = vpack.c.b16 %v3388, %v3380
        %v3605 = vpack.c.b16 %v3397, %v3389
        %v3606 = vpack.c.b16 %v3398, %v3390
        %v3607 = vpack.c.b16 %v3399, %v3391
        %v3608 = vpack.c.b16 %v3400, %v3392
        %v3609 = vpack.c.b16 %v3401, %v3393
        %v3610 = vpack.c.b16 %v3402, %v3394
        %v3611 = vpack.c.b16 %v3403, %v3395
        %v3612 = vpack.c.b16 %v3404, %v3396
        %v3613 = vpack.c.b16 %v3413, %v3405
        %v3614 = vpack.c.b16 %v3414, %v3406
        %v3615 = vpack.c.b16 %v3415, %v3407
        %v3616 = vpack.c.b16 %v3416, %v3408
        %v3617 = vpack.c.b16 %v3417, %v3409
        %v3618 = vpack.c.b16 %v3418, %v3410
        %v3619 = vpack.c.b16 %v3419, %v3411
        %v3620 = vpack.c.b16 %v3420, %v3412
        %v3621 = vpack.c.b16 %v3429, %v3421
        %v3622 = vpack.c.b16 %v3430, %v3422
        %v3623 = vpack.c.b16 %v3431, %v3423
        %v3624 = vpack.c.b16 %v3432, %v3424
        %v3625 = vpack.c.b16 %v3433, %v3425
        %v3626 = vpack.c.b16 %v3434, %v3426
        %v3627 = vpack.c.b16 %v3435, %v3427
        %v3628 = vpack.c.b16 %v3436, %v3428
        %v3629 = vpack.c.b16 %v3445, %v3437
        %v3630 = vpack.c.b16 %v3446, %v3438
        %v3631 = vpack.c.b16 %v3447, %v3439
        %v3632 = vpack.c.b16 %v3448, %v3440
        %v3633 = vpack.c.b16 %v3449, %v3441
        %v3634 = vpack.c.b16 %v3450, %v3442
        %v3635 = vpack.c.b16 %v3451, %v3443
        %v3636 = vpack.c.b16 %v3452, %v3444
        %v3637 = vpack.c.b16 %v3461, %v3453
        %v3638 = vpack.c.b16 %v3462, %v3454
        %v3639 = vpack.c.b16 %v3463, %v3455
        %v3640 = vpack.c.b16 %v3464, %v3456
        %v3641 = vpack.c.b16 %v3465, %v3457
        %v3642 = vpack.c.b16 %v3466, %v3458
        %v3643 = vpack.c.b16 %v3467, %v3459
        %v3644 = vpack.c.b16 %v3468, %v3460
        %v3645 = vpack.c.b16 %v3477, %v3469
        %v3646 = vpack.c.b16 %v3478, %v3470
        %v3647 = vpack.c.b16 %v3479, %v3471
        %v3648 = vpack.c.b16 %v3480, %v3472
        %v3649 = vpack.c.b16 %v3481, %v3473
        %v3650 = vpack.c.b16 %v3482, %v3474
        %v3651 = vpack.c.b16 %v3483, %v3475
        %v3652 = vpack.c.b16 %v3484, %v3476
        %v3653 = vpack.c.b16 %v3493, %v3485
        %v3654 = vpack.c.b16 %v3494, %v3486
        %v3655 = vpack.c.b16 %v3495, %v3487
        %v3656 = vpack.c.b16 %v3496, %v3488
        %v3657 = vpack.c.b16 %v3497, %v3489
        %v3658 = vpack.c.b16 %v3498, %v3490
        %v3659 = vpack.c.b16 %v3499, %v3491
        %v3660 = vpack.c.b16 %v3500, %v3492
        %v3661 = vpack.c.b16 %v3509, %v3501
        %v3662 = vpack.c.b16 %v3510, %v3502
        %v3663 = vpack.c.b16 %v3511, %v3503
        %v3664 = vpack.c.b16 %v3512, %v3504
        %v3665 = vpack.c.b16 %v3513, %v3505
        %v3666 = vpack.c.b16 %v3514, %v3506
        %v3667 = vpack.c.b16 %v3515, %v3507
        %v3668 = vpack.c.b16 %v3516, %v3508
        %v3669 = vpack.c.b16 %v3525, %v3517
        %v3670 = vpack.c.b16 %v3526, %v3518
        %v3671 = vpack.c.b16 %v3527, %v3519
        %v3672 = vpack.c.b16 %v3528, %v3520
        %v3673 = vpack.c.b16 %v3529, %v3521
        %v3674 = vpack.c.b16 %v3530, %v3522
        %v3675 = vpack.c.b16 %v3531, %v3523
        %v3676 = vpack.c.b16 %v3532, %v3524
        %v3677 = vpack.c.b16 %v3541, %v3533
        %v3678 = vpack.c.b16 %v3542, %v3534
        %v3679 = vpack.c.b16 %v3543, %v3535
        %v3680 = vpack.c.b16 %v3544, %v3536
        %v3681 = vpack.c.b16 %v3545, %v3537
        %v3682 = vpack.c.b16 %v3546, %v3538
        %v3683 = vpack.c.b16 %v3547, %v3539
        %v3684 = vpack.c.b16 %v3548, %v3540
        %v3685 = vpack.c.b16 %v3557, %v3549
        %v3686 = vpack.c.b16 %v3558, %v3550
        %v3687 = vpack.c.b16 %v3559, %v3551
        %v3688 = vpack.c.b16 %v3560, %v3552
        %v3689 = vpack.c.b16 %v3561, %v3553
        %v3690 = vpack.c.b16 %v3562, %v3554
        %v3691 = vpack.c.b16 %v3563, %v3555
        %v3692 = vpack.c.b16 %v3564, %v3556
        %3821 = vmatprep.subr.bf16.mxu0 %v3622
        %3822 = vmatpush1.bf16.msra.mxu0 %v3621
        %3823 = vmatprep.subr.bf16.mxu0 %v3614
        %3824 = vmatpush1.bf16.msra.mxu0 %v3613
        %3825 = vmatprep.subr.bf16.mxu0 %v3606
        %3826 = vmatpush1.bf16.msra.mxu0 %v3605
        %3827 = vmatprep.subr.bf16.mxu0 %v3598
        %3828 = vmatpush1.bf16.msra.mxu0 %v3597
        %3829 = vmatprep.subr.bf16.mxu0 %v3590
        %3830 = vmatpush1.bf16.msra.mxu0 %v3589
        %3831 = vmatprep.subr.bf16.mxu0 %v3582
        %3832 = vmatpush1.bf16.msra.mxu0 %v3581
        %3833 = vmatprep.subr.bf16.mxu0 %v3574
        %3834 = vmatpush1.bf16.msra.mxu0 %v3573
        %3835 = vmatprep.subr.bf16.mxu0 %v3566
        %3836 = vmatpush1.bf16.msra.mxu0 %v3565
        %3837 = vmatprep.subr.bf16.mxu0 %v3686
        %3838 = vmatpush2.bf16.msra.mxu0 %v3685
        %3839 = vmatprep.subr.bf16.mxu0 %v3678
        %3840 = vmatpush2.bf16.msra.mxu0 %v3677
        %3841 = vmatprep.subr.bf16.mxu0 %v3670
        %3842 = vmatpush2.bf16.msra.mxu0 %v3669
        %3843 = vmatprep.subr.bf16.mxu0 %v3662
        %3844 = vmatpush2.bf16.msra.mxu0 %v3661
        %3845 = vmatprep.subr.bf16.mxu0 %v3654
        %3846 = vmatpush2.bf16.msra.mxu0 %v3653
        %3847 = vmatprep.subr.bf16.mxu0 %v3646
        %3848 = vmatpush2.bf16.msra.mxu0 %v3645
        %3849 = vmatprep.subr.bf16.mxu0 %v3638
        %3850 = vmatpush2.bf16.msra.mxu0 %v3637
        %3851 = vmatprep.subr.bf16.mxu0 %v3630
        %3852 = vmatpush2.bf16.msra.mxu0 %v3629
        %3853 = vmatprep.mubr.bf16.mxu0 %v3008
        %3854 = vmatmul.mubr.bf16.gmra.mxu0 %v3007
        %v3855 = vpop.f32.mrf.mxu0
        %v3856 = vadd.f32 %v3144, %v3855
        %v3857 = vpop.f32.mrf.mxu0
        %v3858 = vadd.f32 %v3148, %v3857
        %v3859 = vpop.f32.mrf.mxu0
        %v3860 = vadd.f32 %v3144, %v3859
        %v3861 = vpop.f32.mrf.mxu0
        %v3862 = vadd.f32 %v3148, %v3861
        %3863 = vmatprep.mubr.bf16.mxu0 %v3010
        %3864 = vmatmul.mubr.bf16.gmra.mxu0 %v3009
        %v3865 = vpop.f32.mrf.mxu0
        %v3866 = vadd.f32 %v3144, %v3865
        %v3867 = vpop.f32.mrf.mxu0
        %v3868 = vadd.f32 %v3148, %v3867
        %v3869 = vpop.f32.mrf.mxu0
        %v3870 = vpop.f32.mrf.mxu0
        %3871 = vdwg.mxu0
        %3872 = vmatprep.subr.bf16.mxu0 %v3624
        %3873 = vmatpush1.bf16.msra.mxu0 %v3623
        %3874 = vmatprep.subr.bf16.mxu0 %v3616
        %3875 = vmatpush1.bf16.msra.mxu0 %v3615
        %3876 = vmatprep.subr.bf16.mxu0 %v3608
        %3877 = vmatpush1.bf16.msra.mxu0 %v3607
        %3878 = vmatprep.subr.bf16.mxu0 %v3600
        %3879 = vmatpush1.bf16.msra.mxu0 %v3599
        %3880 = vmatprep.subr.bf16.mxu0 %v3592
        %3881 = vmatpush1.bf16.msra.mxu0 %v3591
        %3882 = vmatprep.subr.bf16.mxu0 %v3584
        %3883 = vmatpush1.bf16.msra.mxu0 %v3583
        %3884 = vmatprep.subr.bf16.mxu0 %v3576
        %3885 = vmatpush1.bf16.msra.mxu0 %v3575
        %3886 = vmatprep.subr.bf16.mxu0 %v3568
        %3887 = vmatpush1.bf16.msra.mxu0 %v3567
        %3888 = vmatprep.subr.bf16.mxu0 %v3688
        %3889 = vmatpush2.bf16.msra.mxu0 %v3687
        %3890 = vmatprep.subr.bf16.mxu0 %v3680
        %3891 = vmatpush2.bf16.msra.mxu0 %v3679
        %3892 = vmatprep.subr.bf16.mxu0 %v3672
        %3893 = vmatpush2.bf16.msra.mxu0 %v3671
        %3894 = vmatprep.subr.bf16.mxu0 %v3664
        %3895 = vmatpush2.bf16.msra.mxu0 %v3663
        %3896 = vmatprep.subr.bf16.mxu0 %v3656
        %3897 = vmatpush2.bf16.msra.mxu0 %v3655
        %3898 = vmatprep.subr.bf16.mxu0 %v3648
        %3899 = vmatpush2.bf16.msra.mxu0 %v3647
        %3900 = vmatprep.subr.bf16.mxu0 %v3640
        %3901 = vmatpush2.bf16.msra.mxu0 %v3639
        %3902 = vmatprep.subr.bf16.mxu0 %v3632
        %3903 = vmatpush2.bf16.msra.mxu0 %v3631
        %3904 = vmatprep.mubr.bf16.mxu0 %v3008
        %3905 = vmatmul.mubr.bf16.gmra.mxu0 %v3007
        %v3906 = vpop.f32.mrf.mxu0
        %v3907 = vadd.f32 %v3152, %v3906
        %v3908 = vpop.f32.mrf.mxu0
        %v3909 = vadd.f32 %v3156, %v3908
        %v3910 = vpop.f32.mrf.mxu0
        %v3911 = vadd.f32 %v3152, %v3910
        %v3912 = vpop.f32.mrf.mxu0
        %v3913 = vadd.f32 %v3156, %v3912
        %3914 = vmatprep.mubr.bf16.mxu0 %v3010
        %3915 = vmatmul.mubr.bf16.gmra.mxu0 %v3009
        %v3916 = vpop.f32.mrf.mxu0
        %v3917 = vadd.f32 %v3152, %v3916
        %v3918 = vpop.f32.mrf.mxu0
        %v3919 = vadd.f32 %v3156, %v3918
        %v3920 = vpop.f32.mrf.mxu0
        %v3921 = vpop.f32.mrf.mxu0
        %3922 = vdwg.mxu0
        %3923 = vmatprep.subr.bf16.mxu0 %v3626
        %3924 = vmatpush1.bf16.msra.mxu0 %v3625
        %3925 = vmatprep.subr.bf16.mxu0 %v3618
        %3926 = vmatpush1.bf16.msra.mxu0 %v3617
        %3927 = vmatprep.subr.bf16.mxu0 %v3610
        %3928 = vmatpush1.bf16.msra.mxu0 %v3609
        %3929 = vmatprep.subr.bf16.mxu0 %v3602
        %3930 = vmatpush1.bf16.msra.mxu0 %v3601
        %3931 = vmatprep.subr.bf16.mxu0 %v3594
        %3932 = vmatpush1.bf16.msra.mxu0 %v3593
        %3933 = vmatprep.subr.bf16.mxu0 %v3586
        %3934 = vmatpush1.bf16.msra.mxu0 %v3585
        %3935 = vmatprep.subr.bf16.mxu0 %v3578
        %3936 = vmatpush1.bf16.msra.mxu0 %v3577
        %3937 = vmatprep.subr.bf16.mxu0 %v3570
        %3938 = vmatpush1.bf16.msra.mxu0 %v3569
        %3939 = vmatprep.subr.bf16.mxu0 %v3690
        %3940 = vmatpush2.bf16.msra.mxu0 %v3689
        %3941 = vmatprep.subr.bf16.mxu0 %v3682
        %3942 = vmatpush2.bf16.msra.mxu0 %v3681
        %3943 = vmatprep.subr.bf16.mxu0 %v3674
        %3944 = vmatpush2.bf16.msra.mxu0 %v3673
        %3945 = vmatprep.subr.bf16.mxu0 %v3666
        %3946 = vmatpush2.bf16.msra.mxu0 %v3665
        %3947 = vmatprep.subr.bf16.mxu0 %v3658
        %3948 = vmatpush2.bf16.msra.mxu0 %v3657
        %3949 = vmatprep.subr.bf16.mxu0 %v3650
        %3950 = vmatpush2.bf16.msra.mxu0 %v3649
        %3951 = vmatprep.subr.bf16.mxu0 %v3642
        %3952 = vmatpush2.bf16.msra.mxu0 %v3641
        %3953 = vmatprep.subr.bf16.mxu0 %v3634
        %3954 = vmatpush2.bf16.msra.mxu0 %v3633
        %3955 = vmatprep.mubr.bf16.mxu0 %v3008
        %3956 = vmatmul.mubr.bf16.gmra.mxu0 %v3007
        %v3957 = vpop.f32.mrf.mxu0
        %v3958 = vadd.f32 %v3160, %v3957
        %v3959 = vpop.f32.mrf.mxu0
        %v3960 = vadd.f32 %v3164, %v3959
        %v3961 = vpop.f32.mrf.mxu0
        %v3962 = vadd.f32 %v3160, %v3961
        %v3963 = vpop.f32.mrf.mxu0
        %v3964 = vadd.f32 %v3164, %v3963
        %3965 = vmatprep.mubr.bf16.mxu0 %v3010
        %3966 = vmatmul.mubr.bf16.gmra.mxu0 %v3009
        %v3967 = vpop.f32.mrf.mxu0
        %v3968 = vadd.f32 %v3160, %v3967
        %v3969 = vpop.f32.mrf.mxu0
        %v3970 = vadd.f32 %v3164, %v3969
        %v3971 = vpop.f32.mrf.mxu0
        %v3972 = vpop.f32.mrf.mxu0
        %3973 = vdwg.mxu0
        %3974 = vmatprep.subr.bf16.mxu0 %v3628
        %3975 = vmatpush1.bf16.msra.mxu0 %v3627
        %3976 = vmatprep.subr.bf16.mxu0 %v3620
        %3977 = vmatpush1.bf16.msra.mxu0 %v3619
        %3978 = vmatprep.subr.bf16.mxu0 %v3612
        %3979 = vmatpush1.bf16.msra.mxu0 %v3611
        %3980 = vmatprep.subr.bf16.mxu0 %v3604
        %3981 = vmatpush1.bf16.msra.mxu0 %v3603
        %3982 = vmatprep.subr.bf16.mxu0 %v3596
        %3983 = vmatpush1.bf16.msra.mxu0 %v3595
        %3984 = vmatprep.subr.bf16.mxu0 %v3588
        %3985 = vmatpush1.bf16.msra.mxu0 %v3587
        %3986 = vmatprep.subr.bf16.mxu0 %v3580
        %3987 = vmatpush1.bf16.msra.mxu0 %v3579
        %3988 = vmatprep.subr.bf16.mxu0 %v3572
        %3989 = vmatpush1.bf16.msra.mxu0 %v3571
        %3990 = vmatprep.subr.bf16.mxu0 %v3692
        %3991 = vmatpush2.bf16.msra.mxu0 %v3691
        %3992 = vmatprep.subr.bf16.mxu0 %v3684
        %3993 = vmatpush2.bf16.msra.mxu0 %v3683
        %3994 = vmatprep.subr.bf16.mxu0 %v3676
        %3995 = vmatpush2.bf16.msra.mxu0 %v3675
        %3996 = vmatprep.subr.bf16.mxu0 %v3668
        %3997 = vmatpush2.bf16.msra.mxu0 %v3667
        %3998 = vmatprep.subr.bf16.mxu0 %v3660
        %3999 = vmatpush2.bf16.msra.mxu0 %v3659
        %4000 = vmatprep.subr.bf16.mxu0 %v3652
        %4001 = vmatpush2.bf16.msra.mxu0 %v3651
        %4002 = vmatprep.subr.bf16.mxu0 %v3644
        %4003 = vmatpush2.bf16.msra.mxu0 %v3643
        %4004 = vmatprep.subr.bf16.mxu0 %v3636
        %4005 = vmatpush2.bf16.msra.mxu0 %v3635
        %4006 = vmatprep.mubr.bf16.mxu0 %v3008
        %4007 = vmatmul.mubr.bf16.gmra.mxu0 %v3007
        %v4008 = vpop.f32.mrf.mxu0
        %v4009 = vadd.f32 %v3168, %v4008
        %v4010 = vpop.f32.mrf.mxu0
        %v4011 = vadd.f32 %v3172, %v4010
        %v4012 = vpop.f32.mrf.mxu0
        %v4013 = vadd.f32 %v3168, %v4012
        %v4014 = vpop.f32.mrf.mxu0
        %v4015 = vadd.f32 %v3172, %v4014
        %4016 = vmatprep.mubr.bf16.mxu0 %v3010
        %4017 = vmatmul.mubr.bf16.gmra.mxu0 %v3009
        %v4018 = vpop.f32.mrf.mxu0
        %v4019 = vadd.f32 %v3168, %v4018
        %v4020 = vpop.f32.mrf.mxu0
        %v4021 = vadd.f32 %v3172, %v4020
        %v4022 = vpop.f32.mrf.mxu0
        %v4023 = vpop.f32.mrf.mxu0
        %4024 = vdwg.mxu0
        %v4025 = vmul.f32 %v3856, 1.702
        %v4026 = vmul.f32 %v3858, 1.702
        %v4027 = vmul.f32 %v3907, 1.702
        %v4028 = vmul.f32 %v3909, 1.702
        %v4029 = vmul.f32 %v3958, 1.702
        %v4030 = vmul.f32 %v3960, 1.702
        %v4031 = vmul.f32 %v4009, 1.702
        %v4032 = vmul.f32 %v4011, 1.702
        %v4033 = vmul.f32 %v3860, 1.702
        %v4034 = vmul.f32 %v3862, 1.702
        %v4035 = vmul.f32 %v3911, 1.702
        %v4036 = vmul.f32 %v3913, 1.702
        %v4037 = vmul.f32 %v3962, 1.702
        %v4038 = vmul.f32 %v3964, 1.702
        %v4039 = vmul.f32 %v4013, 1.702
        %v4040 = vmul.f32 %v4015, 1.702
        %v4041 = vmul.f32 %v3866, 1.702
        %v4042 = vmul.f32 %v3868, 1.702
        %v4043 = vmul.f32 %v3917, 1.702
        %v4044 = vmul.f32 %v3919, 1.702
        %v4045 = vmul.f32 %v3968, 1.702
        %v4046 = vmul.f32 %v3970, 1.702
        %v4047 = vmul.f32 %v4019, 1.702
        %v4048 = vmul.f32 %v4021, 1.702
        %v4049 = vxor.u32 %v4025, 2147483648
        %v4050 = vxor.u32 %v4026, 2147483648
        %v4051 = vxor.u32 %v4027, 2147483648
        %v4052 = vxor.u32 %v4028, 2147483648
        %v4053 = vxor.u32 %v4029, 2147483648
        %v4054 = vxor.u32 %v4030, 2147483648
        %v4055 = vxor.u32 %v4031, 2147483648
        %v4056 = vxor.u32 %v4032, 2147483648
        %v4057 = vxor.u32 %v4033, 2147483648
        %v4058 = vxor.u32 %v4034, 2147483648
        %v4059 = vxor.u32 %v4035, 2147483648
        %v4060 = vxor.u32 %v4036, 2147483648
        %v4061 = vxor.u32 %v4037, 2147483648
        %v4062 = vxor.u32 %v4038, 2147483648
        %v4063 = vxor.u32 %v4039, 2147483648
        %v4064 = vxor.u32 %v4040, 2147483648
        %v4065 = vxor.u32 %v4041, 2147483648
        %v4066 = vxor.u32 %v4042, 2147483648
        %v4067 = vxor.u32 %v4043, 2147483648
        %v4068 = vxor.u32 %v4044, 2147483648
        %v4069 = vxor.u32 %v4045, 2147483648
        %v4070 = vxor.u32 %v4046, 2147483648
        %v4071 = vxor.u32 %v4047, 2147483648
        %v4072 = vxor.u32 %v4048, 2147483648
        %v4073 = vmul.f32 %v4049, 1.442695
        %v4074 = vpow.pop %v4073
        %v4075 = vmul.f32 %v4050, 1.442695
        %v4076 = vpow.pop %v4075
        %v4077 = vmul.f32 %v4051, 1.442695
        %v4078 = vpow.pop %v4077
        %v4079 = vmul.f32 %v4052, 1.442695
        %v4080 = vpow.pop %v4079
        %v4081 = vmul.f32 %v4053, 1.442695
        %v4082 = vpow.pop %v4081
        %v4083 = vmul.f32 %v4054, 1.442695
        %v4084 = vpow.pop %v4083
        %v4085 = vmul.f32 %v4055, 1.442695
        %v4086 = vpow.pop %v4085
        %v4087 = vmul.f32 %v4056, 1.442695
        %v4088 = vpow.pop %v4087
        %v4089 = vmul.f32 %v4057, 1.442695
        %v4090 = vpow.pop %v4089
        %v4091 = vmul.f32 %v4058, 1.442695
        %v4092 = vpow.pop %v4091
        %v4093 = vmul.f32 %v4059, 1.442695
        %v4094 = vpow.pop %v4093
        %v4095 = vmul.f32 %v4060, 1.442695
        %v4096 = vpow.pop %v4095
        %v4097 = vmul.f32 %v4061, 1.442695
        %v4098 = vpow.pop %v4097
        %v4099 = vmul.f32 %v4062, 1.442695
        %v4100 = vpow.pop %v4099
        %v4101 = vmul.f32 %v4063, 1.442695
        %v4102 = vpow.pop %v4101
        %v4103 = vmul.f32 %v4064, 1.442695
        %v4104 = vpow.pop %v4103
        %v4105 = vmul.f32 %v4065, 1.442695
        %v4106 = vpow.pop %v4105
        %v4107 = vmul.f32 %v4066, 1.442695
        %v4108 = vpow.pop %v4107
        %v4109 = vmul.f32 %v4067, 1.442695
        %v4110 = vpow.pop %v4109
        %v4111 = vmul.f32 %v4068, 1.442695
        %v4112 = vpow.pop %v4111
        %v4113 = vmul.f32 %v4069, 1.442695
        %v4114 = vpow.pop %v4113
        %v4115 = vmul.f32 %v4070, 1.442695
        %v4116 = vpow.pop %v4115
        %v4117 = vmul.f32 %v4071, 1.442695
        %v4118 = vpow.pop %v4117
        %v4119 = vmul.f32 %v4072, 1.442695
        %v4120 = vpow.pop %v4119
        %v4121 = vadd.f32 %v4074, 1.0
        %v4122 = vadd.f32 %v4076, 1.0
        %v4123 = vadd.f32 %v4078, 1.0
        %v4124 = vadd.f32 %v4080, 1.0
        %v4125 = vadd.f32 %v4082, 1.0
        %v4126 = vadd.f32 %v4084, 1.0
        %v4127 = vadd.f32 %v4086, 1.0
        %v4128 = vadd.f32 %v4088, 1.0
        %v4129 = vadd.f32 %v4090, 1.0
        %v4130 = vadd.f32 %v4092, 1.0
        %v4131 = vadd.f32 %v4094, 1.0
        %v4132 = vadd.f32 %v4096, 1.0
        %v4133 = vadd.f32 %v4098, 1.0
        %v4134 = vadd.f32 %v4100, 1.0
        %v4135 = vadd.f32 %v4102, 1.0
        %v4136 = vadd.f32 %v4104, 1.0
        %v4137 = vadd.f32 %v4106, 1.0
        %v4138 = vadd.f32 %v4108, 1.0
        %v4139 = vadd.f32 %v4110, 1.0
        %v4140 = vadd.f32 %v4112, 1.0
        %v4141 = vadd.f32 %v4114, 1.0
        %v4142 = vadd.f32 %v4116, 1.0
        %v4143 = vadd.f32 %v4118, 1.0
        %v4144 = vadd.f32 %v4120, 1.0
        %v4145 = vrcp.pop %v4121
        %v4146 = vmul.f32 1.0, %v4145
        %v4147 = vrcp.pop %v4122
        %v4148 = vmul.f32 1.0, %v4147
        %v4149 = vrcp.pop %v4123
        %v4150 = vmul.f32 1.0, %v4149
        %v4151 = vrcp.pop %v4124
        %v4152 = vmul.f32 1.0, %v4151
        %v4153 = vrcp.pop %v4125
        %v4154 = vmul.f32 1.0, %v4153
        %v4155 = vrcp.pop %v4126
        %v4156 = vmul.f32 1.0, %v4155
        %v4157 = vrcp.pop %v4127
        %v4158 = vmul.f32 1.0, %v4157
        %v4159 = vrcp.pop %v4128
        %v4160 = vmul.f32 1.0, %v4159
        %v4161 = vrcp.pop %v4129
        %v4162 = vmul.f32 1.0, %v4161
        %v4163 = vrcp.pop %v4130
        %v4164 = vmul.f32 1.0, %v4163
        %v4165 = vrcp.pop %v4131
        %v4166 = vmul.f32 1.0, %v4165
        %v4167 = vrcp.pop %v4132
        %v4168 = vmul.f32 1.0, %v4167
        %v4169 = vrcp.pop %v4133
        %v4170 = vmul.f32 1.0, %v4169
        %v4171 = vrcp.pop %v4134
        %v4172 = vmul.f32 1.0, %v4171
        %v4173 = vrcp.pop %v4135
        %v4174 = vmul.f32 1.0, %v4173
        %v4175 = vrcp.pop %v4136
        %v4176 = vmul.f32 1.0, %v4175
        %v4177 = vrcp.pop %v4137
        %v4178 = vmul.f32 1.0, %v4177
        %v4179 = vrcp.pop %v4138
        %v4180 = vmul.f32 1.0, %v4179
        %v4181 = vrcp.pop %v4139
        %v4182 = vmul.f32 1.0, %v4181
        %v4183 = vrcp.pop %v4140
        %v4184 = vmul.f32 1.0, %v4183
        %v4185 = vrcp.pop %v4141
        %v4186 = vmul.f32 1.0, %v4185
        %v4187 = vrcp.pop %v4142
        %v4188 = vmul.f32 1.0, %v4187
        %v4189 = vrcp.pop %v4143
        %v4190 = vmul.f32 1.0, %v4189
        %v4191 = vrcp.pop %v4144
        %v4192 = vmul.f32 1.0, %v4191
        %v4193 = vmul.f32 %v3856, %v4146
        %v4194 = vmul.f32 %v3858, %v4148
        %v4195 = vmul.f32 %v3907, %v4150
        %v4196 = vmul.f32 %v3909, %v4152
        %v4197 = vmul.f32 %v3958, %v4154
        %v4198 = vmul.f32 %v3960, %v4156
        %v4199 = vmul.f32 %v4009, %v4158
        %v4200 = vmul.f32 %v4011, %v4160
        %v4201 = vmul.f32 %v3860, %v4162
        %v4202 = vmul.f32 %v3862, %v4164
        %v4203 = vmul.f32 %v3911, %v4166
        %v4204 = vmul.f32 %v3913, %v4168
        %v4205 = vmul.f32 %v3962, %v4170
        %v4206 = vmul.f32 %v3964, %v4172
        %v4207 = vmul.f32 %v4013, %v4174
        %v4208 = vmul.f32 %v4015, %v4176
        %v4209 = vmul.f32 %v3866, %v4178
        %v4210 = vmul.f32 %v3868, %v4180
        %v4211 = vmul.f32 %v3917, %v4182
        %v4212 = vmul.f32 %v3919, %v4184
        %v4213 = vmul.f32 %v3968, %v4186
        %v4214 = vmul.f32 %v3970, %v4188
        %v4215 = vmul.f32 %v4019, %v4190
        %v4216 = vmul.f32 %v4021, %v4192
        %v4217 = vpack.c.bf16 %v4201, %v4193
        %v4218 = vpack.c.bf16 %v4202, %v4194
        %v4219 = vpack.c.bf16 %v4203, %v4195
        %v4220 = vpack.c.bf16 %v4204, %v4196
        %v4221 = vpack.c.bf16 %v4205, %v4197
        %v4222 = vpack.c.bf16 %v4206, %v4198
        %v4223 = vpack.c.bf16 %v4207, %v4199
        %v4224 = vpack.c.bf16 %v4208, %v4200
        %v4225 = vpack.c.bf16 %v4209, %v4209
        %v4226 = vpack.c.bf16 %v4210, %v4210
        %v4227 = vpack.c.bf16 %v4211, %v4211
        %v4228 = vpack.c.bf16 %v4212, %v4212
        %v4229 = vpack.c.bf16 %v4213, %v4213
        %v4230 = vpack.c.bf16 %v4214, %v4214
        %v4231 = vpack.c.bf16 %v4215, %v4215
        %v4232 = vpack.c.bf16 %v4216, %v4216
        %v4233 = vld [vmem:[%s954] sm:$0xff]
        %v4234 = vld [vmem:[%s954 + $0x8] sm:$0xff]
        %v4235 = vld [vmem:[%s954 + $0x10] sm:$0xff]
        %v4236 = vld [vmem:[%s954 + $0x18] sm:$0xff]
        %v4237 = vld [vmem:[%s954 + $0x20] sm:$0xff]
        %v4238 = vld [vmem:[%s954 + $0x28] sm:$0xff]
        %v4239 = vld [vmem:[%s954 + $0x30] sm:$0xff]
        %v4240 = vld [vmem:[%s954 + $0x38] sm:$0xff]
        %v4241 = vld [vmem:[%s954 + $0x40] sm:$0xff]
        %v4242 = vld [vmem:[%s954 + $0x48] sm:$0xff]
        %v4243 = vld [vmem:[%s954 + $0x50] sm:$0xff]
        %v4244 = vld [vmem:[%s954 + $0x58] sm:$0xff]
        %v4245 = vld [vmem:[%s954 + $0x60] sm:$0xff]
        %v4246 = vld [vmem:[%s954 + $0x68] sm:$0xff]
        %v4247 = vld [vmem:[%s954 + $0x70] sm:$0xff]
        %v4248 = vld [vmem:[%s954 + $0x78] sm:$0xff]
        %v4249 = vld [vmem:[%s954 + $0x80] sm:$0xff]
        %v4250 = vld [vmem:[%s954 + $0x88] sm:$0xff]
        %v4251 = vld [vmem:[%s954 + $0x90] sm:$0xff]
        %v4252 = vld [vmem:[%s954 + $0x98] sm:$0xff]
        %v4253 = vld [vmem:[%s954 + $0xa0] sm:$0xff]
        %v4254 = vld [vmem:[%s954 + $0xa8] sm:$0xff]
        %v4255 = vld [vmem:[%s954 + $0xb0] sm:$0xff]
        %v4256 = vld [vmem:[%s954 + $0xb8] sm:$0xff]
        %v4257 = vld [vmem:[%s954 + $0xc0] sm:$0xff]
        %v4258 = vld [vmem:[%s954 + $0xc8] sm:$0xff]
        %v4259 = vld [vmem:[%s954 + $0xd0] sm:$0xff]
        %v4260 = vld [vmem:[%s954 + $0xd8] sm:$0xff]
        %v4261 = vld [vmem:[%s954 + $0xe0] sm:$0xff]
        %v4262 = vld [vmem:[%s954 + $0xe8] sm:$0xff]
        %v4263 = vld [vmem:[%s954 + $0xf0] sm:$0xff]
        %v4264 = vld [vmem:[%s954 + $0xf8] sm:$0xff]
        %v4265 = vld [vmem:[%s954 + $0x100] sm:$0xff]
        %v4266 = vld [vmem:[%s954 + $0x108] sm:$0xff]
        %v4267 = vld [vmem:[%s954 + $0x110] sm:$0xff]
        %v4268 = vld [vmem:[%s954 + $0x118] sm:$0xff]
        %v4269 = vld [vmem:[%s954 + $0x120] sm:$0xff]
        %v4270 = vld [vmem:[%s954 + $0x128] sm:$0xff]
        %v4271 = vld [vmem:[%s954 + $0x130] sm:$0xff]
        %v4272 = vld [vmem:[%s954 + $0x138] sm:$0xff]
        %v4273 = vld [vmem:[%s954 + $0x140] sm:$0xff]
        %v4274 = vld [vmem:[%s954 + $0x148] sm:$0xff]
        %v4275 = vld [vmem:[%s954 + $0x150] sm:$0xff]
        %v4276 = vld [vmem:[%s954 + $0x158] sm:$0xff]
        %v4277 = vld [vmem:[%s954 + $0x160] sm:$0xff]
        %v4278 = vld [vmem:[%s954 + $0x168] sm:$0xff]
        %v4279 = vld [vmem:[%s954 + $0x170] sm:$0xff]
        %v4280 = vld [vmem:[%s954 + $0x178] sm:$0xff]
        %v4281 = vld [vmem:[%s954 + $0x180] sm:$0xff]
        %v4282 = vld [vmem:[%s954 + $0x188] sm:$0xff]
        %v4283 = vld [vmem:[%s954 + $0x190] sm:$0xff]
        %v4284 = vld [vmem:[%s954 + $0x198] sm:$0xff]
        %v4285 = vld [vmem:[%s954 + $0x1a0] sm:$0xff]
        %v4286 = vld [vmem:[%s954 + $0x1a8] sm:$0xff]
        %v4287 = vld [vmem:[%s954 + $0x1b0] sm:$0xff]
        %v4288 = vld [vmem:[%s954 + $0x1b8] sm:$0xff]
        %v4289 = vld [vmem:[%s954 + $0x1c0] sm:$0xff]
        %v4290 = vld [vmem:[%s954 + $0x1c8] sm:$0xff]
        %v4291 = vld [vmem:[%s954 + $0x1d0] sm:$0xff]
        %v4292 = vld [vmem:[%s954 + $0x1d8] sm:$0xff]
        %v4293 = vld [vmem:[%s954 + $0x1e0] sm:$0xff]
        %v4294 = vld [vmem:[%s954 + $0x1e8] sm:$0xff]
        %v4295 = vld [vmem:[%s954 + $0x1f0] sm:$0xff]
        %v4296 = vld [vmem:[%s954 + $0x1f8] sm:$0xff]
        %v4297 = vld [vmem:[%s954 + $0x200] sm:$0xff]
        %v4298 = vld [vmem:[%s954 + $0x208] sm:$0xff]
        %v4299 = vld [vmem:[%s954 + $0x210] sm:$0xff]
        %v4300 = vld [vmem:[%s954 + $0x218] sm:$0xff]
        %v4301 = vld [vmem:[%s954 + $0x220] sm:$0xff]
        %v4302 = vld [vmem:[%s954 + $0x228] sm:$0xff]
        %v4303 = vld [vmem:[%s954 + $0x230] sm:$0xff]
        %v4304 = vld [vmem:[%s954 + $0x238] sm:$0xff]
        %v4305 = vld [vmem:[%s954 + $0x240] sm:$0xff]
        %v4306 = vld [vmem:[%s954 + $0x248] sm:$0xff]
        %v4307 = vld [vmem:[%s954 + $0x250] sm:$0xff]
        %v4308 = vld [vmem:[%s954 + $0x258] sm:$0xff]
        %v4309 = vld [vmem:[%s954 + $0x260] sm:$0xff]
        %v4310 = vld [vmem:[%s954 + $0x268] sm:$0xff]
        %v4311 = vld [vmem:[%s954 + $0x270] sm:$0xff]
        %v4312 = vld [vmem:[%s954 + $0x278] sm:$0xff]
        %v4313 = vld [vmem:[%s954 + $0x280] sm:$0xff]
        %v4314 = vld [vmem:[%s954 + $0x288] sm:$0xff]
        %v4315 = vld [vmem:[%s954 + $0x290] sm:$0xff]
        %v4316 = vld [vmem:[%s954 + $0x298] sm:$0xff]
        %v4317 = vld [vmem:[%s954 + $0x2a0] sm:$0xff]
        %v4318 = vld [vmem:[%s954 + $0x2a8] sm:$0xff]
        %v4319 = vld [vmem:[%s954 + $0x2b0] sm:$0xff]
        %v4320 = vld [vmem:[%s954 + $0x2b8] sm:$0xff]
        %v4321 = vld [vmem:[%s954 + $0x2c0] sm:$0xff]
        %v4322 = vld [vmem:[%s954 + $0x2c8] sm:$0xff]
        %v4323 = vld [vmem:[%s954 + $0x2d0] sm:$0xff]
        %v4324 = vld [vmem:[%s954 + $0x2d8] sm:$0xff]
        %v4325 = vld [vmem:[%s954 + $0x2e0] sm:$0xff]
        %v4326 = vld [vmem:[%s954 + $0x2e8] sm:$0xff]
        %v4327 = vld [vmem:[%s954 + $0x2f0] sm:$0xff]
        %v4328 = vld [vmem:[%s954 + $0x2f8] sm:$0xff]
        %v4329 = vld [vmem:[%s954 + $0x300] sm:$0xff]
        %v4330 = vld [vmem:[%s954 + $0x308] sm:$0xff]
        %v4331 = vld [vmem:[%s954 + $0x310] sm:$0xff]
        %v4332 = vld [vmem:[%s954 + $0x318] sm:$0xff]
        %v4333 = vld [vmem:[%s954 + $0x320] sm:$0xff]
        %v4334 = vld [vmem:[%s954 + $0x328] sm:$0xff]
        %v4335 = vld [vmem:[%s954 + $0x330] sm:$0xff]
        %v4336 = vld [vmem:[%s954 + $0x338] sm:$0xff]
        %v4337 = vld [vmem:[%s954 + $0x340] sm:$0xff]
        %v4338 = vld [vmem:[%s954 + $0x348] sm:$0xff]
        %v4339 = vld [vmem:[%s954 + $0x350] sm:$0xff]
        %v4340 = vld [vmem:[%s954 + $0x358] sm:$0xff]
        %v4341 = vld [vmem:[%s954 + $0x360] sm:$0xff]
        %v4342 = vld [vmem:[%s954 + $0x368] sm:$0xff]
        %v4343 = vld [vmem:[%s954 + $0x370] sm:$0xff]
        %v4344 = vld [vmem:[%s954 + $0x378] sm:$0xff]
        %v4345 = vld [vmem:[%s954 + $0x380] sm:$0xff]
        %v4346 = vld [vmem:[%s954 + $0x388] sm:$0xff]
        %v4347 = vld [vmem:[%s954 + $0x390] sm:$0xff]
        %v4348 = vld [vmem:[%s954 + $0x398] sm:$0xff]
        %v4349 = vld [vmem:[%s954 + $0x3a0] sm:$0xff]
        %v4350 = vld [vmem:[%s954 + $0x3a8] sm:$0xff]
        %v4351 = vld [vmem:[%s954 + $0x3b0] sm:$0xff]
        %v4352 = vld [vmem:[%s954 + $0x3b8] sm:$0xff]
        %v4353 = vld [vmem:[%s954 + $0x3c0] sm:$0xff]
        %v4354 = vld [vmem:[%s954 + $0x3c8] sm:$0xff]
        %v4355 = vld [vmem:[%s954 + $0x3d0] sm:$0xff]
        %v4356 = vld [vmem:[%s954 + $0x3d8] sm:$0xff]
        %v4357 = vld [vmem:[%s954 + $0x3e0] sm:$0xff]
        %v4358 = vld [vmem:[%s954 + $0x3e8] sm:$0xff]
        %v4359 = vld [vmem:[%s954 + $0x3f0] sm:$0xff]
        %v4360 = vld [vmem:[%s954 + $0x3f8] sm:$0xff]
        %v4361 = vld [vmem:[%s963] sm:$0x3]
        %v4363 = vlaneseq
        %v4364 = vshrl.u32 %v4363, 7
        %v4365 = vsub.s32 0, %v4364
        %v4366 = vrot.slane %v4361, %v4365
        %v4367 = vlaneseq
        %v4368 = vshrl.u32 %v4367, 7
        %v4369 = vsub.s32 1, %v4368
        %v4370 = vrot.slane %v4361, %v4369
        %v4501 = vunpack.c.l.b16 %v4233
        %v4502 = vunpack.c.h.b16 %v4233
        %v4503 = vunpack.c.l.b16 %v4234
        %v4504 = vunpack.c.h.b16 %v4234
        %v4505 = vunpack.c.l.b16 %v4235
        %v4506 = vunpack.c.h.b16 %v4235
        %v4507 = vunpack.c.l.b16 %v4236
        %v4508 = vunpack.c.h.b16 %v4236
        %v4509 = vunpack.c.l.b16 %v4237
        %v4510 = vunpack.c.h.b16 %v4237
        %v4511 = vunpack.c.l.b16 %v4238
        %v4512 = vunpack.c.h.b16 %v4238
        %v4513 = vunpack.c.l.b16 %v4239
        %v4514 = vunpack.c.h.b16 %v4239
        %v4515 = vunpack.c.l.b16 %v4240
        %v4516 = vunpack.c.h.b16 %v4240
        %v4517 = vunpack.c.l.b16 %v4241
        %v4518 = vunpack.c.h.b16 %v4241
        %v4519 = vunpack.c.l.b16 %v4242
        %v4520 = vunpack.c.h.b16 %v4242
        %v4521 = vunpack.c.l.b16 %v4243
        %v4522 = vunpack.c.h.b16 %v4243
        %v4523 = vunpack.c.l.b16 %v4244
        %v4524 = vunpack.c.h.b16 %v4244
        %v4525 = vunpack.c.l.b16 %v4245
        %v4526 = vunpack.c.h.b16 %v4245
        %v4527 = vunpack.c.l.b16 %v4246
        %v4528 = vunpack.c.h.b16 %v4246
        %v4529 = vunpack.c.l.b16 %v4247
        %v4530 = vunpack.c.h.b16 %v4247
        %v4531 = vunpack.c.l.b16 %v4248
        %v4532 = vunpack.c.h.b16 %v4248
        %v4533 = vunpack.c.l.b16 %v4249
        %v4534 = vunpack.c.h.b16 %v4249
        %v4535 = vunpack.c.l.b16 %v4250
        %v4536 = vunpack.c.h.b16 %v4250
        %v4537 = vunpack.c.l.b16 %v4251
        %v4538 = vunpack.c.h.b16 %v4251
        %v4539 = vunpack.c.l.b16 %v4252
        %v4540 = vunpack.c.h.b16 %v4252
        %v4541 = vunpack.c.l.b16 %v4253
        %v4542 = vunpack.c.h.b16 %v4253
        %v4543 = vunpack.c.l.b16 %v4254
        %v4544 = vunpack.c.h.b16 %v4254
        %v4545 = vunpack.c.l.b16 %v4255
        %v4546 = vunpack.c.h.b16 %v4255
        %v4547 = vunpack.c.l.b16 %v4256
        %v4548 = vunpack.c.h.b16 %v4256
        %v4549 = vunpack.c.l.b16 %v4257
        %v4550 = vunpack.c.h.b16 %v4257
        %v4551 = vunpack.c.l.b16 %v4258
        %v4552 = vunpack.c.h.b16 %v4258
        %v4553 = vunpack.c.l.b16 %v4259
        %v4554 = vunpack.c.h.b16 %v4259
        %v4555 = vunpack.c.l.b16 %v4260
        %v4556 = vunpack.c.h.b16 %v4260
        %v4557 = vunpack.c.l.b16 %v4261
        %v4558 = vunpack.c.h.b16 %v4261
        %v4559 = vunpack.c.l.b16 %v4262
        %v4560 = vunpack.c.h.b16 %v4262
        %v4561 = vunpack.c.l.b16 %v4263
        %v4562 = vunpack.c.h.b16 %v4263
        %v4563 = vunpack.c.l.b16 %v4264
        %v4564 = vunpack.c.h.b16 %v4264
        %v4565 = vunpack.c.l.b16 %v4265
        %v4566 = vunpack.c.h.b16 %v4265
        %v4567 = vunpack.c.l.b16 %v4266
        %v4568 = vunpack.c.h.b16 %v4266
        %v4569 = vunpack.c.l.b16 %v4267
        %v4570 = vunpack.c.h.b16 %v4267
        %v4571 = vunpack.c.l.b16 %v4268
        %v4572 = vunpack.c.h.b16 %v4268
        %v4573 = vunpack.c.l.b16 %v4269
        %v4574 = vunpack.c.h.b16 %v4269
        %v4575 = vunpack.c.l.b16 %v4270
        %v4576 = vunpack.c.h.b16 %v4270
        %v4577 = vunpack.c.l.b16 %v4271
        %v4578 = vunpack.c.h.b16 %v4271
        %v4579 = vunpack.c.l.b16 %v4272
        %v4580 = vunpack.c.h.b16 %v4272
        %v4581 = vunpack.c.l.b16 %v4273
        %v4582 = vunpack.c.h.b16 %v4273
        %v4583 = vunpack.c.l.b16 %v4274
        %v4584 = vunpack.c.h.b16 %v4274
        %v4585 = vunpack.c.l.b16 %v4275
        %v4586 = vunpack.c.h.b16 %v4275
        %v4587 = vunpack.c.l.b16 %v4276
        %v4588 = vunpack.c.h.b16 %v4276
        %v4589 = vunpack.c.l.b16 %v4277
        %v4590 = vunpack.c.h.b16 %v4277
        %v4591 = vunpack.c.l.b16 %v4278
        %v4592 = vunpack.c.h.b16 %v4278
        %v4593 = vunpack.c.l.b16 %v4279
        %v4594 = vunpack.c.h.b16 %v4279
        %v4595 = vunpack.c.l.b16 %v4280
        %v4596 = vunpack.c.h.b16 %v4280
        %v4597 = vunpack.c.l.b16 %v4281
        %v4598 = vunpack.c.h.b16 %v4281
        %v4599 = vunpack.c.l.b16 %v4282
        %v4600 = vunpack.c.h.b16 %v4282
        %v4601 = vunpack.c.l.b16 %v4283
        %v4602 = vunpack.c.h.b16 %v4283
        %v4603 = vunpack.c.l.b16 %v4284
        %v4604 = vunpack.c.h.b16 %v4284
        %v4605 = vunpack.c.l.b16 %v4285
        %v4606 = vunpack.c.h.b16 %v4285
        %v4607 = vunpack.c.l.b16 %v4286
        %v4608 = vunpack.c.h.b16 %v4286
        %v4609 = vunpack.c.l.b16 %v4287
        %v4610 = vunpack.c.h.b16 %v4287
        %v4611 = vunpack.c.l.b16 %v4288
        %v4612 = vunpack.c.h.b16 %v4288
        %v4613 = vunpack.c.l.b16 %v4289
        %v4614 = vunpack.c.h.b16 %v4289
        %v4615 = vunpack.c.l.b16 %v4290
        %v4616 = vunpack.c.h.b16 %v4290
        %v4617 = vunpack.c.l.b16 %v4291
        %v4618 = vunpack.c.h.b16 %v4291
        %v4619 = vunpack.c.l.b16 %v4292
        %v4620 = vunpack.c.h.b16 %v4292
        %v4621 = vunpack.c.l.b16 %v4293
        %v4622 = vunpack.c.h.b16 %v4293
        %v4623 = vunpack.c.l.b16 %v4294
        %v4624 = vunpack.c.h.b16 %v4294
        %v4625 = vunpack.c.l.b16 %v4295
        %v4626 = vunpack.c.h.b16 %v4295
        %v4627 = vunpack.c.l.b16 %v4296
        %v4628 = vunpack.c.h.b16 %v4296
        %v4629 = vunpack.c.l.b16 %v4297
        %v4630 = vunpack.c.h.b16 %v4297
        %v4631 = vunpack.c.l.b16 %v4298
        %v4632 = vunpack.c.h.b16 %v4298
        %v4633 = vunpack.c.l.b16 %v4299
        %v4634 = vunpack.c.h.b16 %v4299
        %v4635 = vunpack.c.l.b16 %v4300
        %v4636 = vunpack.c.h.b16 %v4300
        %v4637 = vunpack.c.l.b16 %v4301
        %v4638 = vunpack.c.h.b16 %v4301
        %v4639 = vunpack.c.l.b16 %v4302
        %v4640 = vunpack.c.h.b16 %v4302
        %v4641 = vunpack.c.l.b16 %v4303
        %v4642 = vunpack.c.h.b16 %v4303
        %v4643 = vunpack.c.l.b16 %v4304
        %v4644 = vunpack.c.h.b16 %v4304
        %v4645 = vunpack.c.l.b16 %v4305
        %v4646 = vunpack.c.h.b16 %v4305
        %v4647 = vunpack.c.l.b16 %v4306
        %v4648 = vunpack.c.h.b16 %v4306
        %v4649 = vunpack.c.l.b16 %v4307
        %v4650 = vunpack.c.h.b16 %v4307
        %v4651 = vunpack.c.l.b16 %v4308
        %v4652 = vunpack.c.h.b16 %v4308
        %v4653 = vunpack.c.l.b16 %v4309
        %v4654 = vunpack.c.h.b16 %v4309
        %v4655 = vunpack.c.l.b16 %v4310
        %v4656 = vunpack.c.h.b16 %v4310
        %v4657 = vunpack.c.l.b16 %v4311
        %v4658 = vunpack.c.h.b16 %v4311
        %v4659 = vunpack.c.l.b16 %v4312
        %v4660 = vunpack.c.h.b16 %v4312
        %v4661 = vunpack.c.l.b16 %v4313
        %v4662 = vunpack.c.h.b16 %v4313
        %v4663 = vunpack.c.l.b16 %v4314
        %v4664 = vunpack.c.h.b16 %v4314
        %v4665 = vunpack.c.l.b16 %v4315
        %v4666 = vunpack.c.h.b16 %v4315
        %v4667 = vunpack.c.l.b16 %v4316
        %v4668 = vunpack.c.h.b16 %v4316
        %v4669 = vunpack.c.l.b16 %v4317
        %v4670 = vunpack.c.h.b16 %v4317
        %v4671 = vunpack.c.l.b16 %v4318
        %v4672 = vunpack.c.h.b16 %v4318
        %v4673 = vunpack.c.l.b16 %v4319
        %v4674 = vunpack.c.h.b16 %v4319
        %v4675 = vunpack.c.l.b16 %v4320
        %v4676 = vunpack.c.h.b16 %v4320
        %v4677 = vunpack.c.l.b16 %v4321
        %v4678 = vunpack.c.h.b16 %v4321
        %v4679 = vunpack.c.l.b16 %v4322
        %v4680 = vunpack.c.h.b16 %v4322
        %v4681 = vunpack.c.l.b16 %v4323
        %v4682 = vunpack.c.h.b16 %v4323
        %v4683 = vunpack.c.l.b16 %v4324
        %v4684 = vunpack.c.h.b16 %v4324
        %v4685 = vunpack.c.l.b16 %v4325
        %v4686 = vunpack.c.h.b16 %v4325
        %v4687 = vunpack.c.l.b16 %v4326
        %v4688 = vunpack.c.h.b16 %v4326
        %v4689 = vunpack.c.l.b16 %v4327
        %v4690 = vunpack.c.h.b16 %v4327
        %v4691 = vunpack.c.l.b16 %v4328
        %v4692 = vunpack.c.h.b16 %v4328
        %v4693 = vunpack.c.l.b16 %v4329
        %v4694 = vunpack.c.h.b16 %v4329
        %v4695 = vunpack.c.l.b16 %v4330
        %v4696 = vunpack.c.h.b16 %v4330
        %v4697 = vunpack.c.l.b16 %v4331
        %v4698 = vunpack.c.h.b16 %v4331
        %v4699 = vunpack.c.l.b16 %v4332
        %v4700 = vunpack.c.h.b16 %v4332
        %v4701 = vunpack.c.l.b16 %v4333
        %v4702 = vunpack.c.h.b16 %v4333
        %v4703 = vunpack.c.l.b16 %v4334
        %v4704 = vunpack.c.h.b16 %v4334
        %v4705 = vunpack.c.l.b16 %v4335
        %v4706 = vunpack.c.h.b16 %v4335
        %v4707 = vunpack.c.l.b16 %v4336
        %v4708 = vunpack.c.h.b16 %v4336
        %v4709 = vunpack.c.l.b16 %v4337
        %v4710 = vunpack.c.h.b16 %v4337
        %v4711 = vunpack.c.l.b16 %v4338
        %v4712 = vunpack.c.h.b16 %v4338
        %v4713 = vunpack.c.l.b16 %v4339
        %v4714 = vunpack.c.h.b16 %v4339
        %v4715 = vunpack.c.l.b16 %v4340
        %v4716 = vunpack.c.h.b16 %v4340
        %v4717 = vunpack.c.l.b16 %v4341
        %v4718 = vunpack.c.h.b16 %v4341
        %v4719 = vunpack.c.l.b16 %v4342
        %v4720 = vunpack.c.h.b16 %v4342
        %v4721 = vunpack.c.l.b16 %v4343
        %v4722 = vunpack.c.h.b16 %v4343
        %v4723 = vunpack.c.l.b16 %v4344
        %v4724 = vunpack.c.h.b16 %v4344
        %v4725 = vunpack.c.l.b16 %v4345
        %v4726 = vunpack.c.h.b16 %v4345
        %v4727 = vunpack.c.l.b16 %v4346
        %v4728 = vunpack.c.h.b16 %v4346
        %v4729 = vunpack.c.l.b16 %v4347
        %v4730 = vunpack.c.h.b16 %v4347
        %v4731 = vunpack.c.l.b16 %v4348
        %v4732 = vunpack.c.h.b16 %v4348
        %v4733 = vunpack.c.l.b16 %v4349
        %v4734 = vunpack.c.h.b16 %v4349
        %v4735 = vunpack.c.l.b16 %v4350
        %v4736 = vunpack.c.h.b16 %v4350
        %v4737 = vunpack.c.l.b16 %v4351
        %v4738 = vunpack.c.h.b16 %v4351
        %v4739 = vunpack.c.l.b16 %v4352
        %v4740 = vunpack.c.h.b16 %v4352
        %v4741 = vunpack.c.l.b16 %v4353
        %v4742 = vunpack.c.h.b16 %v4353
        %v4743 = vunpack.c.l.b16 %v4354
        %v4744 = vunpack.c.h.b16 %v4354
        %v4745 = vunpack.c.l.b16 %v4355
        %v4746 = vunpack.c.h.b16 %v4355
        %v4747 = vunpack.c.l.b16 %v4356
        %v4748 = vunpack.c.h.b16 %v4356
        %v4749 = vunpack.c.l.b16 %v4357
        %v4750 = vunpack.c.h.b16 %v4357
        %v4751 = vunpack.c.l.b16 %v4358
        %v4752 = vunpack.c.h.b16 %v4358
        %v4753 = vunpack.c.l.b16 %v4359
        %v4754 = vunpack.c.h.b16 %v4359
        %v4755 = vunpack.c.l.b16 %v4360
        %v4756 = vunpack.c.h.b16 %v4360
        %v4757 = vpack.c.b16 %v4503, %v4501
        %v4758 = vpack.c.b16 %v4504, %v4502
        %v4759 = vpack.c.b16 %v4507, %v4505
        %v4760 = vpack.c.b16 %v4508, %v4506
        %v4761 = vpack.c.b16 %v4511, %v4509
        %v4762 = vpack.c.b16 %v4512, %v4510
        %v4763 = vpack.c.b16 %v4515, %v4513
        %v4764 = vpack.c.b16 %v4516, %v4514
        %v4765 = vpack.c.b16 %v4519, %v4517
        %v4766 = vpack.c.b16 %v4520, %v4518
        %v4767 = vpack.c.b16 %v4523, %v4521
        %v4768 = vpack.c.b16 %v4524, %v4522
        %v4769 = vpack.c.b16 %v4527, %v4525
        %v4770 = vpack.c.b16 %v4528, %v4526
        %v4771 = vpack.c.b16 %v4531, %v4529
        %v4772 = vpack.c.b16 %v4532, %v4530
        %v4773 = vpack.c.b16 %v4535, %v4533
        %v4774 = vpack.c.b16 %v4536, %v4534
        %v4775 = vpack.c.b16 %v4539, %v4537
        %v4776 = vpack.c.b16 %v4540, %v4538
        %v4777 = vpack.c.b16 %v4543, %v4541
        %v4778 = vpack.c.b16 %v4544, %v4542
        %v4779 = vpack.c.b16 %v4547, %v4545
        %v4780 = vpack.c.b16 %v4548, %v4546
        %v4781 = vpack.c.b16 %v4551, %v4549
        %v4782 = vpack.c.b16 %v4552, %v4550
        %v4783 = vpack.c.b16 %v4555, %v4553
        %v4784 = vpack.c.b16 %v4556, %v4554
        %v4785 = vpack.c.b16 %v4559, %v4557
        %v4786 = vpack.c.b16 %v4560, %v4558
        %v4787 = vpack.c.b16 %v4563, %v4561
        %v4788 = vpack.c.b16 %v4564, %v4562
        %v4789 = vpack.c.b16 %v4567, %v4565
        %v4790 = vpack.c.b16 %v4568, %v4566
        %v4791 = vpack.c.b16 %v4571, %v4569
        %v4792 = vpack.c.b16 %v4572, %v4570
        %v4793 = vpack.c.b16 %v4575, %v4573
        %v4794 = vpack.c.b16 %v4576, %v4574
        %v4795 = vpack.c.b16 %v4579, %v4577
        %v4796 = vpack.c.b16 %v4580, %v4578
        %v4797 = vpack.c.b16 %v4583, %v4581
        %v4798 = vpack.c.b16 %v4584, %v4582
        %v4799 = vpack.c.b16 %v4587, %v4585
        %v4800 = vpack.c.b16 %v4588, %v4586
        %v4801 = vpack.c.b16 %v4591, %v4589
        %v4802 = vpack.c.b16 %v4592, %v4590
        %v4803 = vpack.c.b16 %v4595, %v4593
        %v4804 = vpack.c.b16 %v4596, %v4594
        %v4805 = vpack.c.b16 %v4599, %v4597
        %v4806 = vpack.c.b16 %v4600, %v4598
        %v4807 = vpack.c.b16 %v4603, %v4601
        %v4808 = vpack.c.b16 %v4604, %v4602
        %v4809 = vpack.c.b16 %v4607, %v4605
        %v4810 = vpack.c.b16 %v4608, %v4606
        %v4811 = vpack.c.b16 %v4611, %v4609
        %v4812 = vpack.c.b16 %v4612, %v4610
        %v4813 = vpack.c.b16 %v4615, %v4613
        %v4814 = vpack.c.b16 %v4616, %v4614
        %v4815 = vpack.c.b16 %v4619, %v4617
        %v4816 = vpack.c.b16 %v4620, %v4618
        %v4817 = vpack.c.b16 %v4623, %v4621
        %v4818 = vpack.c.b16 %v4624, %v4622
        %v4819 = vpack.c.b16 %v4627, %v4625
        %v4820 = vpack.c.b16 %v4628, %v4626
        %v4821 = vpack.c.b16 %v4631, %v4629
        %v4822 = vpack.c.b16 %v4632, %v4630
        %v4823 = vpack.c.b16 %v4635, %v4633
        %v4824 = vpack.c.b16 %v4636, %v4634
        %v4825 = vpack.c.b16 %v4639, %v4637
        %v4826 = vpack.c.b16 %v4640, %v4638
        %v4827 = vpack.c.b16 %v4643, %v4641
        %v4828 = vpack.c.b16 %v4644, %v4642
        %v4829 = vpack.c.b16 %v4647, %v4645
        %v4830 = vpack.c.b16 %v4648, %v4646
        %v4831 = vpack.c.b16 %v4651, %v4649
        %v4832 = vpack.c.b16 %v4652, %v4650
        %v4833 = vpack.c.b16 %v4655, %v4653
        %v4834 = vpack.c.b16 %v4656, %v4654
        %v4835 = vpack.c.b16 %v4659, %v4657
        %v4836 = vpack.c.b16 %v4660, %v4658
        %v4837 = vpack.c.b16 %v4663, %v4661
        %v4838 = vpack.c.b16 %v4664, %v4662
        %v4839 = vpack.c.b16 %v4667, %v4665
        %v4840 = vpack.c.b16 %v4668, %v4666
        %v4841 = vpack.c.b16 %v4671, %v4669
        %v4842 = vpack.c.b16 %v4672, %v4670
        %v4843 = vpack.c.b16 %v4675, %v4673
        %v4844 = vpack.c.b16 %v4676, %v4674
        %v4845 = vpack.c.b16 %v4679, %v4677
        %v4846 = vpack.c.b16 %v4680, %v4678
        %v4847 = vpack.c.b16 %v4683, %v4681
        %v4848 = vpack.c.b16 %v4684, %v4682
        %v4849 = vpack.c.b16 %v4687, %v4685
        %v4850 = vpack.c.b16 %v4688, %v4686
        %v4851 = vpack.c.b16 %v4691, %v4689
        %v4852 = vpack.c.b16 %v4692, %v4690
        %v4853 = vpack.c.b16 %v4695, %v4693
        %v4854 = vpack.c.b16 %v4696, %v4694
        %v4855 = vpack.c.b16 %v4699, %v4697
        %v4856 = vpack.c.b16 %v4700, %v4698
        %v4857 = vpack.c.b16 %v4703, %v4701
        %v4858 = vpack.c.b16 %v4704, %v4702
        %v4859 = vpack.c.b16 %v4707, %v4705
        %v4860 = vpack.c.b16 %v4708, %v4706
        %v4861 = vpack.c.b16 %v4711, %v4709
        %v4862 = vpack.c.b16 %v4712, %v4710
        %v4863 = vpack.c.b16 %v4715, %v4713
        %v4864 = vpack.c.b16 %v4716, %v4714
        %v4865 = vpack.c.b16 %v4719, %v4717
        %v4866 = vpack.c.b16 %v4720, %v4718
        %v4867 = vpack.c.b16 %v4723, %v4721
        %v4868 = vpack.c.b16 %v4724, %v4722
        %v4869 = vpack.c.b16 %v4727, %v4725
        %v4870 = vpack.c.b16 %v4728, %v4726
        %v4871 = vpack.c.b16 %v4731, %v4729
        %v4872 = vpack.c.b16 %v4732, %v4730
        %v4873 = vpack.c.b16 %v4735, %v4733
        %v4874 = vpack.c.b16 %v4736, %v4734
        %v4875 = vpack.c.b16 %v4739, %v4737
        %v4876 = vpack.c.b16 %v4740, %v4738
        %v4877 = vpack.c.b16 %v4743, %v4741
        %v4878 = vpack.c.b16 %v4744, %v4742
        %v4879 = vpack.c.b16 %v4747, %v4745
        %v4880 = vpack.c.b16 %v4748, %v4746
        %v4881 = vpack.c.b16 %v4751, %v4749
        %v4882 = vpack.c.b16 %v4752, %v4750
        %v4883 = vpack.c.b16 %v4755, %v4753
        %v4884 = vpack.c.b16 %v4756, %v4754
        %5013 = vmatprep.subr.bf16.mxu0 %v4772
        %5014 = vmatpush1.bf16.msra.mxu0 %v4771
        %5015 = vmatprep.subr.bf16.mxu0 %v4770
        %5016 = vmatpush1.bf16.msra.mxu0 %v4769
        %5017 = vmatprep.subr.bf16.mxu0 %v4768
        %5018 = vmatpush1.bf16.msra.mxu0 %v4767
        %5019 = vmatprep.subr.bf16.mxu0 %v4766
        %5020 = vmatpush1.bf16.msra.mxu0 %v4765
        %5021 = vmatprep.subr.bf16.mxu0 %v4764
        %5022 = vmatpush1.bf16.msra.mxu0 %v4763
        %5023 = vmatprep.subr.bf16.mxu0 %v4762
        %5024 = vmatpush1.bf16.msra.mxu0 %v4761
        %5025 = vmatprep.subr.bf16.mxu0 %v4760
        %5026 = vmatpush1.bf16.msra.mxu0 %v4759
        %5027 = vmatprep.subr.bf16.mxu0 %v4758
        %5028 = vmatpush1.bf16.msra.mxu0 %v4757
        %5029 = vmatprep.subr.bf16.mxu0 %v4788
        %5030 = vmatpush2.bf16.msra.mxu0 %v4787
        %5031 = vmatprep.subr.bf16.mxu0 %v4786
        %5032 = vmatpush2.bf16.msra.mxu0 %v4785
        %5033 = vmatprep.subr.bf16.mxu0 %v4784
        %5034 = vmatpush2.bf16.msra.mxu0 %v4783
        %5035 = vmatprep.subr.bf16.mxu0 %v4782
        %5036 = vmatpush2.bf16.msra.mxu0 %v4781
        %5037 = vmatprep.subr.bf16.mxu0 %v4780
        %5038 = vmatpush2.bf16.msra.mxu0 %v4779
        %5039 = vmatprep.subr.bf16.mxu0 %v4778
        %5040 = vmatpush2.bf16.msra.mxu0 %v4777
        %5041 = vmatprep.subr.bf16.mxu0 %v4776
        %5042 = vmatpush2.bf16.msra.mxu0 %v4775
        %5043 = vmatprep.subr.bf16.mxu0 %v4774
        %5044 = vmatpush2.bf16.msra.mxu0 %v4773
        %5045 = vmatprep.mubr.bf16.mxu0 %v4218
        %5046 = vmatmul.mubr.bf16.gmra.mxu0 %v4217
        %v5047 = vpop.f32.mrf.mxu0
        %v5048 = vadd.f32 %v4366, %v5047
        %v5049 = vpop.f32.mrf.mxu0
        %v5050 = vadd.f32 %v4370, %v5049
        %v5051 = vpop.f32.mrf.mxu0
        %v5052 = vadd.f32 %v4366, %v5051
        %v5053 = vpop.f32.mrf.mxu0
        %v5054 = vadd.f32 %v4370, %v5053
        %5055 = vmatprep.mubr.bf16.mxu0 %v4226
        %5056 = vmatmul.mubr.bf16.gmra.mxu0 %v4225
        %v5057 = vpop.f32.mrf.mxu0
        %v5058 = vadd.f32 %v4366, %v5057
        %v5059 = vpop.f32.mrf.mxu0
        %v5060 = vadd.f32 %v4370, %v5059
        %v5061 = vpop.f32.mrf.mxu0
        %v5062 = vpop.f32.mrf.mxu0
        %5063 = vdwg.mxu0
        %5064 = vmatprep.subr.bf16.mxu0 %v4804
        %5065 = vmatpush1.bf16.msra.mxu0 %v4803
        %5066 = vmatprep.subr.bf16.mxu0 %v4802
        %5067 = vmatpush1.bf16.msra.mxu0 %v4801
        %5068 = vmatprep.subr.bf16.mxu0 %v4800
        %5069 = vmatpush1.bf16.msra.mxu0 %v4799
        %5070 = vmatprep.subr.bf16.mxu0 %v4798
        %5071 = vmatpush1.bf16.msra.mxu0 %v4797
        %5072 = vmatprep.subr.bf16.mxu0 %v4796
        %5073 = vmatpush1.bf16.msra.mxu0 %v4795
        %5074 = vmatprep.subr.bf16.mxu0 %v4794
        %5075 = vmatpush1.bf16.msra.mxu0 %v4793
        %5076 = vmatprep.subr.bf16.mxu0 %v4792
        %5077 = vmatpush1.bf16.msra.mxu0 %v4791
        %5078 = vmatprep.subr.bf16.mxu0 %v4790
        %5079 = vmatpush1.bf16.msra.mxu0 %v4789
        %5080 = vmatprep.subr.bf16.mxu0 %v4820
        %5081 = vmatpush2.bf16.msra.mxu0 %v4819
        %5082 = vmatprep.subr.bf16.mxu0 %v4818
        %5083 = vmatpush2.bf16.msra.mxu0 %v4817
        %5084 = vmatprep.subr.bf16.mxu0 %v4816
        %5085 = vmatpush2.bf16.msra.mxu0 %v4815
        %5086 = vmatprep.subr.bf16.mxu0 %v4814
        %5087 = vmatpush2.bf16.msra.mxu0 %v4813
        %5088 = vmatprep.subr.bf16.mxu0 %v4812
        %5089 = vmatpush2.bf16.msra.mxu0 %v4811
        %5090 = vmatprep.subr.bf16.mxu0 %v4810
        %5091 = vmatpush2.bf16.msra.mxu0 %v4809
        %5092 = vmatprep.subr.bf16.mxu0 %v4808
        %5093 = vmatpush2.bf16.msra.mxu0 %v4807
        %5094 = vmatprep.subr.bf16.mxu0 %v4806
        %5095 = vmatpush2.bf16.msra.mxu0 %v4805
        %5096 = vmatprep.mubr.bf16.mxu0 %v4220
        %5097 = vmatmul.mubr.bf16.gmra.mxu0 %v4219
        %v5098 = vpop.f32.mrf.mxu0
        %v5099 = vadd.f32 %v5048, %v5098
        %v5100 = vpop.f32.mrf.mxu0
        %v5101 = vadd.f32 %v5050, %v5100
        %v5102 = vpop.f32.mrf.mxu0
        %v5103 = vadd.f32 %v5052, %v5102
        %v5104 = vpop.f32.mrf.mxu0
        %v5105 = vadd.f32 %v5054, %v5104
        %5106 = vmatprep.mubr.bf16.mxu0 %v4228
        %5107 = vmatmul.mubr.bf16.gmra.mxu0 %v4227
        %v5108 = vpop.f32.mrf.mxu0
        %v5109 = vadd.f32 %v5058, %v5108
        %v5110 = vpop.f32.mrf.mxu0
        %v5111 = vadd.f32 %v5060, %v5110
        %v5112 = vpop.f32.mrf.mxu0
        %v5113 = vpop.f32.mrf.mxu0
        %5114 = vdwg.mxu0
        %5115 = vmatprep.subr.bf16.mxu0 %v4836
        %5116 = vmatpush1.bf16.msra.mxu0 %v4835
        %5117 = vmatprep.subr.bf16.mxu0 %v4834
        %5118 = vmatpush1.bf16.msra.mxu0 %v4833
        %5119 = vmatprep.subr.bf16.mxu0 %v4832
        %5120 = vmatpush1.bf16.msra.mxu0 %v4831
        %5121 = vmatprep.subr.bf16.mxu0 %v4830
        %5122 = vmatpush1.bf16.msra.mxu0 %v4829
        %5123 = vmatprep.subr.bf16.mxu0 %v4828
        %5124 = vmatpush1.bf16.msra.mxu0 %v4827
        %5125 = vmatprep.subr.bf16.mxu0 %v4826
        %5126 = vmatpush1.bf16.msra.mxu0 %v4825
        %5127 = vmatprep.subr.bf16.mxu0 %v4824
        %5128 = vmatpush1.bf16.msra.mxu0 %v4823
        %5129 = vmatprep.subr.bf16.mxu0 %v4822
        %5130 = vmatpush1.bf16.msra.mxu0 %v4821
        %5131 = vmatprep.subr.bf16.mxu0 %v4852
        %5132 = vmatpush2.bf16.msra.mxu0 %v4851
        %5133 = vmatprep.subr.bf16.mxu0 %v4850
        %5134 = vmatpush2.bf16.msra.mxu0 %v4849
        %5135 = vmatprep.subr.bf16.mxu0 %v4848
        %5136 = vmatpush2.bf16.msra.mxu0 %v4847
        %5137 = vmatprep.subr.bf16.mxu0 %v4846
        %5138 = vmatpush2.bf16.msra.mxu0 %v4845
        %5139 = vmatprep.subr.bf16.mxu0 %v4844
        %5140 = vmatpush2.bf16.msra.mxu0 %v4843
        %5141 = vmatprep.subr.bf16.mxu0 %v4842
        %5142 = vmatpush2.bf16.msra.mxu0 %v4841
        %5143 = vmatprep.subr.bf16.mxu0 %v4840
        %5144 = vmatpush2.bf16.msra.mxu0 %v4839
        %5145 = vmatprep.subr.bf16.mxu0 %v4838
        %5146 = vmatpush2.bf16.msra.mxu0 %v4837
        %5147 = vmatprep.mubr.bf16.mxu0 %v4222
        %5148 = vmatmul.mubr.bf16.gmra.mxu0 %v4221
        %v5149 = vpop.f32.mrf.mxu0
        %v5150 = vadd.f32 %v5099, %v5149
        %v5151 = vpop.f32.mrf.mxu0
        %v5152 = vadd.f32 %v5101, %v5151
        %v5153 = vpop.f32.mrf.mxu0
        %v5154 = vadd.f32 %v5103, %v5153
        %v5155 = vpop.f32.mrf.mxu0
        %v5156 = vadd.f32 %v5105, %v5155
        %5157 = vmatprep.mubr.bf16.mxu0 %v4230
        %5158 = vmatmul.mubr.bf16.gmra.mxu0 %v4229
        %v5159 = vpop.f32.mrf.mxu0
        %v5160 = vadd.f32 %v5109, %v5159
        %v5161 = vpop.f32.mrf.mxu0
        %v5162 = vadd.f32 %v5111, %v5161
        %v5163 = vpop.f32.mrf.mxu0
        %v5164 = vpop.f32.mrf.mxu0
        %5165 = vdwg.mxu0
        %5166 = vmatprep.subr.bf16.mxu0 %v4868
        %5167 = vmatpush1.bf16.msra.mxu0 %v4867
        %5168 = vmatprep.subr.bf16.mxu0 %v4866
        %5169 = vmatpush1.bf16.msra.mxu0 %v4865
        %5170 = vmatprep.subr.bf16.mxu0 %v4864
        %5171 = vmatpush1.bf16.msra.mxu0 %v4863
        %5172 = vmatprep.subr.bf16.mxu0 %v4862
        %5173 = vmatpush1.bf16.msra.mxu0 %v4861
        %5174 = vmatprep.subr.bf16.mxu0 %v4860
        %5175 = vmatpush1.bf16.msra.mxu0 %v4859
        %5176 = vmatprep.subr.bf16.mxu0 %v4858
        %5177 = vmatpush1.bf16.msra.mxu0 %v4857
        %5178 = vmatprep.subr.bf16.mxu0 %v4856
        %5179 = vmatpush1.bf16.msra.mxu0 %v4855
        %5180 = vmatprep.subr.bf16.mxu0 %v4854
        %5181 = vmatpush1.bf16.msra.mxu0 %v4853
        %5182 = vmatprep.subr.bf16.mxu0 %v4884
        %5183 = vmatpush2.bf16.msra.mxu0 %v4883
        %5184 = vmatprep.subr.bf16.mxu0 %v4882
        %5185 = vmatpush2.bf16.msra.mxu0 %v4881
        %5186 = vmatprep.subr.bf16.mxu0 %v4880
        %5187 = vmatpush2.bf16.msra.mxu0 %v4879
        %5188 = vmatprep.subr.bf16.mxu0 %v4878
        %5189 = vmatpush2.bf16.msra.mxu0 %v4877
        %5190 = vmatprep.subr.bf16.mxu0 %v4876
        %5191 = vmatpush2.bf16.msra.mxu0 %v4875
        %5192 = vmatprep.subr.bf16.mxu0 %v4874
        %5193 = vmatpush2.bf16.msra.mxu0 %v4873
        %5194 = vmatprep.subr.bf16.mxu0 %v4872
        %5195 = vmatpush2.bf16.msra.mxu0 %v4871
        %5196 = vmatprep.subr.bf16.mxu0 %v4870
        %5197 = vmatpush2.bf16.msra.mxu0 %v4869
        %5198 = vmatprep.mubr.bf16.mxu0 %v4224
        %5199 = vmatmul.mubr.bf16.gmra.mxu0 %v4223
        %v5200 = vpop.f32.mrf.mxu0
        %v5201 = vadd.f32 %v5150, %v5200
        %v5202 = vpop.f32.mrf.mxu0
        %v5203 = vadd.f32 %v5152, %v5202
        %v5204 = vpop.f32.mrf.mxu0
        %v5205 = vadd.f32 %v5154, %v5204
        %v5206 = vpop.f32.mrf.mxu0
        %v5207 = vadd.f32 %v5156, %v5206
        %5208 = vmatprep.mubr.bf16.mxu0 %v4232
        %5209 = vmatmul.mubr.bf16.gmra.mxu0 %v4231
        %v5210 = vpop.f32.mrf.mxu0
        %v5211 = vadd.f32 %v5160, %v5210
        %v5212 = vpop.f32.mrf.mxu0
        %v5213 = vadd.f32 %v5162, %v5212
        %v5214 = vpop.f32.mrf.mxu0
        %v5215 = vpop.f32.mrf.mxu0
        %5216 = vdwg.mxu0
        %v5217 = vadd.f32 %v2913, %v5201
        %v5218 = vadd.f32 %v2914, %v5203
        %v5219 = vadd.f32 %v2915, %v5205
        %v5220 = vadd.f32 %v2916, %v5207
        %v5221 = vadd.f32 %v2917, %v5211
        %v5222 = vadd.f32 %v2918, %v5213
        %5223 = vst [vmem:[#allocation2] sm:$0xff] %v5217
        %5224 = vst [vmem:[#allocation2 + $0x8] sm:$0xff] %v5218
        %5225 = vst [vmem:[#allocation2 + $0x10] sm:$0xff] %v5219
        %5226 = vst [vmem:[#allocation2 + $0x18] sm:$0xff] %v5220
        %5227 = vst [vmem:[#allocation2 + $0x20] sm:$0x1] %v5221
        %5228 = vst [vmem:[#allocation2 + $0x28] sm:$0x1] %v5222
        %p5229 = scmp.eq.s32.totalorder %s43, 1
        // Predicated region
        $region169: #{encode_image.1} parent=99 // pred_check
          %p5230 = pneg %p5229
        $region170: #{encode_image.1} parent=99 // pred_check_branch
          %5232 = sbr.rel (%p5230) target = $region172
        $region171: #{encode_image.1} parent=99 // pred_region
          %v5233 = vld [vmem:[#allocation21] sm:$0x3]
          %v5234 = vld [vmem:[#allocation22] sm:$0x3]
          %v5235 = vsel %vm1450, %v5217, 0.0
          %v5236 = vsel %vm1450, %v5218, 0.0
          %v5237 = vadd.f32 %v5235, %v5236
          %5238 = vadd.xlane.f32.xlu0 %v5237
          %v5239 = vpop.xlane.xlu0 %5238
          %v5240 = vmul.f32 %v5239, %v1456
          %v5241 = vsub.f32 %v5217, %v5240
          %v5242 = vsub.f32 %v5218, %v5240
          %v5243 = vmul.f32 %v5241, %v5241
          %v5244 = vmul.f32 %v5242, %v5242
          %v5245 = vsel %vm1450, %v5243, 0.0
          %v5246 = vsel %vm1450, %v5244, 0.0
          %v5247 = vadd.f32 %v5245, %v5246
          %5248 = vadd.xlane.f32.xlu0 %v5247
          %v5249 = vpop.xlane.xlu0 %5248
          %v5250 = vmul.f32 %v5249, %v1456
          %v5251 = vadd.f32 %v5250, 1e-05
          %v5252 = vrsqrt.pop %v5251
          %v5253 = vmul.f32 %v5241, %v5252
          %v5254 = vmul.f32 %v5242, %v5252
          %v5256 = vlaneseq
          %v5257 = vshrl.u32 %v5256, 7
          %v5258 = vsub.s32 0, %v5257
          %v5259 = vrot.slane %v5233, %v5258
          %v5260 = vlaneseq
          %v5261 = vshrl.u32 %v5260, 7
          %v5262 = vsub.s32 1, %v5261
          %v5263 = vrot.slane %v5233, %v5262
          %v5266 = vmul.f32 %v5253, %v5259
          %v5267 = vmul.f32 %v5254, %v5263
          %v5269 = vlaneseq
          %v5270 = vshrl.u32 %v5269, 7
          %v5271 = vsub.s32 0, %v5270
          %v5272 = vrot.slane %v5234, %v5271
          %v5273 = vlaneseq
          %v5274 = vshrl.u32 %v5273, 7
          %v5275 = vsub.s32 1, %v5274
          %v5276 = vrot.slane %v5234, %v5275
          %v5279 = vadd.f32 %v5266, %v5272
          %v5280 = vadd.f32 %v5267, %v5276
          %v5281 = vpack.c.bf16 %v5279, %v5279
          %v5282 = vpack.c.bf16 %v5280, %v5280
          %v5283 = vld [vmem:[#allocation23] sm:$0xf]
          %v5284 = vld [vmem:[#allocation23 + $0x4] sm:$0xf]
          %v5285 = vld [vmem:[#allocation23 + $0x8] sm:$0xf]
          %v5286 = vld [vmem:[#allocation23 + $0xc] sm:$0xf]
          %v5287 = vld [vmem:[#allocation23 + $0x10] sm:$0xf]
          %v5288 = vld [vmem:[#allocation23 + $0x14] sm:$0xf]
          %v5289 = vld [vmem:[#allocation23 + $0x18] sm:$0xf]
          %v5290 = vld [vmem:[#allocation23 + $0x1c] sm:$0xf]
          %v5291 = vld [vmem:[#allocation23 + $0x20] sm:$0xf]
          %v5292 = vld [vmem:[#allocation23 + $0x24] sm:$0xf]
          %v5293 = vld [vmem:[#allocation23 + $0x28] sm:$0xf]
          %v5294 = vld [vmem:[#allocation23 + $0x2c] sm:$0xf]
          %v5295 = vld [vmem:[#allocation23 + $0x30] sm:$0xf]
          %v5296 = vld [vmem:[#allocation23 + $0x34] sm:$0xf]
          %v5297 = vld [vmem:[#allocation23 + $0x38] sm:$0xf]
          %v5298 = vld [vmem:[#allocation23 + $0x3c] sm:$0xf]
          %v5299 = vld [vmem:[#allocation23 + $0x40] sm:$0xf]
          %v5300 = vld [vmem:[#allocation23 + $0x44] sm:$0xf]
          %v5301 = vld [vmem:[#allocation23 + $0x48] sm:$0xf]
          %v5302 = vld [vmem:[#allocation23 + $0x4c] sm:$0xf]
          %v5303 = vld [vmem:[#allocation23 + $0x50] sm:$0xf]
          %v5304 = vld [vmem:[#allocation23 + $0x54] sm:$0xf]
          %v5305 = vld [vmem:[#allocation23 + $0x58] sm:$0xf]
          %v5306 = vld [vmem:[#allocation23 + $0x5c] sm:$0xf]
          %v5307 = vld [vmem:[#allocation23 + $0x60] sm:$0xf]
          %v5308 = vld [vmem:[#allocation23 + $0x64] sm:$0xf]
          %v5309 = vld [vmem:[#allocation23 + $0x68] sm:$0xf]
          %v5310 = vld [vmem:[#allocation23 + $0x6c] sm:$0xf]
          %v5311 = vld [vmem:[#allocation23 + $0x70] sm:$0xf]
          %v5312 = vld [vmem:[#allocation23 + $0x74] sm:$0xf]
          %v5313 = vld [vmem:[#allocation23 + $0x78] sm:$0xf]
          %v5314 = vld [vmem:[#allocation23 + $0x7c] sm:$0xf]
          %v5347 = vunpack.c.l.b16 %v5283
          %v5348 = vunpack.c.l.b16 %v5284
          %v5349 = vunpack.c.l.b16 %v5285
          %v5350 = vunpack.c.l.b16 %v5286
          %v5351 = vunpack.c.l.b16 %v5287
          %v5352 = vunpack.c.l.b16 %v5288
          %v5353 = vunpack.c.l.b16 %v5289
          %v5354 = vunpack.c.l.b16 %v5290
          %v5355 = vunpack.c.l.b16 %v5291
          %v5356 = vunpack.c.l.b16 %v5292
          %v5357 = vunpack.c.l.b16 %v5293
          %v5358 = vunpack.c.l.b16 %v5294
          %v5359 = vunpack.c.l.b16 %v5295
          %v5360 = vunpack.c.l.b16 %v5296
          %v5361 = vunpack.c.l.b16 %v5297
          %v5362 = vunpack.c.l.b16 %v5298
          %v5363 = vunpack.c.l.b16 %v5299
          %v5364 = vunpack.c.l.b16 %v5300
          %v5365 = vunpack.c.l.b16 %v5301
          %v5366 = vunpack.c.l.b16 %v5302
          %v5367 = vunpack.c.l.b16 %v5303
          %v5368 = vunpack.c.l.b16 %v5304
          %v5369 = vunpack.c.l.b16 %v5305
          %v5370 = vunpack.c.l.b16 %v5306
          %v5371 = vunpack.c.l.b16 %v5307
          %v5372 = vunpack.c.l.b16 %v5308
          %v5373 = vunpack.c.l.b16 %v5309
          %v5374 = vunpack.c.l.b16 %v5310
          %v5375 = vunpack.c.l.b16 %v5311
          %v5376 = vunpack.c.l.b16 %v5312
          %v5377 = vunpack.c.l.b16 %v5313
          %v5378 = vunpack.c.l.b16 %v5314
          %v5379 = vpack.c.b16 %v5348, %v5347
          %v5380 = vpack.c.b16 %v5350, %v5349
          %v5381 = vpack.c.b16 %v5352, %v5351
          %v5382 = vpack.c.b16 %v5354, %v5353
          %v5383 = vpack.c.b16 %v5356, %v5355
          %v5384 = vpack.c.b16 %v5358, %v5357
          %v5385 = vpack.c.b16 %v5360, %v5359
          %v5386 = vpack.c.b16 %v5362, %v5361
          %v5387 = vpack.c.b16 %v5364, %v5363
          %v5388 = vpack.c.b16 %v5366, %v5365
          %v5389 = vpack.c.b16 %v5368, %v5367
          %v5390 = vpack.c.b16 %v5370, %v5369
          %v5391 = vpack.c.b16 %v5372, %v5371
          %v5392 = vpack.c.b16 %v5374, %v5373
          %v5393 = vpack.c.b16 %v5376, %v5375
          %v5394 = vpack.c.b16 %v5378, %v5377
          %5411 = vmatprep.subr.bf16.mxu0 0
          %5412 = vmatpush1.bf16.msra.mxu0 %v5386
          %5413 = vmatprep.subr.bf16.mxu0 0
          %5414 = vmatpush1.bf16.msra.mxu0 %v5385
          %5415 = vmatprep.subr.bf16.mxu0 0
          %5416 = vmatpush1.bf16.msra.mxu0 %v5384
          %5417 = vmatprep.subr.bf16.mxu0 0
          %5418 = vmatpush1.bf16.msra.mxu0 %v5383
          %5419 = vmatprep.subr.bf16.mxu0 0
          %5420 = vmatpush1.bf16.msra.mxu0 %v5382
          %5421 = vmatprep.subr.bf16.mxu0 0
          %5422 = vmatpush1.bf16.msra.mxu0 %v5381
          %5423 = vmatprep.subr.bf16.mxu0 0
          %5424 = vmatpush1.bf16.msra.mxu0 %v5380
          %5425 = vmatprep.subr.bf16.mxu0 0
          %5426 = vmatpush1.bf16.msra.mxu0 %v5379
          %5427 = vmatprep.subr.bf16.mxu0 0
          %5428 = vmatpush2.bf16.msra.mxu0 %v5394
          %5429 = vmatprep.subr.bf16.mxu0 0
          %5430 = vmatpush2.bf16.msra.mxu0 %v5393
          %5431 = vmatprep.subr.bf16.mxu0 0
          %5432 = vmatpush2.bf16.msra.mxu0 %v5392
          %5433 = vmatprep.subr.bf16.mxu0 0
          %5434 = vmatpush2.bf16.msra.mxu0 %v5391
          %5435 = vmatprep.subr.bf16.mxu0 0
          %5436 = vmatpush2.bf16.msra.mxu0 %v5390
          %5437 = vmatprep.subr.bf16.mxu0 0
          %5438 = vmatpush2.bf16.msra.mxu0 %v5389
          %5439 = vmatprep.subr.bf16.mxu0 0
          %5440 = vmatpush2.bf16.msra.mxu0 %v5388
          %5441 = vmatprep.subr.bf16.mxu0 0
          %5442 = vmatpush2.bf16.msra.mxu0 %v5387
          %5443 = vmatprep.mubr.bf16.mxu0 %v5282
          %5444 = vmatmul.mubr.bf16.gmra.mxu0 %v5281
          %v5445 = vpop.f32.mrf.mxu0
          %v5446 = vadd.f32 0.0, %v5445
          %v5447 = vpop.f32.mrf.mxu0
          %v5448 = vpop.f32.mrf.mxu0
          %v5449 = vpop.f32.mrf.mxu0
          %5450 = vdwg.mxu0
          %5451 = vst [vmem:[%s1089] sm:$0x1] %v5446
        $region172: #{encode_image.1} parent=99 // pred_fallthru
          _
        %s5452 = sand.u32 %s543, 1
        %s5453 = scalar_lea.sflag [#allocation6], %s5452
        %s5454 = sand.u32 %s543, 1
        %s5455 = scalar_lea.vmem [#allocation25], %s5454
        // Predicated region
        $region173: #{encode_image.1} parent=99 // pred_check
          %p5456 = pneg %p553
        $region174: #{encode_image.1} parent=99 // pred_check_branch
          %5458 = sbr.rel (%p5456) target = $region176
        $region175: #{encode_image.1} parent=99 // pred_region
          %s5460 = ssub.s32 16, 16
          %5461 = vsyncadd %s5453, %s5460
          %s5462 = smul.addr %s42, 16
          %s5463 = scalar_lea.hbm %s20, %s5462
          %s5465 = sshll.u32 %s5455, 4
          %s5466 = int_to_ptr.vmem [resolvable:$true] %s5465
          %5468 = dma.vmem_to_hbm [thread:$0]  %s5466, 16, %s5463, %s5453
        $region176: #{encode_image.1} parent=99 // pred_fallthru
          _
      $region100: #{encode_image.1} parent=5 // pred_fallthru
        _
      %p5469 = scmp.le.s32.totalorder 2, %s33
      // Predicated region
      $region177: #{encode_image.1} parent=5 // pred_check
        %p5470 = pneg %p5469
      $region178: #{encode_image.1} parent=5 // pred_check_branch
        %5472 = sbr.rel (%p5470) target = $region180
      $region179: #{encode_image.1} parent=5 // pred_region
        %s5473 = ssub.s32 %s33, 2
        // Predicated region
        $region181: #{encode_image.1} parent=179 // pred_check
          %p5474 = pneg %p559
        $region182: #{encode_image.1} parent=179 // pred_check_branch
          %5476 = sbr.rel (%p5474) target = $region184
        $region183: #{encode_image.1} parent=179 // pred_region
          %s5477 = sand.u32 %s544, 1
          %s5478 = scalar_lea.sflag [#allocation6], %s5477
          %s5479 = sand.u32 %s544, 1
          %s5480 = scalar_lea.vmem [#allocation25], %s5479
          %5481 = dma.done %s5478, 16
        $region184: #{encode_image.1} parent=179 // pred_fallthru
          _
      $region180: #{encode_image.1} parent=5 // pred_fallthru
        _
    $region6: #{encode_image.1} parent=1 // loop_footer
      %s37 = sadd.s32 1, %s33
    $region7: #{encode_image.1} parent=1 // loop_footer_branch
      %32 = sbr.rel target = $region3
    $region8: #{encode_image.1} parent=1 // loop_exit
      _
    %5482 = vsyncpa [#allocation5], 1
    %s5483 = scalar_lea.sflag [#allocation5], 1
    %5484 = vsyncpa %s5483, 1
    %5485 = vsyncpa [#allocation8], 1
    %5486 = vsyncpa [#allocation11], 1
    %5487 = vsyncpa [#allocation24], 1
    %5488 = vsyncpa [#allocation6], 1
    %s5489 = scalar_lea.sflag [#allocation6], 1
    %5490 = vsyncpa %s5489, 1

</llo_original>
